<compile_context>
chip_gen: v6e
topology: v6e:2x2x1
jax: 0.10.0
libtpu: 0.0.40
codegen_flags: <defaults>
</compile_context>

<pallas_src>
import functools
import math

import jax
import jax.numpy as jnp
import numpy as np
from jax.experimental import pallas as pl
from jax.experimental.pallas import tpu as pltpu


# ---------------------------------------------------------------------------
# Kernel A: fused conv1 + ReLU + conv2 + ReLU, G images per grid step.
#
# xp_ref : (G*112, 576) bf16  rows = image-major, per image 112 rows
#                             (row p = I*10+J for p<100, rows 100..111 zero),
#                             lane = (r*3+s)*64 + m  (stride-2 phase, s2d feat)
# w1_ref : (576, 64)  bf16    block-sparse conv1 weight, col = out_phase*16+co
# b1_ref : (1, 64)    f32     conv1 bias tiled over the 4 output phases
# w2_ref : (4, 64, 32) bf16   conv2 weight per window offset (A,B)
# b2_ref : (1, 32)    f32
# o_ref  : (G*96, 32) bf16    relu(conv2); per image row o' = i2*10 + j2
#                             (rows with j2==9 or o'>=90 are finite garbage,
#                              zero-weighted in fc1)
# ---------------------------------------------------------------------------
def _conv_kernel(xp_ref, w1_ref, b1_ref, w2_ref, b2_ref, o_ref):
    G = xp_ref.shape[0] // 112

    # conv1 for all images and all 4 output phases in a single MXU matmul.
    h1 = jnp.dot(xp_ref[...], w1_ref[...], preferred_element_type=jnp.float32)
    h1 = jnp.maximum(h1 + b1_ref[...], 0.0).astype(jnp.bfloat16)  # (G*112, 64)

    w2 = w2_ref[...]          # (4, 64, 32)
    b2 = b2_ref[...]          # (1, 32)

    # conv2: per image, 4 shifted matmuls (one per 2x2 window offset (A,B)).
    for g in range(G):
        base = g * 112
        acc = None
        for k, off in enumerate((0, 1, 10, 11)):          # off = A*10 + B
            lhs = h1[base + off:base + off + 96, :]       # (96, 64)
            d = jnp.dot(lhs, w2[k], preferred_element_type=jnp.float32)
            acc = d if acc is None else acc + d
        o_ref[g * 96:(g + 1) * 96, :] = jnp.maximum(acc + b2, 0.0).astype(
            o_ref.dtype)


def conv_features(xp2d, w1big, b1big, w2pack, b2, *, G):
    Bp = xp2d.shape[0] // 112
    return pl.pallas_call(
        _conv_kernel,
        out_shape=jax.ShapeDtypeStruct((Bp * 96, 32), jnp.bfloat16),
        grid=(Bp // G,),
        in_specs=[
            pl.BlockSpec((G * 112, 576), lambda i: (i, 0)),
            pl.BlockSpec((576, 64), lambda i: (0, 0)),
            pl.BlockSpec((1, 64), lambda i: (0, 0)),
            pl.BlockSpec((4, 64, 32), lambda i: (0, 0, 0)),
            pl.BlockSpec((1, 32), lambda i: (0, 0)),
        ],
        out_specs=pl.BlockSpec((G * 96, 32), lambda i: (i, 0)),
        compiler_params=pltpu.CompilerParams(
            dimension_semantics=("parallel",),
            vmem_limit_bytes=32 * 1024 * 1024,
        ),
    )(xp2d, w1big, b1big, w2pack, b2)


# ---------------------------------------------------------------------------
# Kernel B: fused fc1 + ReLU + fc2, tiled over the batch (M) dimension.
# bf16 weights/activations, f32 accumulation, lane-dense (tm, 128) logits.
# ---------------------------------------------------------------------------
def _fc_kernel(x_ref, w1_ref, b1_ref, w2_ref, b2_ref, o_ref):
    h = jnp.dot(x_ref[...], w1_ref[...], preferred_element_type=jnp.float32)
    h = jnp.maximum(h + b1_ref[...], 0.0).astype(jnp.bfloat16)
    o = jnp.dot(h, w2_ref[...], preferred_element_type=jnp.float32)
    o_ref[...] = o + b2_ref[...]


def fc_head(flat, wf1p, bf1, wf2p, bf2p):
    Bp, K = flat.shape
    H = wf1p.shape[1]          # 256
    N = wf2p.shape[1]          # 128 (lane-dense padded logits)
    if Bp <= 128:
        tm = Bp                # single grid step at small batch
    elif Bp >= 256:
        tm = 256               # bigger M tile for the 256-wide MXU (v6e/v7x)
    else:
        tm = 128
    Bq = ((Bp + tm - 1) // tm) * tm
    if Bq != Bp:
        flat = jnp.pad(flat, ((0, Bq - Bp), (0, 0)))
    out = pl.pallas_call(
        _fc_kernel,
        out_shape=jax.ShapeDtypeStruct((Bq, N), jnp.float32),
        grid=(Bq // tm,),
        in_specs=[
            pl.BlockSpec((tm, K), lambda i: (i, 0)),
            pl.BlockSpec((K, H), lambda i: (0, 0)),
            pl.BlockSpec((1, H), lambda i: (0, 0)),
            pl.BlockSpec((H, N), lambda i: (0, 0)),
            pl.BlockSpec((1, N), lambda i: (0, 0)),
        ],
        out_specs=pl.BlockSpec((tm, N), lambda i: (i, 0)),
        compiler_params=pltpu.CompilerParams(
            dimension_semantics=("parallel",),
            vmem_limit_bytes=32 * 1024 * 1024,
        ),
    )(flat, wf1p, bf1, wf2p, bf2p)
    return out[:Bp]


# ---------------------------------------------------------------------------
# Parameters (PyTorch-default-style uniform init, PyTorch layouts).
# ---------------------------------------------------------------------------
def init_params(key, n_actions):
    ks = jax.random.split(key, 8)

    def u(k, shape, fan_in):
        bound = 1.0 / math.sqrt(fan_in)
        return jax.random.uniform(k, shape, jnp.float32, -bound, bound)

    return {
        "w1": u(ks[0], (16, 4, 8, 8), 4 * 8 * 8),
        "b1": u(ks[1], (16,), 4 * 8 * 8),
        "w2": u(ks[2], (32, 16, 4, 4), 16 * 4 * 4),
        "b2": u(ks[3], (32,), 16 * 4 * 4),
        "wf1": u(ks[4], (256, 2592), 2592),
        "bf1": u(ks[5], (256,), 2592),
        "wf2": u(ks[6], (n_actions, 256), 256),
        "bf2": u(ks[7], (n_actions,), 256),
    }


# ---------------------------------------------------------------------------
# One-time weight packing (off the hot path).
# ---------------------------------------------------------------------------
def prepare_params(params):
    f32, bf16 = jnp.float32, jnp.bfloat16

    # conv1 per-window-offset weights, x/255 folded in:
    #   w1s[A*2+B, c*16+a*4+b, co] = w1[co, c, 4A+a, 4B+b] / 255
    w1 = np.asarray(params["w1"], np.float32) / 255.0
    w1s = w1.reshape(16, 4, 2, 4, 2, 4)                    # (co,c,A,a,B,b)
    w1s = w1s.transpose(2, 4, 1, 3, 5, 0).reshape(4, 64, 16)

    # Block-sparse big conv1 weight: row = (r*3+s)*64 + m,
    # col = (ai*2+bj)*16 + co; nonzero iff A=r-ai, B=s-bj are both in {0,1}.
    w1big = np.zeros((9, 64, 4, 16), np.float32)
    for r in range(3):
        for s in range(3):
            for ai in range(2):
                for bj in range(2):
                    A, B = r - ai, s - bj
                    if 0 <= A <= 1 and 0 <= B <= 1:
                        w1big[r * 3 + s, :, ai * 2 + bj, :] = w1s[A * 2 + B]
    w1big = jnp.asarray(w1big.reshape(576, 64), bf16)
    b1big = jnp.tile(params["b1"].astype(f32), 4).reshape(1, 64)

    # conv2 weights per window offset (A,B): K = (ai*2+bj)*16 + c1, N = ko.
    #   w2pack[A*2+B, (ai*2+bj)*16+c1, ko] = w2[ko, c1, 2A+ai, 2B+bj]
    w2 = np.asarray(params["w2"], np.float32).reshape(32, 16, 2, 2, 2, 2)
    w2pack = w2.transpose(2, 4, 3, 5, 1, 0).reshape(4, 64, 32)
    w2pack = jnp.asarray(w2pack, bf16)
    b2 = params["b2"].astype(f32).reshape(1, 32)

    # fc1: permute columns from PyTorch flatten order (ko*81 + i2*9 + j2) to
    # our flat order K' = (i2*10+j2)*32 + ko; zero rows for padding/garbage.
    wf1 = params["wf1"].astype(f32).reshape(256, 32, 9, 9)  # (n,ko,i2,j2)
    w = wf1.transpose(2, 3, 1, 0)                           # (i2,j2,ko,n)
    w = jnp.pad(w, ((0, 0), (0, 1), (0, 0), (0, 0)))        # j2 -> 10
    w = w.reshape(90, 32, 256)
    w = jnp.pad(w, ((0, 6), (0, 0), (0, 0)))                # rows -> 96
    wf1p = w.reshape(96 * 32, 256).astype(bf16)
    bf1 = params["bf1"].astype(f32).reshape(1, 256)

    # fc2: pad to a lane-dense 128-wide output.
    wf2 = params["wf2"].astype(f32)
    n_act = wf2.shape[0]
    wf2p = jnp.zeros((256, 128), f32).at[:, :n_act].set(wf2.T).astype(bf16)
    bf2p = jnp.zeros((1, 128), f32).at[0, :n_act].set(params["bf2"].astype(f32))

    return {"w1big": w1big, "b1big": b1big, "w2pack": w2pack, "b2": b2,
            "wf1p": wf1p, "bf1": bf1, "wf2p": wf2p, "bf2p": bf2p}


# ---------------------------------------------------------------------------
# Input prep: space-to-depth (block 4) + 9 stride-2 phase slabs packed on the
# lane axis, 12 zero pad rows per image, flattened image-major, cast to bf16.
# ---------------------------------------------------------------------------
def _prepare_inputs(x, Bp):
    B = x.shape[0]
    if Bp != B:
        x = jnp.pad(x, ((0, Bp - B), (0, 0), (0, 0), (0, 0)))
    xs = x.reshape(Bp, 4, 21, 4, 21, 4)           # (B, c, P, a, Q, b)
    xs = xs.transpose(0, 2, 4, 1, 3, 5)           # (B, P, Q, c, a, b)
    xs = xs.reshape(Bp, 21, 21, 64)               # m = c*16 + a*4 + b
    slabs = []
    for r in range(3):
        for s in range(3):
            p = xs[:, r:r + 20:2, s:s + 20:2, :]          # (B, 10, 10, 64)
            slabs.append(p.reshape(Bp, 100, 64))
    xp = jnp.stack(slabs, axis=2).reshape(Bp, 100, 576)   # lane = phase*64+m
    xp = jnp.pad(xp, ((0, 0), (0, 12), (0, 0)))           # rows 100..111 = 0
    return xp.reshape(Bp * 112, 576).astype(jnp.bfloat16)


@functools.partial(jax.jit, static_argnums=(2,))
def cnn_policy_forward(prepped, x, n_actions):
    B = x.shape[0]
    G = min(8, B)                                  # images per grid step
    Bp = ((B + G - 1) // G) * G
    xp = _prepare_inputs(x.astype(jnp.float32), Bp)        # (Bp*112, 576) bf16
    feat = conv_features(xp, prepped["w1big"], prepped["b1big"],
                         prepped["w2pack"], prepped["b2"], G=G)  # (Bp*96, 32)
    flat = feat.reshape(Bp, 96 * 32)               # bitcast reshape, (Bp, 3072)
    logits = fc_head(flat, prepped["wf1p"], prepped["bf1"],
                     prepped["wf2p"], prepped["bf2p"])     # (Bp, 128) f32
    return logits[:B, :n_actions]


# ---------------------------------------------------------------------------
# Pure-JAX f32 reference (correctness check only), on PyTorch-layout params.
# ---------------------------------------------------------------------------
def reference_forward(params, x):
    x = x / 255.0
    dn = ("NCHW", "OIHW", "NCHW")
    y = jax.lax.conv_general_dilated(x, params["w1"], (4, 4), "VALID",
                                     dimension_numbers=dn)
    y = jnp.maximum(y + params["b1"][None, :, None, None], 0.0)
    y = jax.lax.conv_general_dilated(y, params["w2"], (2, 2), "VALID",
                                     dimension_numbers=dn)
    y = jnp.maximum(y + params["b2"][None, :, None, None], 0.0)
    flat = y.reshape(x.shape[0], -1)
    h = jnp.maximum(flat @ params["wf1"].T + params["bf1"], 0.0)
    return h @ params["wf2"].T + params["bf2"]


if __name__ == "__main__":
    key = jax.random.PRNGKey(0)
    k_param, k_x = jax.random.split(key)

    n_actions = 6  # Pong action space
    params = init_params(k_param, n_actions)
    prepped = prepare_params(params)

    # Spatial size 84x84 is dictated by Linear(2592, 256) = 32*9*9.
    # Integer pixel values (as Atari frames are) -> exact in bf16.
    x = jnp.floor(jax.random.uniform(k_x, (2, 4, 84, 84), jnp.float32,
                                     0.0, 256.0))
    x = jnp.clip(x, 0.0, 255.0)

    logits = jax.block_until_ready(cnn_policy_forward(prepped, x, n_actions))
    ref = jax.block_until_ready(reference_forward(params, x))

    assert logits.shape == (2, n_actions)
    # Tolerance reflects bf16 weights/activations vs the f32 reference.
    np.testing.assert_allclose(np.asarray(logits), np.asarray(ref),
                               rtol=5e-2, atol=5e-3)
    print("KERNEL_OK")
</pallas_src>

<mosaic_0001>
module attributes {stable_mosaic.version = 11 : i64} {
  func.func @_conv_kernel(%arg0: i32, %arg1: memref<224x576xbf16, #tpu.memory_space<vmem>>, %arg2: memref<576x64xbf16, #tpu.memory_space<vmem>>, %arg3: memref<1x64xf32, #tpu.memory_space<vmem>>, %arg4: memref<4x64x32xbf16, #tpu.memory_space<vmem>>, %arg5: memref<1x32xf32, #tpu.memory_space<vmem>>, %arg6: memref<192x32xbf16, #tpu.memory_space<vmem>>) attributes {dimension_semantics = [#tpu.dimension_semantics<parallel>], iteration_bounds = array<i64: 1>, scalar_prefetch = 0 : i64, scratch_operands = 0 : i64, tpu.core_type = #tpu.core_type<tc>, window_params = [{transform_indices = @transform_0, window_bounds = array<i64: 224, 576>}, {pipeline_mode = #tpu.pipeline_mode<synchronous>, transform_indices = @transform_1, window_bounds = array<i64: 576, 64>}, {pipeline_mode = #tpu.pipeline_mode<synchronous>, transform_indices = @transform_2, window_bounds = array<i64: 1, 64>}, {pipeline_mode = #tpu.pipeline_mode<synchronous>, transform_indices = @transform_3, window_bounds = array<i64: 4, 64, 32>}, {pipeline_mode = #tpu.pipeline_mode<synchronous>, transform_indices = @transform_4, window_bounds = array<i64: 1, 32>}, {transform_indices = @transform_5, window_bounds = array<i64: 192, 32>}]} {
    %c0 = arith.constant 0 : index
    %c0_0 = arith.constant 0 : index
    %0 = vector.load %arg1[%c0, %c0_0] : memref<224x576xbf16, #tpu.memory_space<vmem>>, vector<224x576xbf16>
    %c0_1 = arith.constant 0 : index
    %c0_2 = arith.constant 0 : index
    %1 = vector.load %arg2[%c0_1, %c0_2] : memref<576x64xbf16, #tpu.memory_space<vmem>>, vector<576x64xbf16>
    %cst = arith.constant dense<0.000000e+00> : vector<224x64xf32>
    %2 = tpu.matmul %0, %1, %cst {dimension_numbers = #tpu.dot_dimension_numbers<[1], [0], [0], [1], [0, 0, 1, 1], [], []>} : vector<224x576xbf16>, vector<576x64xbf16>, vector<224x64xf32> -> vector<224x64xf32>
    %c0_3 = arith.constant 0 : index
    %c0_4 = arith.constant 0 : index
    %3 = vector.load %arg3[%c0_3, %c0_4] : memref<1x64xf32, #tpu.memory_space<vmem>>, vector<1x64xf32>
    %4 = vector.broadcast %3 : vector<1x64xf32> to vector<224x64xf32>
    %5 = arith.addf %2, %4 : vector<224x64xf32>
    %cst_5 = arith.constant 0.000000e+00 : f32
    %6 = vector.broadcast %cst_5 : f32 to vector<224x64xf32>
    %7 = arith.maximumf %5, %6 : vector<224x64xf32>
    %8 = arith.truncf %7 : vector<224x64xf32> to vector<224x64xbf16>
    %c0_6 = arith.constant 0 : index
    %c0_7 = arith.constant 0 : index
    %c0_8 = arith.constant 0 : index
    %9 = vector.load %arg4[%c0_6, %c0_7, %c0_8] : memref<4x64x32xbf16, #tpu.memory_space<vmem>>, vector<4x64x32xbf16>
    %c0_9 = arith.constant 0 : index
    %c0_10 = arith.constant 0 : index
    %10 = vector.load %arg5[%c0_9, %c0_10] : memref<1x32xf32, #tpu.memory_space<vmem>>, vector<1x32xf32>
    %11 = vector.extract_strided_slice %8 {offsets = [0, 0], sizes = [96, 64], strides = [1, 1]} : vector<224x64xbf16> to vector<96x64xbf16>
    %12 = vector.extract_strided_slice %9 {offsets = [0, 0, 0], sizes = [1, 64, 32], strides = [1, 1, 1]} : vector<4x64x32xbf16> to vector<1x64x32xbf16>
    %13 = vector.shape_cast %12 : vector<1x64x32xbf16> to vector<64x32xbf16>
    %cst_11 = arith.constant dense<0.000000e+00> : vector<96x32xf32>
    %14 = tpu.matmul %11, %13, %cst_11 {dimension_numbers = #tpu.dot_dimension_numbers<[1], [0], [0], [1], [0, 0, 1, 1], [], []>} : vector<96x64xbf16>, vector<64x32xbf16>, vector<96x32xf32> -> vector<96x32xf32>
    %15 = vector.extract_strided_slice %8 {offsets = [1, 0], sizes = [96, 64], strides = [1, 1]} : vector<224x64xbf16> to vector<96x64xbf16>
    %16 = vector.extract_strided_slice %9 {offsets = [1, 0, 0], sizes = [1, 64, 32], strides = [1, 1, 1]} : vector<4x64x32xbf16> to vector<1x64x32xbf16>
    %17 = vector.shape_cast %16 : vector<1x64x32xbf16> to vector<64x32xbf16>
    %cst_12 = arith.constant dense<0.000000e+00> : vector<96x32xf32>
    %18 = tpu.matmul %15, %17, %cst_12 {dimension_numbers = #tpu.dot_dimension_numbers<[1], [0], [0], [1], [0, 0, 1, 1], [], []>} : vector<96x64xbf16>, vector<64x32xbf16>, vector<96x32xf32> -> vector<96x32xf32>
    %19 = arith.addf %14, %18 : vector<96x32xf32>
    %20 = vector.extract_strided_slice %8 {offsets = [10, 0], sizes = [96, 64], strides = [1, 1]} : vector<224x64xbf16> to vector<96x64xbf16>
    %21 = vector.extract_strided_slice %9 {offsets = [2, 0, 0], sizes = [1, 64, 32], strides = [1, 1, 1]} : vector<4x64x32xbf16> to vector<1x64x32xbf16>
    %22 = vector.shape_cast %21 : vector<1x64x32xbf16> to vector<64x32xbf16>
    %cst_13 = arith.constant dense<0.000000e+00> : vector<96x32xf32>
    %23 = tpu.matmul %20, %22, %cst_13 {dimension_numbers = #tpu.dot_dimension_numbers<[1], [0], [0], [1], [0, 0, 1, 1], [], []>} : vector<96x64xbf16>, vector<64x32xbf16>, vector<96x32xf32> -> vector<96x32xf32>
    %24 = arith.addf %19, %23 : vector<96x32xf32>
    %25 = vector.extract_strided_slice %8 {offsets = [11, 0], sizes = [96, 64], strides = [1, 1]} : vector<224x64xbf16> to vector<96x64xbf16>
    %26 = vector.extract_strided_slice %9 {offsets = [3, 0, 0], sizes = [1, 64, 32], strides = [1, 1, 1]} : vector<4x64x32xbf16> to vector<1x64x32xbf16>
    %27 = vector.shape_cast %26 : vector<1x64x32xbf16> to vector<64x32xbf16>
    %cst_14 = arith.constant dense<0.000000e+00> : vector<96x32xf32>
    %28 = tpu.matmul %25, %27, %cst_14 {dimension_numbers = #tpu.dot_dimension_numbers<[1], [0], [0], [1], [0, 0, 1, 1], [], []>} : vector<96x64xbf16>, vector<64x32xbf16>, vector<96x32xf32> -> vector<96x32xf32>
    %29 = arith.addf %24, %28 : vector<96x32xf32>
    %30 = vector.broadcast %10 : vector<1x32xf32> to vector<96x32xf32>
    %31 = arith.addf %29, %30 : vector<96x32xf32>
    %cst_15 = arith.constant 0.000000e+00 : f32
    %32 = vector.broadcast %cst_15 : f32 to vector<96x32xf32>
    %33 = arith.maximumf %31, %32 : vector<96x32xf32>
    %34 = arith.truncf %33 : vector<96x32xf32> to vector<96x32xbf16>
    %c0_16 = arith.constant 0 : index
    %c0_17 = arith.constant 0 : index
    %35 = vector.load %arg6[%c0_16, %c0_17] : memref<192x32xbf16, #tpu.memory_space<vmem>>, vector<96x32xbf16>
    tpu.vector_store %arg6[%c0_16, %c0_17], %34 {strides = array<i32>} : memref<192x32xbf16, #tpu.memory_space<vmem>>, vector<96x32xbf16>,
    %36 = vector.extract_strided_slice %8 {offsets = [112, 0], sizes = [96, 64], strides = [1, 1]} : vector<224x64xbf16> to vector<96x64xbf16>
    %37 = vector.extract_strided_slice %9 {offsets = [0, 0, 0], sizes = [1, 64, 32], strides = [1, 1, 1]} : vector<4x64x32xbf16> to vector<1x64x32xbf16>
    %38 = vector.shape_cast %37 : vector<1x64x32xbf16> to vector<64x32xbf16>
    %cst_18 = arith.constant dense<0.000000e+00> : vector<96x32xf32>
    %39 = tpu.matmul %36, %38, %cst_18 {dimension_numbers = #tpu.dot_dimension_numbers<[1], [0], [0], [1], [0, 0, 1, 1], [], []>} : vector<96x64xbf16>, vector<64x32xbf16>, vector<96x32xf32> -> vector<96x32xf32>
    %40 = vector.extract_strided_slice %8 {offsets = [113, 0], sizes = [96, 64], strides = [1, 1]} : vector<224x64xbf16> to vector<96x64xbf16>
    %41 = vector.extract_strided_slice %9 {offsets = [1, 0, 0], sizes = [1, 64, 32], strides = [1, 1, 1]} : vector<4x64x32xbf16> to vector<1x64x32xbf16>
    %42 = vector.shape_cast %41 : vector<1x64x32xbf16> to vector<64x32xbf16>
    %cst_19 = arith.constant dense<0.000000e+00> : vector<96x32xf32>
    %43 = tpu.matmul %40, %42, %cst_19 {dimension_numbers = #tpu.dot_dimension_numbers<[1], [0], [0], [1], [0, 0, 1, 1], [], []>} : vector<96x64xbf16>, vector<64x32xbf16>, vector<96x32xf32> -> vector<96x32xf32>
    %44 = arith.addf %39, %43 : vector<96x32xf32>
    %45 = vector.extract_strided_slice %8 {offsets = [122, 0], sizes = [96, 64], strides = [1, 1]} : vector<224x64xbf16> to vector<96x64xbf16>
    %46 = vector.extract_strided_slice %9 {offsets = [2, 0, 0], sizes = [1, 64, 32], strides = [1, 1, 1]} : vector<4x64x32xbf16> to vector<1x64x32xbf16>
    %47 = vector.shape_cast %46 : vector<1x64x32xbf16> to vector<64x32xbf16>
    %cst_20 = arith.constant dense<0.000000e+00> : vector<96x32xf32>
    %48 = tpu.matmul %45, %47, %cst_20 {dimension_numbers = #tpu.dot_dimension_numbers<[1], [0], [0], [1], [0, 0, 1, 1], [], []>} : vector<96x64xbf16>, vector<64x32xbf16>, vector<96x32xf32> -> vector<96x32xf32>
    %49 = arith.addf %44, %48 : vector<96x32xf32>
    %50 = vector.extract_strided_slice %8 {offsets = [123, 0], sizes = [96, 64], strides = [1, 1]} : vector<224x64xbf16> to vector<96x64xbf16>
    %51 = vector.extract_strided_slice %9 {offsets = [3, 0, 0], sizes = [1, 64, 32], strides = [1, 1, 1]} : vector<4x64x32xbf16> to vector<1x64x32xbf16>
    %52 = vector.shape_cast %51 : vector<1x64x32xbf16> to vector<64x32xbf16>
    %cst_21 = arith.constant dense<0.000000e+00> : vector<96x32xf32>
    %53 = tpu.matmul %50, %52, %cst_21 {dimension_numbers = #tpu.dot_dimension_numbers<[1], [0], [0], [1], [0, 0, 1, 1], [], []>} : vector<96x64xbf16>, vector<64x32xbf16>, vector<96x32xf32> -> vector<96x32xf32>
    %54 = arith.addf %49, %53 : vector<96x32xf32>
    %55 = vector.broadcast %10 : vector<1x32xf32> to vector<96x32xf32>
    %56 = arith.addf %54, %55 : vector<96x32xf32>
    %cst_22 = arith.constant 0.000000e+00 : f32
    %57 = vector.broadcast %cst_22 : f32 to vector<96x32xf32>
    %58 = arith.maximumf %56, %57 : vector<96x32xf32>
    %59 = arith.truncf %58 : vector<96x32xf32> to vector<96x32xbf16>
    %c96 = arith.constant 96 : index
    %c0_23 = arith.constant 0 : index
    %60 = vector.load %arg6[%c96, %c0_23] : memref<192x32xbf16, #tpu.memory_space<vmem>>, vector<96x32xbf16>
    tpu.vector_store %arg6[%c96, %c0_23], %59 {strides = array<i32>} : memref<192x32xbf16, #tpu.memory_space<vmem>>, vector<96x32xbf16>,
    return
  }
  func.func @transform_0(%arg0: i32) -> (i32, i32) {
    %c0_i32 = arith.constant 0 : i32
    %c0_i32_0 = arith.constant 0 : i32
    return %arg0, %c0_i32 : i32, i32
  }
  func.func @transform_1(%arg0: i32) -> (i32, i32) {
    %c0_i32 = arith.constant 0 : i32
    %c0_i32_0 = arith.constant 0 : i32
    %c0_i32_1 = arith.constant 0 : i32
    return %c0_i32, %c0_i32_0 : i32, i32
  }
  func.func @transform_2(%arg0: i32) -> (i32, i32) {
    %c0_i32 = arith.constant 0 : i32
    %c0_i32_0 = arith.constant 0 : i32
    %c0_i32_1 = arith.constant 0 : i32
    return %c0_i32, %c0_i32_0 : i32, i32
  }
  func.func @transform_3(%arg0: i32) -> (i32, i32, i32) {
    %c0_i32 = arith.constant 0 : i32
    %c0_i32_0 = arith.constant 0 : i32
    %c0_i32_1 = arith.constant 0 : i32
    %c0_i32_2 = arith.constant 0 : i32
    return %c0_i32, %c0_i32_0, %c0_i32_1 : i32, i32, i32
  }
  func.func @transform_4(%arg0: i32) -> (i32, i32) {
    %c0_i32 = arith.constant 0 : i32
    %c0_i32_0 = arith.constant 0 : i32
    %c0_i32_1 = arith.constant 0 : i32
    return %c0_i32, %c0_i32_0 : i32, i32
  }
  func.func @transform_5(%arg0: i32) -> (i32, i32) {
    %c0_i32 = arith.constant 0 : i32
    %c0_i32_0 = arith.constant 0 : i32
    return %arg0, %c0_i32 : i32, i32
  }
}

module attributes {stable_mosaic.version = 11 : i64} {
  func.func @_fc_kernel(%arg0: i32, %arg1: memref<2x3072xbf16, #tpu.memory_space<vmem>>, %arg2: memref<3072x256xbf16, #tpu.memory_space<vmem>>, %arg3: memref<1x256xf32, #tpu.memory_space<vmem>>, %arg4: memref<256x128xbf16, #tpu.memory_space<vmem>>, %arg5: memref<1x128xf32, #tpu.memory_space<vmem>>, %arg6: memref<2x128xf32, #tpu.memory_space<vmem>>) attributes {dimension_semantics = [#tpu.dimension_semantics<parallel>], iteration_bounds = array<i64: 1>, scalar_prefetch = 0 : i64, scratch_operands = 0 : i64, tpu.core_type = #tpu.core_type<tc>, window_params = [{transform_indices = @transform_0, window_bounds = array<i64: 2, 3072>}, {pipeline_mode = #tpu.pipeline_mode<synchronous>, transform_indices = @transform_1, window_bounds = array<i64: 3072, 256>}, {pipeline_mode = #tpu.pipeline_mode<synchronous>, transform_indices = @transform_2, window_bounds = array<i64: 1, 256>}, {pipeline_mode = #tpu.pipeline_mode<synchronous>, transform_indices = @transform_3, window_bounds = array<i64: 256, 128>}, {pipeline_mode = #tpu.pipeline_mode<synchronous>, transform_indices = @transform_4, window_bounds = array<i64: 1, 128>}, {transform_indices = @transform_5, window_bounds = array<i64: 2, 128>}]} {
    %c0 = arith.constant 0 : index
    %c0_0 = arith.constant 0 : index
    %0 = vector.load %arg1[%c0, %c0_0] : memref<2x3072xbf16, #tpu.memory_space<vmem>>, vector<2x3072xbf16>
    %c0_1 = arith.constant 0 : index
    %c0_2 = arith.constant 0 : index
    %1 = vector.load %arg2[%c0_1, %c0_2] : memref<3072x256xbf16, #tpu.memory_space<vmem>>, vector<3072x256xbf16>
    %cst = arith.constant dense<0.000000e+00> : vector<2x256xf32>
    %2 = tpu.matmul %0, %1, %cst {dimension_numbers = #tpu.dot_dimension_numbers<[1], [0], [0], [1], [0, 0, 1, 1], [], []>} : vector<2x3072xbf16>, vector<3072x256xbf16>, vector<2x256xf32> -> vector<2x256xf32>
    %c0_3 = arith.constant 0 : index
    %c0_4 = arith.constant 0 : index
    %3 = vector.load %arg3[%c0_3, %c0_4] : memref<1x256xf32, #tpu.memory_space<vmem>>, vector<1x256xf32>
    %4 = vector.broadcast %3 : vector<1x256xf32> to vector<2x256xf32>
    %5 = arith.addf %2, %4 : vector<2x256xf32>
    %cst_5 = arith.constant 0.000000e+00 : f32
    %6 = vector.broadcast %cst_5 : f32 to vector<2x256xf32>
    %7 = arith.maximumf %5, %6 : vector<2x256xf32>
    %8 = arith.truncf %7 : vector<2x256xf32> to vector<2x256xbf16>
    %c0_6 = arith.constant 0 : index
    %c0_7 = arith.constant 0 : index
    %9 = vector.load %arg4[%c0_6, %c0_7] : memref<256x128xbf16, #tpu.memory_space<vmem>>, vector<256x128xbf16>
    %cst_8 = arith.constant dense<0.000000e+00> : vector<2x128xf32>
    %10 = tpu.matmul %8, %9, %cst_8 {dimension_numbers = #tpu.dot_dimension_numbers<[1], [0], [0], [1], [0, 0, 1, 1], [], []>} : vector<2x256xbf16>, vector<256x128xbf16>, vector<2x128xf32> -> vector<2x128xf32>
    %c0_9 = arith.constant 0 : index
    %c0_10 = arith.constant 0 : index
    %11 = vector.load %arg5[%c0_9, %c0_10] : memref<1x128xf32, #tpu.memory_space<vmem>>, vector<1x128xf32>
    %12 = vector.broadcast %11 : vector<1x128xf32> to vector<2x128xf32>
    %13 = arith.addf %10, %12 : vector<2x128xf32>
    %c0_11 = arith.constant 0 : index
    %c0_12 = arith.constant 0 : index
    %14 = vector.load %arg6[%c0_11, %c0_12] : memref<2x128xf32, #tpu.memory_space<vmem>>, vector<2x128xf32>
    tpu.vector_store %arg6[%c0_11, %c0_12], %13 {strides = array<i32>} : memref<2x128xf32, #tpu.memory_space<vmem>>, vector<2x128xf32>,
    return
  }
  func.func @transform_0(%arg0: i32) -> (i32, i32) {
    %c0_i32 = arith.constant 0 : i32
    %c0_i32_0 = arith.constant 0 : i32
    return %arg0, %c0_i32 : i32, i32
  }
  func.func @transform_1(%arg0: i32) -> (i32, i32) {
    %c0_i32 = arith.constant 0 : i32
    %c0_i32_0 = arith.constant 0 : i32
    %c0_i32_1 = arith.constant 0 : i32
    return %c0_i32, %c0_i32_0 : i32, i32
  }
  func.func @transform_2(%arg0: i32) -> (i32, i32) {
    %c0_i32 = arith.constant 0 : i32
    %c0_i32_0 = arith.constant 0 : i32
    %c0_i32_1 = arith.constant 0 : i32
    return %c0_i32, %c0_i32_0 : i32, i32
  }
  func.func @transform_3(%arg0: i32) -> (i32, i32) {
    %c0_i32 = arith.constant 0 : i32
    %c0_i32_0 = arith.constant 0 : i32
    %c0_i32_1 = arith.constant 0 : i32
    return %c0_i32, %c0_i32_0 : i32, i32
  }
  func.func @transform_4(%arg0: i32) -> (i32, i32) {
    %c0_i32 = arith.constant 0 : i32
    %c0_i32_0 = arith.constant 0 : i32
    %c0_i32_1 = arith.constant 0 : i32
    return %c0_i32, %c0_i32_0 : i32, i32
  }
  func.func @transform_5(%arg0: i32) -> (i32, i32) {
    %c0_i32 = arith.constant 0 : i32
    %c0_i32_0 = arith.constant 0 : i32
    return %arg0, %c0_i32 : i32, i32
  }
}

</mosaic_0001>

<llo_original>
// kernel: cnn_policy_forward.2
$region0: #{cnn_policy_forward.2}
  #allocation0 [shape = 'u32[]', space=smem, size = 0x4, offset = 0x4, fixed_abs, tag = 'smem constant byte address 0x4 - core index']
  #allocation1 [shape = 'u32[144,128]{1,0:T(1,128)}', space=vmem, size = 0x12000, scoped, tag = 'internal scratch']
  %s0 = inlined_call_operand.vmem [shape: bf16[224,576], index: 0, kind: input, shape index: {}]
  %s1 = inlined_call_operand.vmem [shape: bf16[576,64], index: 1, kind: input, shape index: {}]
  %s2 = inlined_call_operand.vmem [shape: f32[1,64], index: 2, kind: input, shape index: {}]
  %s3 = inlined_call_operand.vmem [shape: bf16[4,64,32], index: 3, kind: input, shape index: {}]
  %s4 = inlined_call_operand.vmem [shape: f32[1,32], index: 4, kind: input, shape index: {}]
  %s5 = inlined_call_operand.vmem [shape: bf16[192,32], index: 5, kind: output, shape index: {}]
  %s6 = sld [smem:[#allocation0]]
  $region30: #{cnn_policy_forward.2} parent=0
    _
  %s8 = ssub.s32 1, %s6
  %s9 = scalar_select 0, %s8, %s6
  // Predicated region
  $region2: #{cnn_policy_forward.2} parent=0 // pred_check
    _
  $region3: #{cnn_policy_forward.2} parent=0 // pred_check_branch
    %11 = sbr.rel (0) target = $region5
  $region4: #{cnn_policy_forward.2} parent=0 // pred_region
    _
  $region5: #{cnn_policy_forward.2} parent=0 // pred_fallthru
    _
  // Predicated region
  $region6: #{cnn_policy_forward.2} parent=0 // pred_check
    _
  $region7: #{cnn_policy_forward.2} parent=0 // pred_check_branch
    %13 = sbr.rel (0) target = $region9
  $region8: #{cnn_policy_forward.2} parent=0 // pred_region
    _
  $region9: #{cnn_policy_forward.2} parent=0 // pred_fallthru
    _
  // Predicated region
  $region10: #{cnn_policy_forward.2} parent=0 // pred_check
    _
  $region11: #{cnn_policy_forward.2} parent=0 // pred_check_branch
    %15 = sbr.rel (0) target = $region13
  $region12: #{cnn_policy_forward.2} parent=0 // pred_region
    _
  $region13: #{cnn_policy_forward.2} parent=0 // pred_fallthru
    _
  // Predicated region
  $region14: #{cnn_policy_forward.2} parent=0 // pred_check
    _
  $region15: #{cnn_policy_forward.2} parent=0 // pred_check_branch
    %17 = sbr.rel (0) target = $region17
  $region16: #{cnn_policy_forward.2} parent=0 // pred_region
    _
  $region17: #{cnn_policy_forward.2} parent=0 // pred_fallthru
    _
  // Predicated region
  $region18: #{cnn_policy_forward.2} parent=0 // pred_check
    _
  $region19: #{cnn_policy_forward.2} parent=0 // pred_check_branch
    %19 = sbr.rel (0) target = $region21
  $region20: #{cnn_policy_forward.2} parent=0 // pred_region
    _
  $region21: #{cnn_policy_forward.2} parent=0 // pred_fallthru
    _
  %v21 = vld [vmem:[%s0] sm:$0xff]
  %v22 = vld [vmem:[%s0 + $0x8] sm:$0xff]
  %v23 = vld [vmem:[%s0 + $0x10] sm:$0xf]
  %v24 = vld [vmem:[%s0 + $0x14] sm:$0xff]
  %v25 = vld [vmem:[%s0 + $0x1c] sm:$0xff]
  %v26 = vld [vmem:[%s0 + $0x24] sm:$0xf]
  %v27 = vld [vmem:[%s0 + $0x28] sm:$0xff]
  %v28 = vld [vmem:[%s0 + $0x30] sm:$0xff]
  %v29 = vld [vmem:[%s0 + $0x38] sm:$0xf]
  %v30 = vld [vmem:[%s0 + $0x3c] sm:$0xff]
  %v31 = vld [vmem:[%s0 + $0x44] sm:$0xff]
  %v32 = vld [vmem:[%s0 + $0x4c] sm:$0xf]
  %v33 = vld [vmem:[%s0 + $0x50] sm:$0xff]
  %v34 = vld [vmem:[%s0 + $0x58] sm:$0xff]
  %v35 = vld [vmem:[%s0 + $0x60] sm:$0xf]
  %v36 = vld [vmem:[%s0 + $0x64] sm:$0xff]
  %v37 = vld [vmem:[%s0 + $0x6c] sm:$0xff]
  %v38 = vld [vmem:[%s0 + $0x74] sm:$0xf]
  %v39 = vld [vmem:[%s0 + $0x78] sm:$0xff]
  %v40 = vld [vmem:[%s0 + $0x80] sm:$0xff]
  %v41 = vld [vmem:[%s0 + $0x88] sm:$0xf]
  %v42 = vld [vmem:[%s0 + $0x8c] sm:$0xff]
  %v43 = vld [vmem:[%s0 + $0x94] sm:$0xff]
  %v44 = vld [vmem:[%s0 + $0x9c] sm:$0xf]
  %v45 = vld [vmem:[%s0 + $0xa0] sm:$0xff]
  %v46 = vld [vmem:[%s0 + $0xa8] sm:$0xff]
  %v47 = vld [vmem:[%s0 + $0xb0] sm:$0xf]
  %v48 = vld [vmem:[%s0 + $0xb4] sm:$0xff]
  %v49 = vld [vmem:[%s0 + $0xbc] sm:$0xff]
  %v50 = vld [vmem:[%s0 + $0xc4] sm:$0xf]
  %v51 = vld [vmem:[%s0 + $0xc8] sm:$0xff]
  %v52 = vld [vmem:[%s0 + $0xd0] sm:$0xff]
  %v53 = vld [vmem:[%s0 + $0xd8] sm:$0xf]
  %v54 = vld [vmem:[%s0 + $0xdc] sm:$0xff]
  %v55 = vld [vmem:[%s0 + $0xe4] sm:$0xff]
  %v56 = vld [vmem:[%s0 + $0xec] sm:$0xf]
  %v57 = vld [vmem:[%s0 + $0xf0] sm:$0xff]
  %v58 = vld [vmem:[%s0 + $0xf8] sm:$0xff]
  %v59 = vld [vmem:[%s0 + $0x100] sm:$0xf]
  %v60 = vld [vmem:[%s0 + $0x104] sm:$0xff]
  %v61 = vld [vmem:[%s0 + $0x10c] sm:$0xff]
  %v62 = vld [vmem:[%s0 + $0x114] sm:$0xf]
  %v63 = vld [vmem:[%s0 + $0x118] sm:$0xff]
  %v64 = vld [vmem:[%s0 + $0x120] sm:$0xff]
  %v65 = vld [vmem:[%s0 + $0x128] sm:$0xf]
  %v66 = vld [vmem:[%s0 + $0x12c] sm:$0xff]
  %v67 = vld [vmem:[%s0 + $0x134] sm:$0xff]
  %v68 = vld [vmem:[%s0 + $0x13c] sm:$0xf]
  %v69 = vld [vmem:[%s0 + $0x140] sm:$0xff]
  %v70 = vld [vmem:[%s0 + $0x148] sm:$0xff]
  %v71 = vld [vmem:[%s0 + $0x150] sm:$0xf]
  %v72 = vld [vmem:[%s0 + $0x154] sm:$0xff]
  %v73 = vld [vmem:[%s0 + $0x15c] sm:$0xff]
  %v74 = vld [vmem:[%s0 + $0x164] sm:$0xf]
  %v75 = vld [vmem:[%s0 + $0x168] sm:$0xff]
  %v76 = vld [vmem:[%s0 + $0x170] sm:$0xff]
  %v77 = vld [vmem:[%s0 + $0x178] sm:$0xf]
  %v78 = vld [vmem:[%s0 + $0x17c] sm:$0xff]
  %v79 = vld [vmem:[%s0 + $0x184] sm:$0xff]
  %v80 = vld [vmem:[%s0 + $0x18c] sm:$0xf]
  %v81 = vld [vmem:[%s0 + $0x190] sm:$0xff]
  %v82 = vld [vmem:[%s0 + $0x198] sm:$0xff]
  %v83 = vld [vmem:[%s0 + $0x1a0] sm:$0xf]
  %v84 = vld [vmem:[%s0 + $0x1a4] sm:$0xff]
  %v85 = vld [vmem:[%s0 + $0x1ac] sm:$0xff]
  %v86 = vld [vmem:[%s0 + $0x1b4] sm:$0xf]
  %v87 = vld [vmem:[%s0 + $0x1b8] sm:$0xff]
  %v88 = vld [vmem:[%s0 + $0x1c0] sm:$0xff]
  %v89 = vld [vmem:[%s0 + $0x1c8] sm:$0xf]
  %v90 = vld [vmem:[%s0 + $0x1cc] sm:$0xff]
  %v91 = vld [vmem:[%s0 + $0x1d4] sm:$0xff]
  %v92 = vld [vmem:[%s0 + $0x1dc] sm:$0xf]
  %v93 = vld [vmem:[%s0 + $0x1e0] sm:$0xff]
  %v94 = vld [vmem:[%s0 + $0x1e8] sm:$0xff]
  %v95 = vld [vmem:[%s0 + $0x1f0] sm:$0xf]
  %v96 = vld [vmem:[%s0 + $0x1f4] sm:$0xff]
  %v97 = vld [vmem:[%s0 + $0x1fc] sm:$0xff]
  %v98 = vld [vmem:[%s0 + $0x204] sm:$0xf]
  %v99 = vld [vmem:[%s0 + $0x208] sm:$0xff]
  %v100 = vld [vmem:[%s0 + $0x210] sm:$0xff]
  %v101 = vld [vmem:[%s0 + $0x218] sm:$0xf]
  %v102 = vld [vmem:[%s0 + $0x21c] sm:$0xff]
  %v103 = vld [vmem:[%s0 + $0x224] sm:$0xff]
  %v104 = vld [vmem:[%s0 + $0x22c] sm:$0xf]
  %v105 = vld [vmem:[%s1] sm:$0xf]
  %v106 = vld [vmem:[%s1 + $0x4] sm:$0xf]
  %v107 = vld [vmem:[%s1 + $0x8] sm:$0xf]
  %v108 = vld [vmem:[%s1 + $0xc] sm:$0xf]
  %v109 = vld [vmem:[%s1 + $0x10] sm:$0xf]
  %v110 = vld [vmem:[%s1 + $0x14] sm:$0xf]
  %v111 = vld [vmem:[%s1 + $0x18] sm:$0xf]
  %v112 = vld [vmem:[%s1 + $0x1c] sm:$0xf]
  %v113 = vld [vmem:[%s1 + $0x20] sm:$0xf]
  %v114 = vld [vmem:[%s1 + $0x24] sm:$0xf]
  %v115 = vld [vmem:[%s1 + $0x28] sm:$0xf]
  %v116 = vld [vmem:[%s1 + $0x2c] sm:$0xf]
  %v117 = vld [vmem:[%s1 + $0x30] sm:$0xf]
  %v118 = vld [vmem:[%s1 + $0x34] sm:$0xf]
  %v119 = vld [vmem:[%s1 + $0x38] sm:$0xf]
  %v120 = vld [vmem:[%s1 + $0x3c] sm:$0xf]
  %v121 = vld [vmem:[%s1 + $0x40] sm:$0xf]
  %v122 = vld [vmem:[%s1 + $0x44] sm:$0xf]
  %v123 = vld [vmem:[%s1 + $0x48] sm:$0xf]
  %v124 = vld [vmem:[%s1 + $0x4c] sm:$0xf]
  %v125 = vld [vmem:[%s1 + $0x50] sm:$0xf]
  %v126 = vld [vmem:[%s1 + $0x54] sm:$0xf]
  %v127 = vld [vmem:[%s1 + $0x58] sm:$0xf]
  %v128 = vld [vmem:[%s1 + $0x5c] sm:$0xf]
  %v129 = vld [vmem:[%s1 + $0x60] sm:$0xf]
  %v130 = vld [vmem:[%s1 + $0x64] sm:$0xf]
  %v131 = vld [vmem:[%s1 + $0x68] sm:$0xf]
  %v132 = vld [vmem:[%s1 + $0x6c] sm:$0xf]
  %v133 = vld [vmem:[%s1 + $0x70] sm:$0xf]
  %v134 = vld [vmem:[%s1 + $0x74] sm:$0xf]
  %v135 = vld [vmem:[%s1 + $0x78] sm:$0xf]
  %v136 = vld [vmem:[%s1 + $0x7c] sm:$0xf]
  %v137 = vld [vmem:[%s1 + $0x80] sm:$0xf]
  %v138 = vld [vmem:[%s1 + $0x84] sm:$0xf]
  %v139 = vld [vmem:[%s1 + $0x88] sm:$0xf]
  %v140 = vld [vmem:[%s1 + $0x8c] sm:$0xf]
  %v141 = vld [vmem:[%s1 + $0x90] sm:$0xf]
  %v142 = vld [vmem:[%s1 + $0x94] sm:$0xf]
  %v143 = vld [vmem:[%s1 + $0x98] sm:$0xf]
  %v144 = vld [vmem:[%s1 + $0x9c] sm:$0xf]
  %v145 = vld [vmem:[%s1 + $0xa0] sm:$0xf]
  %v146 = vld [vmem:[%s1 + $0xa4] sm:$0xf]
  %v147 = vld [vmem:[%s1 + $0xa8] sm:$0xf]
  %v148 = vld [vmem:[%s1 + $0xac] sm:$0xf]
  %v149 = vld [vmem:[%s1 + $0xb0] sm:$0xf]
  %v150 = vld [vmem:[%s1 + $0xb4] sm:$0xf]
  %v151 = vld [vmem:[%s1 + $0xb8] sm:$0xf]
  %v152 = vld [vmem:[%s1 + $0xbc] sm:$0xf]
  %v153 = vld [vmem:[%s1 + $0xc0] sm:$0xf]
  %v154 = vld [vmem:[%s1 + $0xc4] sm:$0xf]
  %v155 = vld [vmem:[%s1 + $0xc8] sm:$0xf]
  %v156 = vld [vmem:[%s1 + $0xcc] sm:$0xf]
  %v157 = vld [vmem:[%s1 + $0xd0] sm:$0xf]
  %v158 = vld [vmem:[%s1 + $0xd4] sm:$0xf]
  %v159 = vld [vmem:[%s1 + $0xd8] sm:$0xf]
  %v160 = vld [vmem:[%s1 + $0xdc] sm:$0xf]
  %v161 = vld [vmem:[%s1 + $0xe0] sm:$0xf]
  %v162 = vld [vmem:[%s1 + $0xe4] sm:$0xf]
  %v163 = vld [vmem:[%s1 + $0xe8] sm:$0xf]
  %v164 = vld [vmem:[%s1 + $0xec] sm:$0xf]
  %v165 = vld [vmem:[%s1 + $0xf0] sm:$0xf]
  %v166 = vld [vmem:[%s1 + $0xf4] sm:$0xf]
  %v167 = vld [vmem:[%s1 + $0xf8] sm:$0xf]
  %v168 = vld [vmem:[%s1 + $0xfc] sm:$0xf]
  %v169 = vld [vmem:[%s1 + $0x100] sm:$0xf]
  %v170 = vld [vmem:[%s1 + $0x104] sm:$0xf]
  %v171 = vld [vmem:[%s1 + $0x108] sm:$0xf]
  %v172 = vld [vmem:[%s1 + $0x10c] sm:$0xf]
  %v173 = vld [vmem:[%s1 + $0x110] sm:$0xf]
  %v174 = vld [vmem:[%s1 + $0x114] sm:$0xf]
  %v175 = vld [vmem:[%s1 + $0x118] sm:$0xf]
  %v176 = vld [vmem:[%s1 + $0x11c] sm:$0xf]
  %v177 = vld [vmem:[%s2] sm:$0x1]
  %v179 = vlaneseq
  %v180 = vshrl.u32 %v179, 7
  %v181 = vsub.s32 0, %v180
  %v182 = vrot.slane %v177, %v181
  %v268 = vunpack.c.l.b16 %v21
  %v269 = vunpack.c.h.b16 %v21
  %v270 = vunpack.c.l.b16 %v22
  %v271 = vunpack.c.h.b16 %v22
  %v272 = vunpack.c.l.b16 %v23
  %v273 = vunpack.c.l.b16 %v24
  %v274 = vunpack.c.h.b16 %v24
  %v275 = vunpack.c.l.b16 %v25
  %v276 = vunpack.c.h.b16 %v25
  %v277 = vunpack.c.l.b16 %v26
  %v278 = vunpack.c.l.b16 %v27
  %v279 = vunpack.c.h.b16 %v27
  %v280 = vunpack.c.l.b16 %v28
  %v281 = vunpack.c.h.b16 %v28
  %v282 = vunpack.c.l.b16 %v29
  %v283 = vunpack.c.l.b16 %v30
  %v284 = vunpack.c.h.b16 %v30
  %v285 = vunpack.c.l.b16 %v31
  %v286 = vunpack.c.h.b16 %v31
  %v287 = vunpack.c.l.b16 %v32
  %v288 = vunpack.c.l.b16 %v33
  %v289 = vunpack.c.h.b16 %v33
  %v290 = vunpack.c.l.b16 %v34
  %v291 = vunpack.c.h.b16 %v34
  %v292 = vunpack.c.l.b16 %v35
  %v293 = vunpack.c.l.b16 %v36
  %v294 = vunpack.c.h.b16 %v36
  %v295 = vunpack.c.l.b16 %v37
  %v296 = vunpack.c.h.b16 %v37
  %v297 = vunpack.c.l.b16 %v38
  %v298 = vunpack.c.l.b16 %v39
  %v299 = vunpack.c.h.b16 %v39
  %v300 = vunpack.c.l.b16 %v40
  %v301 = vunpack.c.h.b16 %v40
  %v302 = vunpack.c.l.b16 %v41
  %v303 = vunpack.c.l.b16 %v42
  %v304 = vunpack.c.h.b16 %v42
  %v305 = vunpack.c.l.b16 %v43
  %v306 = vunpack.c.h.b16 %v43
  %v307 = vunpack.c.l.b16 %v44
  %v308 = vunpack.c.l.b16 %v45
  %v309 = vunpack.c.h.b16 %v45
  %v310 = vunpack.c.l.b16 %v46
  %v311 = vunpack.c.h.b16 %v46
  %v312 = vunpack.c.l.b16 %v47
  %v313 = vunpack.c.l.b16 %v48
  %v314 = vunpack.c.h.b16 %v48
  %v315 = vunpack.c.l.b16 %v49
  %v316 = vunpack.c.h.b16 %v49
  %v317 = vunpack.c.l.b16 %v50
  %v318 = vunpack.c.l.b16 %v51
  %v319 = vunpack.c.h.b16 %v51
  %v320 = vunpack.c.l.b16 %v52
  %v321 = vunpack.c.h.b16 %v52
  %v322 = vunpack.c.l.b16 %v53
  %v323 = vunpack.c.l.b16 %v54
  %v324 = vunpack.c.h.b16 %v54
  %v325 = vunpack.c.l.b16 %v55
  %v326 = vunpack.c.h.b16 %v55
  %v327 = vunpack.c.l.b16 %v56
  %v328 = vunpack.c.l.b16 %v57
  %v329 = vunpack.c.h.b16 %v57
  %v330 = vunpack.c.l.b16 %v58
  %v331 = vunpack.c.h.b16 %v58
  %v332 = vunpack.c.l.b16 %v59
  %v333 = vunpack.c.l.b16 %v60
  %v334 = vunpack.c.h.b16 %v60
  %v335 = vunpack.c.l.b16 %v61
  %v336 = vunpack.c.h.b16 %v61
  %v337 = vunpack.c.l.b16 %v62
  %v338 = vunpack.c.l.b16 %v63
  %v339 = vunpack.c.h.b16 %v63
  %v340 = vunpack.c.l.b16 %v64
  %v341 = vunpack.c.h.b16 %v64
  %v342 = vunpack.c.l.b16 %v65
  %v343 = vunpack.c.l.b16 %v66
  %v344 = vunpack.c.h.b16 %v66
  %v345 = vunpack.c.l.b16 %v67
  %v346 = vunpack.c.h.b16 %v67
  %v347 = vunpack.c.l.b16 %v68
  %v348 = vunpack.c.l.b16 %v69
  %v349 = vunpack.c.h.b16 %v69
  %v350 = vunpack.c.l.b16 %v70
  %v351 = vunpack.c.h.b16 %v70
  %v352 = vunpack.c.l.b16 %v71
  %v353 = vunpack.c.l.b16 %v72
  %v354 = vunpack.c.h.b16 %v72
  %v355 = vunpack.c.l.b16 %v73
  %v356 = vunpack.c.h.b16 %v73
  %v357 = vunpack.c.l.b16 %v74
  %v358 = vunpack.c.l.b16 %v75
  %v359 = vunpack.c.h.b16 %v75
  %v360 = vunpack.c.l.b16 %v76
  %v361 = vunpack.c.h.b16 %v76
  %v362 = vunpack.c.l.b16 %v77
  %v363 = vunpack.c.l.b16 %v78
  %v364 = vunpack.c.h.b16 %v78
  %v365 = vunpack.c.l.b16 %v79
  %v366 = vunpack.c.h.b16 %v79
  %v367 = vunpack.c.l.b16 %v80
  %v368 = vunpack.c.l.b16 %v81
  %v369 = vunpack.c.h.b16 %v81
  %v370 = vunpack.c.l.b16 %v82
  %v371 = vunpack.c.h.b16 %v82
  %v372 = vunpack.c.l.b16 %v83
  %v373 = vunpack.c.l.b16 %v84
  %v374 = vunpack.c.h.b16 %v84
  %v375 = vunpack.c.l.b16 %v85
  %v376 = vunpack.c.h.b16 %v85
  %v377 = vunpack.c.l.b16 %v86
  %v378 = vunpack.c.l.b16 %v87
  %v379 = vunpack.c.h.b16 %v87
  %v380 = vunpack.c.l.b16 %v88
  %v381 = vunpack.c.h.b16 %v88
  %v382 = vunpack.c.l.b16 %v89
  %v383 = vunpack.c.l.b16 %v90
  %v384 = vunpack.c.h.b16 %v90
  %v385 = vunpack.c.l.b16 %v91
  %v386 = vunpack.c.h.b16 %v91
  %v387 = vunpack.c.l.b16 %v92
  %v388 = vunpack.c.l.b16 %v93
  %v389 = vunpack.c.h.b16 %v93
  %v390 = vunpack.c.l.b16 %v94
  %v391 = vunpack.c.h.b16 %v94
  %v392 = vunpack.c.l.b16 %v95
  %v393 = vunpack.c.l.b16 %v96
  %v394 = vunpack.c.h.b16 %v96
  %v395 = vunpack.c.l.b16 %v97
  %v396 = vunpack.c.h.b16 %v97
  %v397 = vunpack.c.l.b16 %v98
  %v398 = vunpack.c.l.b16 %v99
  %v399 = vunpack.c.h.b16 %v99
  %v400 = vunpack.c.l.b16 %v100
  %v401 = vunpack.c.h.b16 %v100
  %v402 = vunpack.c.l.b16 %v101
  %v403 = vunpack.c.l.b16 %v102
  %v404 = vunpack.c.h.b16 %v102
  %v405 = vunpack.c.l.b16 %v103
  %v406 = vunpack.c.h.b16 %v103
  %v407 = vunpack.c.l.b16 %v104
  %v408 = vpack.c.b16 %v273, %v268
  %v409 = vpack.c.b16 %v274, %v269
  %v410 = vpack.c.b16 %v275, %v270
  %v411 = vpack.c.b16 %v276, %v271
  %v412 = vpack.c.b16 %v277, %v272
  %v413 = vpack.c.b16 %v283, %v278
  %v414 = vpack.c.b16 %v284, %v279
  %v415 = vpack.c.b16 %v285, %v280
  %v416 = vpack.c.b16 %v286, %v281
  %v417 = vpack.c.b16 %v287, %v282
  %v418 = vpack.c.b16 %v293, %v288
  %v419 = vpack.c.b16 %v294, %v289
  %v420 = vpack.c.b16 %v295, %v290
  %v421 = vpack.c.b16 %v296, %v291
  %v422 = vpack.c.b16 %v297, %v292
  %v423 = vpack.c.b16 %v303, %v298
  %v424 = vpack.c.b16 %v304, %v299
  %v425 = vpack.c.b16 %v305, %v300
  %v426 = vpack.c.b16 %v306, %v301
  %v427 = vpack.c.b16 %v307, %v302
  %v428 = vpack.c.b16 %v313, %v308
  %v429 = vpack.c.b16 %v314, %v309
  %v430 = vpack.c.b16 %v315, %v310
  %v431 = vpack.c.b16 %v316, %v311
  %v432 = vpack.c.b16 %v317, %v312
  %v433 = vpack.c.b16 %v323, %v318
  %v434 = vpack.c.b16 %v324, %v319
  %v435 = vpack.c.b16 %v325, %v320
  %v436 = vpack.c.b16 %v326, %v321
  %v437 = vpack.c.b16 %v327, %v322
  %v438 = vpack.c.b16 %v333, %v328
  %v439 = vpack.c.b16 %v334, %v329
  %v440 = vpack.c.b16 %v335, %v330
  %v441 = vpack.c.b16 %v336, %v331
  %v442 = vpack.c.b16 %v337, %v332
  %v443 = vpack.c.b16 %v343, %v338
  %v444 = vpack.c.b16 %v344, %v339
  %v445 = vpack.c.b16 %v345, %v340
  %v446 = vpack.c.b16 %v346, %v341
  %v447 = vpack.c.b16 %v347, %v342
  %v448 = vpack.c.b16 %v353, %v348
  %v449 = vpack.c.b16 %v354, %v349
  %v450 = vpack.c.b16 %v355, %v350
  %v451 = vpack.c.b16 %v356, %v351
  %v452 = vpack.c.b16 %v357, %v352
  %v453 = vpack.c.b16 %v363, %v358
  %v454 = vpack.c.b16 %v364, %v359
  %v455 = vpack.c.b16 %v365, %v360
  %v456 = vpack.c.b16 %v366, %v361
  %v457 = vpack.c.b16 %v367, %v362
  %v458 = vpack.c.b16 %v373, %v368
  %v459 = vpack.c.b16 %v374, %v369
  %v460 = vpack.c.b16 %v375, %v370
  %v461 = vpack.c.b16 %v376, %v371
  %v462 = vpack.c.b16 %v377, %v372
  %v463 = vpack.c.b16 %v383, %v378
  %v464 = vpack.c.b16 %v384, %v379
  %v465 = vpack.c.b16 %v385, %v380
  %v466 = vpack.c.b16 %v386, %v381
  %v467 = vpack.c.b16 %v387, %v382
  %v468 = vpack.c.b16 %v393, %v388
  %v469 = vpack.c.b16 %v394, %v389
  %v470 = vpack.c.b16 %v395, %v390
  %v471 = vpack.c.b16 %v396, %v391
  %v472 = vpack.c.b16 %v397, %v392
  %v473 = vpack.c.b16 %v403, %v398
  %v474 = vpack.c.b16 %v404, %v399
  %v475 = vpack.c.b16 %v405, %v400
  %v476 = vpack.c.b16 %v406, %v401
  %v477 = vpack.c.b16 %v407, %v402
  %v606 = vunpack.c.l.b16 %v105
  %v607 = vunpack.c.l.b16 %v106
  %v608 = vunpack.c.l.b16 %v107
  %v609 = vunpack.c.l.b16 %v108
  %v610 = vunpack.c.l.b16 %v109
  %v611 = vunpack.c.l.b16 %v110
  %v612 = vunpack.c.l.b16 %v111
  %v613 = vunpack.c.l.b16 %v112
  %v614 = vunpack.c.l.b16 %v113
  %v615 = vunpack.c.l.b16 %v114
  %v616 = vunpack.c.l.b16 %v115
  %v617 = vunpack.c.l.b16 %v116
  %v618 = vunpack.c.l.b16 %v117
  %v619 = vunpack.c.l.b16 %v118
  %v620 = vunpack.c.l.b16 %v119
  %v621 = vunpack.c.l.b16 %v120
  %v622 = vunpack.c.l.b16 %v121
  %v623 = vunpack.c.l.b16 %v122
  %v624 = vunpack.c.l.b16 %v123
  %v625 = vunpack.c.l.b16 %v124
  %v626 = vunpack.c.l.b16 %v125
  %v627 = vunpack.c.l.b16 %v126
  %v628 = vunpack.c.l.b16 %v127
  %v629 = vunpack.c.l.b16 %v128
  %v630 = vunpack.c.l.b16 %v129
  %v631 = vunpack.c.l.b16 %v130
  %v632 = vunpack.c.l.b16 %v131
  %v633 = vunpack.c.l.b16 %v132
  %v634 = vunpack.c.l.b16 %v133
  %v635 = vunpack.c.l.b16 %v134
  %v636 = vunpack.c.l.b16 %v135
  %v637 = vunpack.c.l.b16 %v136
  %v638 = vunpack.c.l.b16 %v137
  %v639 = vunpack.c.l.b16 %v138
  %v640 = vunpack.c.l.b16 %v139
  %v641 = vunpack.c.l.b16 %v140
  %v642 = vunpack.c.l.b16 %v141
  %v643 = vunpack.c.l.b16 %v142
  %v644 = vunpack.c.l.b16 %v143
  %v645 = vunpack.c.l.b16 %v144
  %v646 = vunpack.c.l.b16 %v145
  %v647 = vunpack.c.l.b16 %v146
  %v648 = vunpack.c.l.b16 %v147
  %v649 = vunpack.c.l.b16 %v148
  %v650 = vunpack.c.l.b16 %v149
  %v651 = vunpack.c.l.b16 %v150
  %v652 = vunpack.c.l.b16 %v151
  %v653 = vunpack.c.l.b16 %v152
  %v654 = vunpack.c.l.b16 %v153
  %v655 = vunpack.c.l.b16 %v154
  %v656 = vunpack.c.l.b16 %v155
  %v657 = vunpack.c.l.b16 %v156
  %v658 = vunpack.c.l.b16 %v157
  %v659 = vunpack.c.l.b16 %v158
  %v660 = vunpack.c.l.b16 %v159
  %v661 = vunpack.c.l.b16 %v160
  %v662 = vunpack.c.l.b16 %v161
  %v663 = vunpack.c.l.b16 %v162
  %v664 = vunpack.c.l.b16 %v163
  %v665 = vunpack.c.l.b16 %v164
  %v666 = vunpack.c.l.b16 %v165
  %v667 = vunpack.c.l.b16 %v166
  %v668 = vunpack.c.l.b16 %v167
  %v669 = vunpack.c.l.b16 %v168
  %v670 = vunpack.c.l.b16 %v169
  %v671 = vunpack.c.l.b16 %v170
  %v672 = vunpack.c.l.b16 %v171
  %v673 = vunpack.c.l.b16 %v172
  %v674 = vunpack.c.l.b16 %v173
  %v675 = vunpack.c.l.b16 %v174
  %v676 = vunpack.c.l.b16 %v175
  %v677 = vunpack.c.l.b16 %v176
  %v678 = vpack.c.b16 %v607, %v606
  %v679 = vpack.c.b16 %v609, %v608
  %v680 = vpack.c.b16 %v611, %v610
  %v681 = vpack.c.b16 %v613, %v612
  %v682 = vpack.c.b16 %v615, %v614
  %v683 = vpack.c.b16 %v617, %v616
  %v684 = vpack.c.b16 %v619, %v618
  %v685 = vpack.c.b16 %v621, %v620
  %v686 = vpack.c.b16 %v623, %v622
  %v687 = vpack.c.b16 %v625, %v624
  %v688 = vpack.c.b16 %v627, %v626
  %v689 = vpack.c.b16 %v629, %v628
  %v690 = vpack.c.b16 %v631, %v630
  %v691 = vpack.c.b16 %v633, %v632
  %v692 = vpack.c.b16 %v635, %v634
  %v693 = vpack.c.b16 %v637, %v636
  %v694 = vpack.c.b16 %v639, %v638
  %v695 = vpack.c.b16 %v641, %v640
  %v696 = vpack.c.b16 %v643, %v642
  %v697 = vpack.c.b16 %v645, %v644
  %v698 = vpack.c.b16 %v647, %v646
  %v699 = vpack.c.b16 %v649, %v648
  %v700 = vpack.c.b16 %v651, %v650
  %v701 = vpack.c.b16 %v653, %v652
  %v702 = vpack.c.b16 %v655, %v654
  %v703 = vpack.c.b16 %v657, %v656
  %v704 = vpack.c.b16 %v659, %v658
  %v705 = vpack.c.b16 %v661, %v660
  %v706 = vpack.c.b16 %v663, %v662
  %v707 = vpack.c.b16 %v665, %v664
  %v708 = vpack.c.b16 %v667, %v666
  %v709 = vpack.c.b16 %v669, %v668
  %v710 = vpack.c.b16 %v671, %v670
  %v711 = vpack.c.b16 %v673, %v672
  %v712 = vpack.c.b16 %v675, %v674
  %v713 = vpack.c.b16 %v677, %v676
  %vm750 = vcmask 523264
  %v752 = vsel %vm750, %v412, 0
  %v755 = vsel %vm750, %v417, 0
  %v758 = vsel %vm750, %v422, 0
  %v761 = vsel %vm750, %v427, 0
  %v764 = vsel %vm750, %v432, 0
  %v767 = vsel %vm750, %v437, 0
  %v770 = vsel %vm750, %v442, 0
  %v773 = vsel %vm750, %v447, 0
  %v776 = vsel %vm750, %v452, 0
  %v779 = vsel %vm750, %v457, 0
  %v782 = vsel %vm750, %v462, 0
  %v785 = vsel %vm750, %v467, 0
  %v788 = vsel %vm750, %v472, 0
  %v791 = vsel %vm750, %v477, 0
  %793 = vmatprep.subr.bf16.mxu0 0
  %794 = vmatpush1.bf16.msra.mxu0 %v685
  %795 = vmatprep.subr.bf16.mxu0 0
  %796 = vmatpush1.bf16.msra.mxu0 %v684
  %797 = vmatprep.subr.bf16.mxu0 0
  %798 = vmatpush1.bf16.msra.mxu0 %v683
  %799 = vmatprep.subr.bf16.mxu0 0
  %800 = vmatpush1.bf16.msra.mxu0 %v682
  %801 = vmatprep.subr.bf16.mxu0 0
  %802 = vmatpush1.bf16.msra.mxu0 %v681
  %803 = vmatprep.subr.bf16.mxu0 0
  %804 = vmatpush1.bf16.msra.mxu0 %v680
  %805 = vmatprep.subr.bf16.mxu0 0
  %806 = vmatpush1.bf16.msra.mxu0 %v679
  %807 = vmatprep.subr.bf16.mxu0 0
  %808 = vmatpush1.bf16.msra.mxu0 %v678
  %809 = vmatprep.subr.bf16.mxu0 0
  %810 = vmatpush2.bf16.msra.mxu0 %v693
  %811 = vmatprep.subr.bf16.mxu0 0
  %812 = vmatpush2.bf16.msra.mxu0 %v692
  %813 = vmatprep.subr.bf16.mxu0 0
  %814 = vmatpush2.bf16.msra.mxu0 %v691
  %815 = vmatprep.subr.bf16.mxu0 0
  %816 = vmatpush2.bf16.msra.mxu0 %v690
  %817 = vmatprep.subr.bf16.mxu0 0
  %818 = vmatpush2.bf16.msra.mxu0 %v689
  %819 = vmatprep.subr.bf16.mxu0 0
  %820 = vmatpush2.bf16.msra.mxu0 %v688
  %821 = vmatprep.subr.bf16.mxu0 0
  %822 = vmatpush2.bf16.msra.mxu0 %v687
  %823 = vmatprep.subr.bf16.mxu0 0
  %824 = vmatpush2.bf16.msra.mxu0 %v686
  %825 = vmatprep.mubr.bf16.mxu0 %v409
  %826 = vmatmul.mubr.bf16.gmra.mxu0 %v408
  %v827 = vpop.f32.mrf.mxu0
  %v828 = vadd.f32 %v182, %v827
  %v829 = vpop.f32.mrf.mxu0
  %v830 = vpop.f32.mrf.mxu0
  %v831 = vadd.f32 %v182, %v830
  %v832 = vpop.f32.mrf.mxu0
  %833 = vmatprep.mubr.bf16.mxu0 %v414
  %834 = vmatmul.mubr.bf16.gmra.mxu0 %v413
  %v835 = vpop.f32.mrf.mxu0
  %v836 = vadd.f32 %v182, %v835
  %v837 = vpop.f32.mrf.mxu0
  %v838 = vpop.f32.mrf.mxu0
  %v839 = vadd.f32 %v182, %v838
  %v840 = vpop.f32.mrf.mxu0
  %841 = vmatprep.mubr.bf16.mxu0 %v419
  %842 = vmatmul.mubr.bf16.gmra.mxu0 %v418
  %v843 = vpop.f32.mrf.mxu0
  %v844 = vadd.f32 %v182, %v843
  %v845 = vpop.f32.mrf.mxu0
  %v846 = vpop.f32.mrf.mxu0
  %v847 = vadd.f32 %v182, %v846
  %v848 = vpop.f32.mrf.mxu0
  %849 = vmatprep.mubr.bf16.mxu0 %v424
  %850 = vmatmul.mubr.bf16.gmra.mxu0 %v423
  %v851 = vpop.f32.mrf.mxu0
  %v852 = vadd.f32 %v182, %v851
  %v853 = vpop.f32.mrf.mxu0
  %v854 = vpop.f32.mrf.mxu0
  %v855 = vadd.f32 %v182, %v854
  %v856 = vpop.f32.mrf.mxu0
  %857 = vmatprep.mubr.bf16.mxu0 %v429
  %858 = vmatmul.mubr.bf16.gmra.mxu0 %v428
  %v859 = vpop.f32.mrf.mxu0
  %v860 = vadd.f32 %v182, %v859
  %v861 = vpop.f32.mrf.mxu0
  %v862 = vpop.f32.mrf.mxu0
  %v863 = vadd.f32 %v182, %v862
  %v864 = vpop.f32.mrf.mxu0
  %865 = vmatprep.mubr.bf16.mxu0 %v434
  %866 = vmatmul.mubr.bf16.gmra.mxu0 %v433
  %v867 = vpop.f32.mrf.mxu0
  %v868 = vadd.f32 %v182, %v867
  %v869 = vpop.f32.mrf.mxu0
  %v870 = vpop.f32.mrf.mxu0
  %v871 = vadd.f32 %v182, %v870
  %v872 = vpop.f32.mrf.mxu0
  %873 = vmatprep.mubr.bf16.mxu0 %v439
  %874 = vmatmul.mubr.bf16.gmra.mxu0 %v438
  %v875 = vpop.f32.mrf.mxu0
  %v876 = vadd.f32 %v182, %v875
  %v877 = vpop.f32.mrf.mxu0
  %v878 = vpop.f32.mrf.mxu0
  %v879 = vadd.f32 %v182, %v878
  %v880 = vpop.f32.mrf.mxu0
  %881 = vmatprep.mubr.bf16.mxu0 %v444
  %882 = vmatmul.mubr.bf16.gmra.mxu0 %v443
  %v883 = vpop.f32.mrf.mxu0
  %v884 = vadd.f32 %v182, %v883
  %v885 = vpop.f32.mrf.mxu0
  %v886 = vpop.f32.mrf.mxu0
  %v887 = vadd.f32 %v182, %v886
  %v888 = vpop.f32.mrf.mxu0
  %889 = vmatprep.mubr.bf16.mxu0 %v449
  %890 = vmatmul.mubr.bf16.gmra.mxu0 %v448
  %v891 = vpop.f32.mrf.mxu0
  %v892 = vadd.f32 %v182, %v891
  %v893 = vpop.f32.mrf.mxu0
  %v894 = vpop.f32.mrf.mxu0
  %v895 = vadd.f32 %v182, %v894
  %v896 = vpop.f32.mrf.mxu0
  %897 = vmatprep.mubr.bf16.mxu0 %v454
  %898 = vmatmul.mubr.bf16.gmra.mxu0 %v453
  %v899 = vpop.f32.mrf.mxu0
  %v900 = vadd.f32 %v182, %v899
  %v901 = vpop.f32.mrf.mxu0
  %v902 = vpop.f32.mrf.mxu0
  %v903 = vadd.f32 %v182, %v902
  %v904 = vpop.f32.mrf.mxu0
  %905 = vmatprep.mubr.bf16.mxu0 %v459
  %906 = vmatmul.mubr.bf16.gmra.mxu0 %v458
  %v907 = vpop.f32.mrf.mxu0
  %v908 = vadd.f32 %v182, %v907
  %v909 = vpop.f32.mrf.mxu0
  %v910 = vpop.f32.mrf.mxu0
  %v911 = vadd.f32 %v182, %v910
  %v912 = vpop.f32.mrf.mxu0
  %913 = vmatprep.mubr.bf16.mxu0 %v464
  %914 = vmatmul.mubr.bf16.gmra.mxu0 %v463
  %v915 = vpop.f32.mrf.mxu0
  %v916 = vadd.f32 %v182, %v915
  %v917 = vpop.f32.mrf.mxu0
  %v918 = vpop.f32.mrf.mxu0
  %v919 = vadd.f32 %v182, %v918
  %v920 = vpop.f32.mrf.mxu0
  %921 = vmatprep.mubr.bf16.mxu0 %v469
  %922 = vmatmul.mubr.bf16.gmra.mxu0 %v468
  %v923 = vpop.f32.mrf.mxu0
  %v924 = vadd.f32 %v182, %v923
  %v925 = vpop.f32.mrf.mxu0
  %v926 = vpop.f32.mrf.mxu0
  %v927 = vadd.f32 %v182, %v926
  %v928 = vpop.f32.mrf.mxu0
  %929 = vmatprep.mubr.bf16.mxu0 %v474
  %930 = vmatmul.mubr.bf16.gmra.mxu0 %v473
  %v931 = vpop.f32.mrf.mxu0
  %v932 = vadd.f32 %v182, %v931
  %v933 = vpop.f32.mrf.mxu0
  %v934 = vpop.f32.mrf.mxu0
  %v935 = vadd.f32 %v182, %v934
  %v936 = vpop.f32.mrf.mxu0
  %937 = vdwg.mxu0
  %938 = vmatprep.subr.bf16.mxu0 0
  %939 = vmatpush1.bf16.msra.mxu0 %v701
  %940 = vmatprep.subr.bf16.mxu0 0
  %941 = vmatpush1.bf16.msra.mxu0 %v700
  %942 = vmatprep.subr.bf16.mxu0 0
  %943 = vmatpush1.bf16.msra.mxu0 %v699
  %944 = vmatprep.subr.bf16.mxu0 0
  %945 = vmatpush1.bf16.msra.mxu0 %v698
  %946 = vmatprep.subr.bf16.mxu0 0
  %947 = vmatpush1.bf16.msra.mxu0 %v697
  %948 = vmatprep.subr.bf16.mxu0 0
  %949 = vmatpush1.bf16.msra.mxu0 %v696
  %950 = vmatprep.subr.bf16.mxu0 0
  %951 = vmatpush1.bf16.msra.mxu0 %v695
  %952 = vmatprep.subr.bf16.mxu0 0
  %953 = vmatpush1.bf16.msra.mxu0 %v694
  %954 = vmatprep.subr.bf16.mxu0 0
  %955 = vmatpush2.bf16.msra.mxu0 %v709
  %956 = vmatprep.subr.bf16.mxu0 0
  %957 = vmatpush2.bf16.msra.mxu0 %v708
  %958 = vmatprep.subr.bf16.mxu0 0
  %959 = vmatpush2.bf16.msra.mxu0 %v707
  %960 = vmatprep.subr.bf16.mxu0 0
  %961 = vmatpush2.bf16.msra.mxu0 %v706
  %962 = vmatprep.subr.bf16.mxu0 0
  %963 = vmatpush2.bf16.msra.mxu0 %v705
  %964 = vmatprep.subr.bf16.mxu0 0
  %965 = vmatpush2.bf16.msra.mxu0 %v704
  %966 = vmatprep.subr.bf16.mxu0 0
  %967 = vmatpush2.bf16.msra.mxu0 %v703
  %968 = vmatprep.subr.bf16.mxu0 0
  %969 = vmatpush2.bf16.msra.mxu0 %v702
  %970 = vmatprep.mubr.bf16.mxu0 %v411
  %971 = vmatmul.mubr.bf16.gmra.mxu0 %v410
  %v972 = vpop.f32.mrf.mxu0
  %v973 = vadd.f32 %v828, %v972
  %v974 = vpop.f32.mrf.mxu0
  %v975 = vpop.f32.mrf.mxu0
  %v976 = vadd.f32 %v831, %v975
  %v977 = vpop.f32.mrf.mxu0
  %978 = vmatprep.mubr.bf16.mxu0 %v416
  %979 = vmatmul.mubr.bf16.gmra.mxu0 %v415
  %v980 = vpop.f32.mrf.mxu0
  %v981 = vadd.f32 %v836, %v980
  %v982 = vpop.f32.mrf.mxu0
  %v983 = vpop.f32.mrf.mxu0
  %v984 = vadd.f32 %v839, %v983
  %v985 = vpop.f32.mrf.mxu0
  %986 = vmatprep.mubr.bf16.mxu0 %v421
  %987 = vmatmul.mubr.bf16.gmra.mxu0 %v420
  %v988 = vpop.f32.mrf.mxu0
  %v989 = vadd.f32 %v844, %v988
  %v990 = vpop.f32.mrf.mxu0
  %v991 = vpop.f32.mrf.mxu0
  %v992 = vadd.f32 %v847, %v991
  %v993 = vpop.f32.mrf.mxu0
  %994 = vmatprep.mubr.bf16.mxu0 %v426
  %995 = vmatmul.mubr.bf16.gmra.mxu0 %v425
  %v996 = vpop.f32.mrf.mxu0
  %v997 = vadd.f32 %v852, %v996
  %v998 = vpop.f32.mrf.mxu0
  %v999 = vpop.f32.mrf.mxu0
  %v1000 = vadd.f32 %v855, %v999
  %v1001 = vpop.f32.mrf.mxu0
  %1002 = vmatprep.mubr.bf16.mxu0 %v431
  %1003 = vmatmul.mubr.bf16.gmra.mxu0 %v430
  %v1004 = vpop.f32.mrf.mxu0
  %v1005 = vadd.f32 %v860, %v1004
  %v1006 = vpop.f32.mrf.mxu0
  %v1007 = vpop.f32.mrf.mxu0
  %v1008 = vadd.f32 %v863, %v1007
  %v1009 = vpop.f32.mrf.mxu0
  %1010 = vmatprep.mubr.bf16.mxu0 %v436
  %1011 = vmatmul.mubr.bf16.gmra.mxu0 %v435
  %v1012 = vpop.f32.mrf.mxu0
  %v1013 = vadd.f32 %v868, %v1012
  %v1014 = vpop.f32.mrf.mxu0
  %v1015 = vpop.f32.mrf.mxu0
  %v1016 = vadd.f32 %v871, %v1015
  %v1017 = vpop.f32.mrf.mxu0
  %1018 = vmatprep.mubr.bf16.mxu0 %v441
  %1019 = vmatmul.mubr.bf16.gmra.mxu0 %v440
  %v1020 = vpop.f32.mrf.mxu0
  %v1021 = vadd.f32 %v876, %v1020
  %v1022 = vpop.f32.mrf.mxu0
  %v1023 = vpop.f32.mrf.mxu0
  %v1024 = vadd.f32 %v879, %v1023
  %v1025 = vpop.f32.mrf.mxu0
  %1026 = vmatprep.mubr.bf16.mxu0 %v446
  %1027 = vmatmul.mubr.bf16.gmra.mxu0 %v445
  %v1028 = vpop.f32.mrf.mxu0
  %v1029 = vadd.f32 %v884, %v1028
  %v1030 = vpop.f32.mrf.mxu0
  %v1031 = vpop.f32.mrf.mxu0
  %v1032 = vadd.f32 %v887, %v1031
  %v1033 = vpop.f32.mrf.mxu0
  %1034 = vmatprep.mubr.bf16.mxu0 %v451
  %1035 = vmatmul.mubr.bf16.gmra.mxu0 %v450
  %v1036 = vpop.f32.mrf.mxu0
  %v1037 = vadd.f32 %v892, %v1036
  %v1038 = vpop.f32.mrf.mxu0
  %v1039 = vpop.f32.mrf.mxu0
  %v1040 = vadd.f32 %v895, %v1039
  %v1041 = vpop.f32.mrf.mxu0
  %1042 = vmatprep.mubr.bf16.mxu0 %v456
  %1043 = vmatmul.mubr.bf16.gmra.mxu0 %v455
  %v1044 = vpop.f32.mrf.mxu0
  %v1045 = vadd.f32 %v900, %v1044
  %v1046 = vpop.f32.mrf.mxu0
  %v1047 = vpop.f32.mrf.mxu0
  %v1048 = vadd.f32 %v903, %v1047
  %v1049 = vpop.f32.mrf.mxu0
  %1050 = vmatprep.mubr.bf16.mxu0 %v461
  %1051 = vmatmul.mubr.bf16.gmra.mxu0 %v460
  %v1052 = vpop.f32.mrf.mxu0
  %v1053 = vadd.f32 %v908, %v1052
  %v1054 = vpop.f32.mrf.mxu0
  %v1055 = vpop.f32.mrf.mxu0
  %v1056 = vadd.f32 %v911, %v1055
  %v1057 = vpop.f32.mrf.mxu0
  %1058 = vmatprep.mubr.bf16.mxu0 %v466
  %1059 = vmatmul.mubr.bf16.gmra.mxu0 %v465
  %v1060 = vpop.f32.mrf.mxu0
  %v1061 = vadd.f32 %v916, %v1060
  %v1062 = vpop.f32.mrf.mxu0
  %v1063 = vpop.f32.mrf.mxu0
  %v1064 = vadd.f32 %v919, %v1063
  %v1065 = vpop.f32.mrf.mxu0
  %1066 = vmatprep.mubr.bf16.mxu0 %v471
  %1067 = vmatmul.mubr.bf16.gmra.mxu0 %v470
  %v1068 = vpop.f32.mrf.mxu0
  %v1069 = vadd.f32 %v924, %v1068
  %v1070 = vpop.f32.mrf.mxu0
  %v1071 = vpop.f32.mrf.mxu0
  %v1072 = vadd.f32 %v927, %v1071
  %v1073 = vpop.f32.mrf.mxu0
  %1074 = vmatprep.mubr.bf16.mxu0 %v476
  %1075 = vmatmul.mubr.bf16.gmra.mxu0 %v475
  %v1076 = vpop.f32.mrf.mxu0
  %v1077 = vadd.f32 %v932, %v1076
  %v1078 = vpop.f32.mrf.mxu0
  %v1079 = vpop.f32.mrf.mxu0
  %v1080 = vadd.f32 %v935, %v1079
  %v1081 = vpop.f32.mrf.mxu0
  %1082 = vdwg.mxu0
  %1083 = vmatprep.subr.bf16.mxu0 0
  %1084 = vmatpush1.bf16.msra.mxu0 0
  %1085 = vmatprep.subr.bf16.mxu0 0
  %1086 = vmatpush1.bf16.msra.mxu0 0
  %1087 = vmatprep.subr.bf16.mxu0 0
  %1088 = vmatpush1.bf16.msra.mxu0 0
  %1089 = vmatprep.subr.bf16.mxu0 0
  %1090 = vmatpush1.bf16.msra.mxu0 0
  %1091 = vmatprep.subr.bf16.mxu0 0
  %1092 = vmatpush1.bf16.msra.mxu0 %v713
  %1093 = vmatprep.subr.bf16.mxu0 0
  %1094 = vmatpush1.bf16.msra.mxu0 %v712
  %1095 = vmatprep.subr.bf16.mxu0 0
  %1096 = vmatpush1.bf16.msra.mxu0 %v711
  %1097 = vmatprep.subr.bf16.mxu0 0
  %1098 = vmatpush1.bf16.msra.mxu0 %v710
  %1099 = vmatprep.subr.bf16.mxu0 0
  %1100 = vmatpush2.bf16.msra.mxu0 0
  %1101 = vmatprep.subr.bf16.mxu0 0
  %1102 = vmatpush2.bf16.msra.mxu0 0
  %1103 = vmatprep.subr.bf16.mxu0 0
  %1104 = vmatpush2.bf16.msra.mxu0 0
  %1105 = vmatprep.subr.bf16.mxu0 0
  %1106 = vmatpush2.bf16.msra.mxu0 0
  %1107 = vmatprep.subr.bf16.mxu0 0
  %1108 = vmatpush2.bf16.msra.mxu0 0
  %1109 = vmatprep.subr.bf16.mxu0 0
  %1110 = vmatpush2.bf16.msra.mxu0 0
  %1111 = vmatprep.subr.bf16.mxu0 0
  %1112 = vmatpush2.bf16.msra.mxu0 0
  %1113 = vmatprep.subr.bf16.mxu0 0
  %1114 = vmatpush2.bf16.msra.mxu0 0
  %1115 = vmatprep.mubr.bf16.mxu0 0
  %1116 = vmatmul.mubr.bf16.gmra.mxu0 %v752
  %v1117 = vpop.f32.mrf.mxu0
  %v1118 = vadd.f32 %v973, %v1117
  %v1119 = vpop.f32.mrf.mxu0
  %v1120 = vpop.f32.mrf.mxu0
  %v1121 = vadd.f32 %v976, %v1120
  %v1122 = vpop.f32.mrf.mxu0
  %1123 = vmatprep.mubr.bf16.mxu0 0
  %1124 = vmatmul.mubr.bf16.gmra.mxu0 %v755
  %v1125 = vpop.f32.mrf.mxu0
  %v1126 = vadd.f32 %v981, %v1125
  %v1127 = vpop.f32.mrf.mxu0
  %v1128 = vpop.f32.mrf.mxu0
  %v1129 = vadd.f32 %v984, %v1128
  %v1130 = vpop.f32.mrf.mxu0
  %1131 = vmatprep.mubr.bf16.mxu0 0
  %1132 = vmatmul.mubr.bf16.gmra.mxu0 %v758
  %v1133 = vpop.f32.mrf.mxu0
  %v1134 = vadd.f32 %v989, %v1133
  %v1135 = vpop.f32.mrf.mxu0
  %v1136 = vpop.f32.mrf.mxu0
  %v1137 = vadd.f32 %v992, %v1136
  %v1138 = vpop.f32.mrf.mxu0
  %1139 = vmatprep.mubr.bf16.mxu0 0
  %1140 = vmatmul.mubr.bf16.gmra.mxu0 %v761
  %v1141 = vpop.f32.mrf.mxu0
  %v1142 = vadd.f32 %v997, %v1141
  %v1143 = vpop.f32.mrf.mxu0
  %v1144 = vpop.f32.mrf.mxu0
  %v1145 = vadd.f32 %v1000, %v1144
  %v1146 = vpop.f32.mrf.mxu0
  %1147 = vmatprep.mubr.bf16.mxu0 0
  %1148 = vmatmul.mubr.bf16.gmra.mxu0 %v764
  %v1149 = vpop.f32.mrf.mxu0
  %v1150 = vadd.f32 %v1005, %v1149
  %v1151 = vpop.f32.mrf.mxu0
  %v1152 = vpop.f32.mrf.mxu0
  %v1153 = vadd.f32 %v1008, %v1152
  %v1154 = vpop.f32.mrf.mxu0
  %1155 = vmatprep.mubr.bf16.mxu0 0
  %1156 = vmatmul.mubr.bf16.gmra.mxu0 %v767
  %v1157 = vpop.f32.mrf.mxu0
  %v1158 = vadd.f32 %v1013, %v1157
  %v1159 = vpop.f32.mrf.mxu0
  %v1160 = vpop.f32.mrf.mxu0
  %v1161 = vadd.f32 %v1016, %v1160
  %v1162 = vpop.f32.mrf.mxu0
  %1163 = vmatprep.mubr.bf16.mxu0 0
  %1164 = vmatmul.mubr.bf16.gmra.mxu0 %v770
  %v1165 = vpop.f32.mrf.mxu0
  %v1166 = vadd.f32 %v1021, %v1165
  %v1167 = vpop.f32.mrf.mxu0
  %v1168 = vpop.f32.mrf.mxu0
  %v1169 = vadd.f32 %v1024, %v1168
  %v1170 = vpop.f32.mrf.mxu0
  %1171 = vmatprep.mubr.bf16.mxu0 0
  %1172 = vmatmul.mubr.bf16.gmra.mxu0 %v773
  %v1173 = vpop.f32.mrf.mxu0
  %v1174 = vadd.f32 %v1029, %v1173
  %v1175 = vpop.f32.mrf.mxu0
  %v1176 = vpop.f32.mrf.mxu0
  %v1177 = vadd.f32 %v1032, %v1176
  %v1178 = vpop.f32.mrf.mxu0
  %1179 = vmatprep.mubr.bf16.mxu0 0
  %1180 = vmatmul.mubr.bf16.gmra.mxu0 %v776
  %v1181 = vpop.f32.mrf.mxu0
  %v1182 = vadd.f32 %v1037, %v1181
  %v1183 = vpop.f32.mrf.mxu0
  %v1184 = vpop.f32.mrf.mxu0
  %v1185 = vadd.f32 %v1040, %v1184
  %v1186 = vpop.f32.mrf.mxu0
  %1187 = vmatprep.mubr.bf16.mxu0 0
  %1188 = vmatmul.mubr.bf16.gmra.mxu0 %v779
  %v1189 = vpop.f32.mrf.mxu0
  %v1190 = vadd.f32 %v1045, %v1189
  %v1191 = vpop.f32.mrf.mxu0
  %v1192 = vpop.f32.mrf.mxu0
  %v1193 = vadd.f32 %v1048, %v1192
  %v1194 = vpop.f32.mrf.mxu0
  %1195 = vmatprep.mubr.bf16.mxu0 0
  %1196 = vmatmul.mubr.bf16.gmra.mxu0 %v782
  %v1197 = vpop.f32.mrf.mxu0
  %v1198 = vadd.f32 %v1053, %v1197
  %v1199 = vpop.f32.mrf.mxu0
  %v1200 = vpop.f32.mrf.mxu0
  %v1201 = vadd.f32 %v1056, %v1200
  %v1202 = vpop.f32.mrf.mxu0
  %1203 = vmatprep.mubr.bf16.mxu0 0
  %1204 = vmatmul.mubr.bf16.gmra.mxu0 %v785
  %v1205 = vpop.f32.mrf.mxu0
  %v1206 = vadd.f32 %v1061, %v1205
  %v1207 = vpop.f32.mrf.mxu0
  %v1208 = vpop.f32.mrf.mxu0
  %v1209 = vadd.f32 %v1064, %v1208
  %v1210 = vpop.f32.mrf.mxu0
  %1211 = vmatprep.mubr.bf16.mxu0 0
  %1212 = vmatmul.mubr.bf16.gmra.mxu0 %v788
  %v1213 = vpop.f32.mrf.mxu0
  %v1214 = vadd.f32 %v1069, %v1213
  %v1215 = vpop.f32.mrf.mxu0
  %v1216 = vpop.f32.mrf.mxu0
  %v1217 = vadd.f32 %v1072, %v1216
  %v1218 = vpop.f32.mrf.mxu0
  %1219 = vmatprep.mubr.bf16.mxu0 0
  %1220 = vmatmul.mubr.bf16.gmra.mxu0 %v791
  %v1221 = vpop.f32.mrf.mxu0
  %v1222 = vadd.f32 %v1077, %v1221
  %v1223 = vpop.f32.mrf.mxu0
  %v1224 = vpop.f32.mrf.mxu0
  %v1225 = vadd.f32 %v1080, %v1224
  %v1226 = vpop.f32.mrf.mxu0
  %1227 = vdwg.mxu0
  %v1228 = vmax.f32 %v1118, 0.0
  %v1229 = vmax.f32 %v1121, 0.0
  %v1230 = vmax.f32 %v1126, 0.0
  %v1231 = vmax.f32 %v1129, 0.0
  %v1232 = vmax.f32 %v1134, 0.0
  %v1233 = vmax.f32 %v1137, 0.0
  %v1234 = vmax.f32 %v1142, 0.0
  %v1235 = vmax.f32 %v1145, 0.0
  %v1236 = vmax.f32 %v1150, 0.0
  %v1237 = vmax.f32 %v1153, 0.0
  %v1238 = vmax.f32 %v1158, 0.0
  %v1239 = vmax.f32 %v1161, 0.0
  %v1240 = vmax.f32 %v1166, 0.0
  %v1241 = vmax.f32 %v1169, 0.0
  %v1242 = vmax.f32 %v1174, 0.0
  %v1243 = vmax.f32 %v1177, 0.0
  %v1244 = vmax.f32 %v1182, 0.0
  %v1245 = vmax.f32 %v1185, 0.0
  %v1246 = vmax.f32 %v1190, 0.0
  %v1247 = vmax.f32 %v1193, 0.0
  %v1248 = vmax.f32 %v1198, 0.0
  %v1249 = vmax.f32 %v1201, 0.0
  %v1250 = vmax.f32 %v1206, 0.0
  %v1251 = vmax.f32 %v1209, 0.0
  %v1252 = vmax.f32 %v1214, 0.0
  %v1253 = vmax.f32 %v1217, 0.0
  %v1254 = vmax.f32 %v1222, 0.0
  %v1255 = vmax.f32 %v1225, 0.0
  %v1256 = vpack.c.bf16 %v1229, %v1228
  %v1257 = vpack.c.bf16 %v1231, %v1230
  %v1258 = vpack.c.bf16 %v1233, %v1232
  %v1259 = vpack.c.bf16 %v1235, %v1234
  %v1260 = vpack.c.bf16 %v1237, %v1236
  %v1261 = vpack.c.bf16 %v1239, %v1238
  %v1262 = vpack.c.bf16 %v1241, %v1240
  %v1263 = vpack.c.bf16 %v1243, %v1242
  %v1264 = vpack.c.bf16 %v1245, %v1244
  %v1265 = vpack.c.bf16 %v1247, %v1246
  %v1266 = vpack.c.bf16 %v1249, %v1248
  %v1267 = vpack.c.bf16 %v1251, %v1250
  %v1268 = vpack.c.bf16 %v1253, %v1252
  %v1269 = vpack.c.bf16 %v1255, %v1254
  %v1270 = vld [vmem:[%s3] sm:$0xf]
  %v1271 = vld [vmem:[%s3 + $0x4] sm:$0xf]
  %v1272 = vld [vmem:[%s3 + $0x8] sm:$0xf]
  %v1273 = vld [vmem:[%s3 + $0xc] sm:$0xf]
  %v1274 = vld [vmem:[%s3 + $0x10] sm:$0xf]
  %v1275 = vld [vmem:[%s3 + $0x14] sm:$0xf]
  %v1276 = vld [vmem:[%s3 + $0x18] sm:$0xf]
  %v1277 = vld [vmem:[%s3 + $0x1c] sm:$0xf]
  %v1278 = vld [vmem:[%s3 + $0x20] sm:$0xf]
  %v1279 = vld [vmem:[%s3 + $0x24] sm:$0xf]
  %v1280 = vld [vmem:[%s3 + $0x28] sm:$0xf]
  %v1281 = vld [vmem:[%s3 + $0x2c] sm:$0xf]
  %v1282 = vld [vmem:[%s3 + $0x30] sm:$0xf]
  %v1283 = vld [vmem:[%s3 + $0x34] sm:$0xf]
  %v1284 = vld [vmem:[%s3 + $0x38] sm:$0xf]
  %v1285 = vld [vmem:[%s3 + $0x3c] sm:$0xf]
  %v1286 = vld [vmem:[%s3 + $0x40] sm:$0xf]
  %v1287 = vld [vmem:[%s3 + $0x44] sm:$0xf]
  %v1288 = vld [vmem:[%s3 + $0x48] sm:$0xf]
  %v1289 = vld [vmem:[%s3 + $0x4c] sm:$0xf]
  %v1290 = vld [vmem:[%s3 + $0x50] sm:$0xf]
  %v1291 = vld [vmem:[%s3 + $0x54] sm:$0xf]
  %v1292 = vld [vmem:[%s3 + $0x58] sm:$0xf]
  %v1293 = vld [vmem:[%s3 + $0x5c] sm:$0xf]
  %v1294 = vld [vmem:[%s3 + $0x60] sm:$0xf]
  %v1295 = vld [vmem:[%s3 + $0x64] sm:$0xf]
  %v1296 = vld [vmem:[%s3 + $0x68] sm:$0xf]
  %v1297 = vld [vmem:[%s3 + $0x6c] sm:$0xf]
  %v1298 = vld [vmem:[%s3 + $0x70] sm:$0xf]
  %v1299 = vld [vmem:[%s3 + $0x74] sm:$0xf]
  %v1300 = vld [vmem:[%s3 + $0x78] sm:$0xf]
  %v1301 = vld [vmem:[%s3 + $0x7c] sm:$0xf]
  %v1302 = vld [vmem:[%s4] sm:$0x1]
  %vm1303 = vsmask.f32 7424
  %v1305 = vshrl.u32 %v1256, 16
  %v1307 = vshll.u32 %v1256, 16
  %v1309 = vrot.slane %v1307, 1
  %v1310 = vor.u32 %v1305, %v1309
  %v1312 = vshll.u32 %v1257, 16
  %v1314 = vrot.slane %v1312, 1
  %v1315 = vsel %vm1303, %v1310, %v1314
  %v1316 = vshrl.u32 %v1257, 16
  %v1318 = vor.u32 %v1316, %v1314
  %v1320 = vshll.u32 %v1258, 16
  %v1322 = vrot.slane %v1320, 1
  %v1323 = vsel %vm1303, %v1318, %v1322
  %v1324 = vshrl.u32 %v1258, 16
  %v1326 = vor.u32 %v1324, %v1322
  %v1328 = vshll.u32 %v1259, 16
  %v1330 = vrot.slane %v1328, 1
  %v1331 = vsel %vm1303, %v1326, %v1330
  %v1332 = vshrl.u32 %v1259, 16
  %v1334 = vor.u32 %v1332, %v1330
  %v1336 = vshll.u32 %v1260, 16
  %v1338 = vrot.slane %v1336, 1
  %v1339 = vsel %vm1303, %v1334, %v1338
  %v1340 = vshrl.u32 %v1260, 16
  %v1342 = vor.u32 %v1340, %v1338
  %v1344 = vshll.u32 %v1261, 16
  %v1346 = vrot.slane %v1344, 1
  %v1347 = vsel %vm1303, %v1342, %v1346
  %v1348 = vshrl.u32 %v1261, 16
  %v1350 = vor.u32 %v1348, %v1346
  %v1352 = vshll.u32 %v1262, 16
  %v1354 = vrot.slane %v1352, 1
  %v1355 = vsel %vm1303, %v1350, %v1354
  %v1364 = vunpack.c.l.b16 %v1278
  %v1365 = vunpack.c.l.b16 %v1279
  %v1366 = vunpack.c.l.b16 %v1280
  %v1367 = vunpack.c.l.b16 %v1281
  %v1368 = vunpack.c.l.b16 %v1282
  %v1369 = vunpack.c.l.b16 %v1283
  %v1370 = vunpack.c.l.b16 %v1284
  %v1371 = vunpack.c.l.b16 %v1285
  %v1372 = vpack.c.b16 %v1365, %v1364
  %v1373 = vpack.c.b16 %v1367, %v1366
  %v1374 = vpack.c.b16 %v1369, %v1368
  %v1375 = vpack.c.b16 %v1371, %v1370
  %v1381 = vsel %vm750, %v1315, 0
  %v1384 = vsel %vm750, %v1323, 0
  %v1387 = vsel %vm750, %v1331, 0
  %v1390 = vsel %vm750, %v1339, 0
  %v1393 = vsel %vm750, %v1347, 0
  %v1396 = vsel %vm750, %v1355, 0
  %1398 = vmatprep.subr.bf16.mxu0 0
  %1399 = vmatpush1.bf16.msra.mxu0 0
  %1400 = vmatprep.subr.bf16.mxu0 0
  %1401 = vmatpush1.bf16.msra.mxu0 0
  %1402 = vmatprep.subr.bf16.mxu0 0
  %1403 = vmatpush1.bf16.msra.mxu0 0
  %1404 = vmatprep.subr.bf16.mxu0 0
  %1405 = vmatpush1.bf16.msra.mxu0 0
  %1406 = vmatprep.subr.bf16.mxu0 0
  %1407 = vmatpush1.bf16.msra.mxu0 %v1375
  %1408 = vmatprep.subr.bf16.mxu0 0
  %1409 = vmatpush1.bf16.msra.mxu0 %v1374
  %1410 = vmatprep.subr.bf16.mxu0 0
  %1411 = vmatpush1.bf16.msra.mxu0 %v1373
  %1412 = vmatprep.subr.bf16.mxu0 0
  %1413 = vmatpush1.bf16.msra.mxu0 %v1372
  %1414 = vmatprep.subr.bf16.mxu0 0
  %1415 = vmatpush2.bf16.msra.mxu0 0
  %1416 = vmatprep.subr.bf16.mxu0 0
  %1417 = vmatpush2.bf16.msra.mxu0 0
  %1418 = vmatprep.subr.bf16.mxu0 0
  %1419 = vmatpush2.bf16.msra.mxu0 0
  %1420 = vmatprep.subr.bf16.mxu0 0
  %1421 = vmatpush2.bf16.msra.mxu0 0
  %1422 = vmatprep.subr.bf16.mxu0 0
  %1423 = vmatpush2.bf16.msra.mxu0 0
  %1424 = vmatprep.subr.bf16.mxu0 0
  %1425 = vmatpush2.bf16.msra.mxu0 0
  %1426 = vmatprep.subr.bf16.mxu0 0
  %1427 = vmatpush2.bf16.msra.mxu0 0
  %1428 = vmatprep.subr.bf16.mxu0 0
  %1429 = vmatpush2.bf16.msra.mxu0 0
  %1430 = vmatprep.mubr.bf16.mxu0 0
  %1431 = vmatmul.mubr.bf16.gmra.mxu0 %v1381
  %v1432 = vpop.f32.mrf.mxu0
  %v1433 = vadd.f32 0.0, %v1432
  %v1434 = vpop.f32.mrf.mxu0
  %v1435 = vpop.f32.mrf.mxu0
  %v1436 = vadd.f32 0.0, %v1435
  %v1437 = vpop.f32.mrf.mxu0
  %1438 = vmatprep.mubr.bf16.mxu0 0
  %1439 = vmatmul.mubr.bf16.gmra.mxu0 %v1384
  %v1440 = vpop.f32.mrf.mxu0
  %v1441 = vadd.f32 0.0, %v1440
  %v1442 = vpop.f32.mrf.mxu0
  %v1443 = vpop.f32.mrf.mxu0
  %v1444 = vadd.f32 0.0, %v1443
  %v1445 = vpop.f32.mrf.mxu0
  %1446 = vmatprep.mubr.bf16.mxu0 0
  %1447 = vmatmul.mubr.bf16.gmra.mxu0 %v1387
  %v1448 = vpop.f32.mrf.mxu0
  %v1449 = vadd.f32 0.0, %v1448
  %v1450 = vpop.f32.mrf.mxu0
  %v1451 = vpop.f32.mrf.mxu0
  %v1452 = vadd.f32 0.0, %v1451
  %v1453 = vpop.f32.mrf.mxu0
  %1454 = vmatprep.mubr.bf16.mxu0 0
  %1455 = vmatmul.mubr.bf16.gmra.mxu0 %v1390
  %v1456 = vpop.f32.mrf.mxu0
  %v1457 = vadd.f32 0.0, %v1456
  %v1458 = vpop.f32.mrf.mxu0
  %v1459 = vpop.f32.mrf.mxu0
  %v1460 = vadd.f32 0.0, %v1459
  %v1461 = vpop.f32.mrf.mxu0
  %1462 = vmatprep.mubr.bf16.mxu0 0
  %1463 = vmatmul.mubr.bf16.gmra.mxu0 %v1393
  %v1464 = vpop.f32.mrf.mxu0
  %v1465 = vadd.f32 0.0, %v1464
  %v1466 = vpop.f32.mrf.mxu0
  %v1467 = vpop.f32.mrf.mxu0
  %v1468 = vadd.f32 0.0, %v1467
  %v1469 = vpop.f32.mrf.mxu0
  %1470 = vmatprep.mubr.bf16.mxu0 0
  %1471 = vmatmul.mubr.bf16.gmra.mxu0 %v1396
  %v1472 = vpop.f32.mrf.mxu0
  %v1473 = vadd.f32 0.0, %v1472
  %v1474 = vpop.f32.mrf.mxu0
  %v1475 = vpop.f32.mrf.mxu0
  %v1476 = vadd.f32 0.0, %v1475
  %v1477 = vpop.f32.mrf.mxu0
  %1478 = vdwg.mxu0
  %v1487 = vunpack.c.l.b16 %v1270
  %v1488 = vunpack.c.l.b16 %v1271
  %v1489 = vunpack.c.l.b16 %v1272
  %v1490 = vunpack.c.l.b16 %v1273
  %v1491 = vunpack.c.l.b16 %v1274
  %v1492 = vunpack.c.l.b16 %v1275
  %v1493 = vunpack.c.l.b16 %v1276
  %v1494 = vunpack.c.l.b16 %v1277
  %v1495 = vpack.c.b16 %v1488, %v1487
  %v1496 = vpack.c.b16 %v1490, %v1489
  %v1497 = vpack.c.b16 %v1492, %v1491
  %v1498 = vpack.c.b16 %v1494, %v1493
  %v1503 = vsel %vm750, %v1256, 0
  %v1505 = vsel %vm750, %v1257, 0
  %v1507 = vsel %vm750, %v1258, 0
  %v1509 = vsel %vm750, %v1259, 0
  %v1511 = vsel %vm750, %v1260, 0
  %v1513 = vsel %vm750, %v1261, 0
  %1515 = vmatprep.subr.bf16.mxu0 0
  %1516 = vmatpush1.bf16.msra.mxu0 0
  %1517 = vmatprep.subr.bf16.mxu0 0
  %1518 = vmatpush1.bf16.msra.mxu0 0
  %1519 = vmatprep.subr.bf16.mxu0 0
  %1520 = vmatpush1.bf16.msra.mxu0 0
  %1521 = vmatprep.subr.bf16.mxu0 0
  %1522 = vmatpush1.bf16.msra.mxu0 0
  %1523 = vmatprep.subr.bf16.mxu0 0
  %1524 = vmatpush1.bf16.msra.mxu0 %v1498
  %1525 = vmatprep.subr.bf16.mxu0 0
  %1526 = vmatpush1.bf16.msra.mxu0 %v1497
  %1527 = vmatprep.subr.bf16.mxu0 0
  %1528 = vmatpush1.bf16.msra.mxu0 %v1496
  %1529 = vmatprep.subr.bf16.mxu0 0
  %1530 = vmatpush1.bf16.msra.mxu0 %v1495
  %1531 = vmatprep.subr.bf16.mxu0 0
  %1532 = vmatpush2.bf16.msra.mxu0 0
  %1533 = vmatprep.subr.bf16.mxu0 0
  %1534 = vmatpush2.bf16.msra.mxu0 0
  %1535 = vmatprep.subr.bf16.mxu0 0
  %1536 = vmatpush2.bf16.msra.mxu0 0
  %1537 = vmatprep.subr.bf16.mxu0 0
  %1538 = vmatpush2.bf16.msra.mxu0 0
  %1539 = vmatprep.subr.bf16.mxu0 0
  %1540 = vmatpush2.bf16.msra.mxu0 0
  %1541 = vmatprep.subr.bf16.mxu0 0
  %1542 = vmatpush2.bf16.msra.mxu0 0
  %1543 = vmatprep.subr.bf16.mxu0 0
  %1544 = vmatpush2.bf16.msra.mxu0 0
  %1545 = vmatprep.subr.bf16.mxu0 0
  %1546 = vmatpush2.bf16.msra.mxu0 0
  %1547 = vmatprep.mubr.bf16.mxu0 0
  %1548 = vmatmul.mubr.bf16.gmra.mxu0 %v1503
  %v1549 = vpop.f32.mrf.mxu0
  %v1550 = vadd.f32 %v1433, %v1549
  %v1551 = vpop.f32.mrf.mxu0
  %v1552 = vpop.f32.mrf.mxu0
  %v1553 = vadd.f32 %v1436, %v1552
  %v1554 = vpop.f32.mrf.mxu0
  %1555 = vmatprep.mubr.bf16.mxu0 0
  %1556 = vmatmul.mubr.bf16.gmra.mxu0 %v1505
  %v1557 = vpop.f32.mrf.mxu0
  %v1558 = vadd.f32 %v1441, %v1557
  %v1559 = vpop.f32.mrf.mxu0
  %v1560 = vpop.f32.mrf.mxu0
  %v1561 = vadd.f32 %v1444, %v1560
  %v1562 = vpop.f32.mrf.mxu0
  %1563 = vmatprep.mubr.bf16.mxu0 0
  %1564 = vmatmul.mubr.bf16.gmra.mxu0 %v1507
  %v1565 = vpop.f32.mrf.mxu0
  %v1566 = vadd.f32 %v1449, %v1565
  %v1567 = vpop.f32.mrf.mxu0
  %v1568 = vpop.f32.mrf.mxu0
  %v1569 = vadd.f32 %v1452, %v1568
  %v1570 = vpop.f32.mrf.mxu0
  %1571 = vmatprep.mubr.bf16.mxu0 0
  %1572 = vmatmul.mubr.bf16.gmra.mxu0 %v1509
  %v1573 = vpop.f32.mrf.mxu0
  %v1574 = vadd.f32 %v1457, %v1573
  %v1575 = vpop.f32.mrf.mxu0
  %v1576 = vpop.f32.mrf.mxu0
  %v1577 = vadd.f32 %v1460, %v1576
  %v1578 = vpop.f32.mrf.mxu0
  %1579 = vmatprep.mubr.bf16.mxu0 0
  %1580 = vmatmul.mubr.bf16.gmra.mxu0 %v1511
  %v1581 = vpop.f32.mrf.mxu0
  %v1582 = vadd.f32 %v1465, %v1581
  %v1583 = vpop.f32.mrf.mxu0
  %v1584 = vpop.f32.mrf.mxu0
  %v1585 = vadd.f32 %v1468, %v1584
  %v1586 = vpop.f32.mrf.mxu0
  %1587 = vmatprep.mubr.bf16.mxu0 0
  %1588 = vmatmul.mubr.bf16.gmra.mxu0 %v1513
  %v1589 = vpop.f32.mrf.mxu0
  %v1590 = vadd.f32 %v1473, %v1589
  %v1591 = vpop.f32.mrf.mxu0
  %v1592 = vpop.f32.mrf.mxu0
  %v1593 = vadd.f32 %v1476, %v1592
  %v1594 = vpop.f32.mrf.mxu0
  %1595 = vdwg.mxu0
  %vm1603 = vcmask 1042432
  %v1604 = vrot.slane %v1256, 5
  %v1605 = vrot.slane %v1257, 5
  %v1606 = vsel %vm1603, %v1604, %v1605
  %v1607 = vrot.slane %v1258, 5
  %v1608 = vsel %vm1603, %v1605, %v1607
  %v1609 = vrot.slane %v1259, 5
  %v1610 = vsel %vm1603, %v1607, %v1609
  %v1611 = vrot.slane %v1260, 5
  %v1612 = vsel %vm1603, %v1609, %v1611
  %v1613 = vrot.slane %v1261, 5
  %v1614 = vsel %vm1603, %v1611, %v1613
  %v1615 = vrot.slane %v1262, 5
  %v1616 = vsel %vm1603, %v1613, %v1615
  %v1625 = vunpack.c.l.b16 %v1286
  %v1626 = vunpack.c.l.b16 %v1287
  %v1627 = vunpack.c.l.b16 %v1288
  %v1628 = vunpack.c.l.b16 %v1289
  %v1629 = vunpack.c.l.b16 %v1290
  %v1630 = vunpack.c.l.b16 %v1291
  %v1631 = vunpack.c.l.b16 %v1292
  %v1632 = vunpack.c.l.b16 %v1293
  %v1633 = vpack.c.b16 %v1626, %v1625
  %v1634 = vpack.c.b16 %v1628, %v1627
  %v1635 = vpack.c.b16 %v1630, %v1629
  %v1636 = vpack.c.b16 %v1632, %v1631
  %v1642 = vsel %vm750, %v1606, 0
  %v1645 = vsel %vm750, %v1608, 0
  %v1648 = vsel %vm750, %v1610, 0
  %v1651 = vsel %vm750, %v1612, 0
  %v1654 = vsel %vm750, %v1614, 0
  %v1657 = vsel %vm750, %v1616, 0
  %1659 = vmatprep.subr.bf16.mxu0 0
  %1660 = vmatpush1.bf16.msra.mxu0 0
  %1661 = vmatprep.subr.bf16.mxu0 0
  %1662 = vmatpush1.bf16.msra.mxu0 0
  %1663 = vmatprep.subr.bf16.mxu0 0
  %1664 = vmatpush1.bf16.msra.mxu0 0
  %1665 = vmatprep.subr.bf16.mxu0 0
  %1666 = vmatpush1.bf16.msra.mxu0 0
  %1667 = vmatprep.subr.bf16.mxu0 0
  %1668 = vmatpush1.bf16.msra.mxu0 %v1636
  %1669 = vmatprep.subr.bf16.mxu0 0
  %1670 = vmatpush1.bf16.msra.mxu0 %v1635
  %1671 = vmatprep.subr.bf16.mxu0 0
  %1672 = vmatpush1.bf16.msra.mxu0 %v1634
  %1673 = vmatprep.subr.bf16.mxu0 0
  %1674 = vmatpush1.bf16.msra.mxu0 %v1633
  %1675 = vmatprep.subr.bf16.mxu0 0
  %1676 = vmatpush2.bf16.msra.mxu0 0
  %1677 = vmatprep.subr.bf16.mxu0 0
  %1678 = vmatpush2.bf16.msra.mxu0 0
  %1679 = vmatprep.subr.bf16.mxu0 0
  %1680 = vmatpush2.bf16.msra.mxu0 0
  %1681 = vmatprep.subr.bf16.mxu0 0
  %1682 = vmatpush2.bf16.msra.mxu0 0
  %1683 = vmatprep.subr.bf16.mxu0 0
  %1684 = vmatpush2.bf16.msra.mxu0 0
  %1685 = vmatprep.subr.bf16.mxu0 0
  %1686 = vmatpush2.bf16.msra.mxu0 0
  %1687 = vmatprep.subr.bf16.mxu0 0
  %1688 = vmatpush2.bf16.msra.mxu0 0
  %1689 = vmatprep.subr.bf16.mxu0 0
  %1690 = vmatpush2.bf16.msra.mxu0 0
  %1691 = vmatprep.mubr.bf16.mxu0 0
  %1692 = vmatmul.mubr.bf16.gmra.mxu0 %v1642
  %v1693 = vpop.f32.mrf.mxu0
  %v1694 = vadd.f32 0.0, %v1693
  %v1695 = vpop.f32.mrf.mxu0
  %v1696 = vpop.f32.mrf.mxu0
  %v1697 = vadd.f32 0.0, %v1696
  %v1698 = vpop.f32.mrf.mxu0
  %1699 = vmatprep.mubr.bf16.mxu0 0
  %1700 = vmatmul.mubr.bf16.gmra.mxu0 %v1645
  %v1701 = vpop.f32.mrf.mxu0
  %v1702 = vadd.f32 0.0, %v1701
  %v1703 = vpop.f32.mrf.mxu0
  %v1704 = vpop.f32.mrf.mxu0
  %v1705 = vadd.f32 0.0, %v1704
  %v1706 = vpop.f32.mrf.mxu0
  %1707 = vmatprep.mubr.bf16.mxu0 0
  %1708 = vmatmul.mubr.bf16.gmra.mxu0 %v1648
  %v1709 = vpop.f32.mrf.mxu0
  %v1710 = vadd.f32 0.0, %v1709
  %v1711 = vpop.f32.mrf.mxu0
  %v1712 = vpop.f32.mrf.mxu0
  %v1713 = vadd.f32 0.0, %v1712
  %v1714 = vpop.f32.mrf.mxu0
  %1715 = vmatprep.mubr.bf16.mxu0 0
  %1716 = vmatmul.mubr.bf16.gmra.mxu0 %v1651
  %v1717 = vpop.f32.mrf.mxu0
  %v1718 = vadd.f32 0.0, %v1717
  %v1719 = vpop.f32.mrf.mxu0
  %v1720 = vpop.f32.mrf.mxu0
  %v1721 = vadd.f32 0.0, %v1720
  %v1722 = vpop.f32.mrf.mxu0
  %1723 = vmatprep.mubr.bf16.mxu0 0
  %1724 = vmatmul.mubr.bf16.gmra.mxu0 %v1654
  %v1725 = vpop.f32.mrf.mxu0
  %v1726 = vadd.f32 0.0, %v1725
  %v1727 = vpop.f32.mrf.mxu0
  %v1728 = vpop.f32.mrf.mxu0
  %v1729 = vadd.f32 0.0, %v1728
  %v1730 = vpop.f32.mrf.mxu0
  %1731 = vmatprep.mubr.bf16.mxu0 0
  %1732 = vmatmul.mubr.bf16.gmra.mxu0 %v1657
  %v1733 = vpop.f32.mrf.mxu0
  %v1734 = vadd.f32 0.0, %v1733
  %v1735 = vpop.f32.mrf.mxu0
  %v1736 = vpop.f32.mrf.mxu0
  %v1737 = vadd.f32 0.0, %v1736
  %v1738 = vpop.f32.mrf.mxu0
  %1739 = vdwg.mxu0
  %v1740 = vadd.f32 %v1550, %v1694
  %v1741 = vadd.f32 %v1553, %v1697
  %v1742 = vadd.f32 %v1558, %v1702
  %v1743 = vadd.f32 %v1561, %v1705
  %v1744 = vadd.f32 %v1566, %v1710
  %v1745 = vadd.f32 %v1569, %v1713
  %v1746 = vadd.f32 %v1574, %v1718
  %v1747 = vadd.f32 %v1577, %v1721
  %v1748 = vadd.f32 %v1582, %v1726
  %v1749 = vadd.f32 %v1585, %v1729
  %v1750 = vadd.f32 %v1590, %v1734
  %v1751 = vadd.f32 %v1593, %v1737
  %vm1752 = vsmask.f32 2304
  %v1753 = vrot.slane %v1305, 5
  %v1754 = vrot.slane %v1307, 6
  %v1755 = vor.u32 %v1753, %v1754
  %v1756 = vrot.slane %v1316, 5
  %v1757 = vrot.slane %v1312, 6
  %v1758 = vor.u32 %v1756, %v1757
  %v1759 = vsel %vm1752, %v1755, %v1758
  %v1760 = vrot.slane %v1324, 5
  %v1761 = vrot.slane %v1320, 6
  %v1762 = vor.u32 %v1760, %v1761
  %v1763 = vsel %vm1752, %v1758, %v1762
  %v1764 = vrot.slane %v1332, 5
  %v1765 = vrot.slane %v1328, 6
  %v1766 = vor.u32 %v1764, %v1765
  %v1767 = vsel %vm1752, %v1762, %v1766
  %v1768 = vrot.slane %v1340, 5
  %v1769 = vrot.slane %v1336, 6
  %v1770 = vor.u32 %v1768, %v1769
  %v1771 = vsel %vm1752, %v1766, %v1770
  %v1772 = vrot.slane %v1348, 5
  %v1773 = vrot.slane %v1344, 6
  %v1774 = vor.u32 %v1772, %v1773
  %v1775 = vsel %vm1752, %v1770, %v1774
  %v1776 = vshrl.u32 %v1262, 16
  %v1778 = vrot.slane %v1776, 5
  %v1779 = vrot.slane %v1352, 6
  %v1780 = vor.u32 %v1778, %v1779
  %v1781 = vsel %vm1752, %v1774, %v1780
  %v1790 = vunpack.c.l.b16 %v1294
  %v1791 = vunpack.c.l.b16 %v1295
  %v1792 = vunpack.c.l.b16 %v1296
  %v1793 = vunpack.c.l.b16 %v1297
  %v1794 = vunpack.c.l.b16 %v1298
  %v1795 = vunpack.c.l.b16 %v1299
  %v1796 = vunpack.c.l.b16 %v1300
  %v1797 = vunpack.c.l.b16 %v1301
  %v1798 = vpack.c.b16 %v1791, %v1790
  %v1799 = vpack.c.b16 %v1793, %v1792
  %v1800 = vpack.c.b16 %v1795, %v1794
  %v1801 = vpack.c.b16 %v1797, %v1796
  %v1807 = vsel %vm750, %v1759, 0
  %v1810 = vsel %vm750, %v1763, 0
  %v1813 = vsel %vm750, %v1767, 0
  %v1816 = vsel %vm750, %v1771, 0
  %v1819 = vsel %vm750, %v1775, 0
  %v1822 = vsel %vm750, %v1781, 0
  %1824 = vmatprep.subr.bf16.mxu0 0
  %1825 = vmatpush1.bf16.msra.mxu0 0
  %1826 = vmatprep.subr.bf16.mxu0 0
  %1827 = vmatpush1.bf16.msra.mxu0 0
  %1828 = vmatprep.subr.bf16.mxu0 0
  %1829 = vmatpush1.bf16.msra.mxu0 0
  %1830 = vmatprep.subr.bf16.mxu0 0
  %1831 = vmatpush1.bf16.msra.mxu0 0
  %1832 = vmatprep.subr.bf16.mxu0 0
  %1833 = vmatpush1.bf16.msra.mxu0 %v1801
  %1834 = vmatprep.subr.bf16.mxu0 0
  %1835 = vmatpush1.bf16.msra.mxu0 %v1800
  %1836 = vmatprep.subr.bf16.mxu0 0
  %1837 = vmatpush1.bf16.msra.mxu0 %v1799
  %1838 = vmatprep.subr.bf16.mxu0 0
  %1839 = vmatpush1.bf16.msra.mxu0 %v1798
  %1840 = vmatprep.subr.bf16.mxu0 0
  %1841 = vmatpush2.bf16.msra.mxu0 0
  %1842 = vmatprep.subr.bf16.mxu0 0
  %1843 = vmatpush2.bf16.msra.mxu0 0
  %1844 = vmatprep.subr.bf16.mxu0 0
  %1845 = vmatpush2.bf16.msra.mxu0 0
  %1846 = vmatprep.subr.bf16.mxu0 0
  %1847 = vmatpush2.bf16.msra.mxu0 0
  %1848 = vmatprep.subr.bf16.mxu0 0
  %1849 = vmatpush2.bf16.msra.mxu0 0
  %1850 = vmatprep.subr.bf16.mxu0 0
  %1851 = vmatpush2.bf16.msra.mxu0 0
  %1852 = vmatprep.subr.bf16.mxu0 0
  %1853 = vmatpush2.bf16.msra.mxu0 0
  %1854 = vmatprep.subr.bf16.mxu0 0
  %1855 = vmatpush2.bf16.msra.mxu0 0
  %1856 = vmatprep.mubr.bf16.mxu0 0
  %1857 = vmatmul.mubr.bf16.gmra.mxu0 %v1807
  %v1858 = vpop.f32.mrf.mxu0
  %v1859 = vadd.f32 0.0, %v1858
  %v1860 = vpop.f32.mrf.mxu0
  %v1861 = vpop.f32.mrf.mxu0
  %v1862 = vadd.f32 0.0, %v1861
  %v1863 = vpop.f32.mrf.mxu0
  %1864 = vmatprep.mubr.bf16.mxu0 0
  %1865 = vmatmul.mubr.bf16.gmra.mxu0 %v1810
  %v1866 = vpop.f32.mrf.mxu0
  %v1867 = vadd.f32 0.0, %v1866
  %v1868 = vpop.f32.mrf.mxu0
  %v1869 = vpop.f32.mrf.mxu0
  %v1870 = vadd.f32 0.0, %v1869
  %v1871 = vpop.f32.mrf.mxu0
  %1872 = vmatprep.mubr.bf16.mxu0 0
  %1873 = vmatmul.mubr.bf16.gmra.mxu0 %v1813
  %v1874 = vpop.f32.mrf.mxu0
  %v1875 = vadd.f32 0.0, %v1874
  %v1876 = vpop.f32.mrf.mxu0
  %v1877 = vpop.f32.mrf.mxu0
  %v1878 = vadd.f32 0.0, %v1877
  %v1879 = vpop.f32.mrf.mxu0
  %1880 = vmatprep.mubr.bf16.mxu0 0
  %1881 = vmatmul.mubr.bf16.gmra.mxu0 %v1816
  %v1882 = vpop.f32.mrf.mxu0
  %v1883 = vadd.f32 0.0, %v1882
  %v1884 = vpop.f32.mrf.mxu0
  %v1885 = vpop.f32.mrf.mxu0
  %v1886 = vadd.f32 0.0, %v1885
  %v1887 = vpop.f32.mrf.mxu0
  %1888 = vmatprep.mubr.bf16.mxu0 0
  %1889 = vmatmul.mubr.bf16.gmra.mxu0 %v1819
  %v1890 = vpop.f32.mrf.mxu0
  %v1891 = vadd.f32 0.0, %v1890
  %v1892 = vpop.f32.mrf.mxu0
  %v1893 = vpop.f32.mrf.mxu0
  %v1894 = vadd.f32 0.0, %v1893
  %v1895 = vpop.f32.mrf.mxu0
  %1896 = vmatprep.mubr.bf16.mxu0 0
  %1897 = vmatmul.mubr.bf16.gmra.mxu0 %v1822
  %v1898 = vpop.f32.mrf.mxu0
  %v1899 = vadd.f32 0.0, %v1898
  %v1900 = vpop.f32.mrf.mxu0
  %v1901 = vpop.f32.mrf.mxu0
  %v1902 = vadd.f32 0.0, %v1901
  %v1903 = vpop.f32.mrf.mxu0
  %1904 = vdwg.mxu0
  %v1905 = vadd.f32 %v1740, %v1859
  %v1906 = vadd.f32 %v1741, %v1862
  %v1907 = vadd.f32 %v1742, %v1867
  %v1908 = vadd.f32 %v1743, %v1870
  %v1909 = vadd.f32 %v1744, %v1875
  %v1910 = vadd.f32 %v1745, %v1878
  %v1911 = vadd.f32 %v1746, %v1883
  %v1912 = vadd.f32 %v1747, %v1886
  %v1913 = vadd.f32 %v1748, %v1891
  %v1914 = vadd.f32 %v1749, %v1894
  %v1915 = vadd.f32 %v1750, %v1899
  %v1916 = vadd.f32 %v1751, %v1902
  %v1918 = vlaneseq
  %v1919 = vshrl.u32 %v1918, 7
  %v1920 = vsub.s32 0, %v1919
  %v1921 = vrot.slane %v1302, %v1920
  %v1923 = vadd.f32 %v1905, %v1921
  %v1924 = vadd.f32 %v1906, %v1921
  %v1925 = vadd.f32 %v1907, %v1921
  %v1926 = vadd.f32 %v1908, %v1921
  %v1927 = vadd.f32 %v1909, %v1921
  %v1928 = vadd.f32 %v1910, %v1921
  %v1929 = vadd.f32 %v1911, %v1921
  %v1930 = vadd.f32 %v1912, %v1921
  %v1931 = vadd.f32 %v1913, %v1921
  %v1932 = vadd.f32 %v1914, %v1921
  %v1933 = vadd.f32 %v1915, %v1921
  %v1934 = vadd.f32 %v1916, %v1921
  %v1935 = vmax.f32 %v1923, 0.0
  %v1936 = vmax.f32 %v1924, 0.0
  %v1937 = vmax.f32 %v1925, 0.0
  %v1938 = vmax.f32 %v1926, 0.0
  %v1939 = vmax.f32 %v1927, 0.0
  %v1940 = vmax.f32 %v1928, 0.0
  %v1941 = vmax.f32 %v1929, 0.0
  %v1942 = vmax.f32 %v1930, 0.0
  %v1943 = vmax.f32 %v1931, 0.0
  %v1944 = vmax.f32 %v1932, 0.0
  %v1945 = vmax.f32 %v1933, 0.0
  %v1946 = vmax.f32 %v1934, 0.0
  %v1947 = vpack.c.bf16 %v1936, %v1935
  %v1948 = vpack.c.bf16 %v1938, %v1937
  %v1949 = vpack.c.bf16 %v1940, %v1939
  %v1950 = vpack.c.bf16 %v1942, %v1941
  %v1951 = vpack.c.bf16 %v1944, %v1943
  %v1952 = vpack.c.bf16 %v1946, %v1945
  %v1959 = vunpack.c.l.b16 %v1947
  %v1960 = vunpack.c.h.b16 %v1947
  %v1961 = vunpack.c.l.b16 %v1948
  %v1962 = vunpack.c.h.b16 %v1948
  %v1963 = vunpack.c.l.b16 %v1949
  %v1964 = vunpack.c.h.b16 %v1949
  %v1965 = vunpack.c.l.b16 %v1950
  %v1966 = vunpack.c.h.b16 %v1950
  %v1967 = vunpack.c.l.b16 %v1951
  %v1968 = vunpack.c.h.b16 %v1951
  %v1969 = vunpack.c.l.b16 %v1952
  %v1970 = vunpack.c.h.b16 %v1952
  %v1971 = vpack.c.b16 %v1959, %v1959
  %v1972 = vpack.c.b16 %v1960, %v1960
  %v1973 = vpack.c.b16 %v1961, %v1961
  %v1974 = vpack.c.b16 %v1962, %v1962
  %v1975 = vpack.c.b16 %v1963, %v1963
  %v1976 = vpack.c.b16 %v1964, %v1964
  %v1977 = vpack.c.b16 %v1965, %v1965
  %v1978 = vpack.c.b16 %v1966, %v1966
  %v1979 = vpack.c.b16 %v1967, %v1967
  %v1980 = vpack.c.b16 %v1968, %v1968
  %v1981 = vpack.c.b16 %v1969, %v1969
  %v1982 = vpack.c.b16 %v1970, %v1970
  %vm1995 = vcmask 257024
  %1996 = vst.msk [vmem:[%s5] sm:$0xf] %vm1995, %v1971
  %1997 = vst.msk [vmem:[%s5 + $0x4] sm:$0xf] %vm1995, %v1972
  %1998 = vst.msk [vmem:[%s5 + $0x8] sm:$0xf] %vm1995, %v1973
  %1999 = vst.msk [vmem:[%s5 + $0xc] sm:$0xf] %vm1995, %v1974
  %2000 = vst.msk [vmem:[%s5 + $0x10] sm:$0xf] %vm1995, %v1975
  %2001 = vst.msk [vmem:[%s5 + $0x14] sm:$0xf] %vm1995, %v1976
  %2002 = vst.msk [vmem:[%s5 + $0x18] sm:$0xf] %vm1995, %v1977
  %2003 = vst.msk [vmem:[%s5 + $0x1c] sm:$0xf] %vm1995, %v1978
  %2004 = vst.msk [vmem:[%s5 + $0x20] sm:$0xf] %vm1995, %v1979
  %2005 = vst.msk [vmem:[%s5 + $0x24] sm:$0xf] %vm1995, %v1980
  %2006 = vst.msk [vmem:[%s5 + $0x28] sm:$0xf] %vm1995, %v1981
  %2007 = vst.msk [vmem:[%s5 + $0x2c] sm:$0xf] %vm1995, %v1982
  %v2009 = vshrl.u32 %v1263, 16
  %v2011 = vshll.u32 %v1263, 16
  %v2013 = vrot.slane %v2011, 1
  %v2014 = vor.u32 %v2009, %v2013
  %v2016 = vshll.u32 %v1264, 16
  %v2018 = vrot.slane %v2016, 1
  %v2019 = vsel %vm1303, %v2014, %v2018
  %v2020 = vshrl.u32 %v1264, 16
  %v2022 = vor.u32 %v2020, %v2018
  %v2024 = vshll.u32 %v1265, 16
  %v2026 = vrot.slane %v2024, 1
  %v2027 = vsel %vm1303, %v2022, %v2026
  %v2028 = vshrl.u32 %v1265, 16
  %v2030 = vor.u32 %v2028, %v2026
  %v2032 = vshll.u32 %v1266, 16
  %v2034 = vrot.slane %v2032, 1
  %v2035 = vsel %vm1303, %v2030, %v2034
  %v2036 = vshrl.u32 %v1266, 16
  %v2038 = vor.u32 %v2036, %v2034
  %v2040 = vshll.u32 %v1267, 16
  %v2042 = vrot.slane %v2040, 1
  %v2043 = vsel %vm1303, %v2038, %v2042
  %v2044 = vshrl.u32 %v1267, 16
  %v2046 = vor.u32 %v2044, %v2042
  %v2048 = vshll.u32 %v1268, 16
  %v2050 = vrot.slane %v2048, 1
  %v2051 = vsel %vm1303, %v2046, %v2050
  %v2052 = vshrl.u32 %v1268, 16
  %v2054 = vor.u32 %v2052, %v2050
  %v2056 = vshll.u32 %v1269, 16
  %v2058 = vrot.slane %v2056, 1
  %v2059 = vsel %vm1303, %v2054, %v2058
  %v2061 = vsel %vm750, %v2019, 0
  %v2064 = vsel %vm750, %v2027, 0
  %v2067 = vsel %vm750, %v2035, 0
  %v2070 = vsel %vm750, %v2043, 0
  %v2073 = vsel %vm750, %v2051, 0
  %v2076 = vsel %vm750, %v2059, 0
  %2078 = vmatprep.subr.bf16.mxu0 0
  %2079 = vmatpush1.bf16.msra.mxu0 0
  %2080 = vmatprep.subr.bf16.mxu0 0
  %2081 = vmatpush1.bf16.msra.mxu0 0
  %2082 = vmatprep.subr.bf16.mxu0 0
  %2083 = vmatpush1.bf16.msra.mxu0 0
  %2084 = vmatprep.subr.bf16.mxu0 0
  %2085 = vmatpush1.bf16.msra.mxu0 0
  %2086 = vmatprep.subr.bf16.mxu0 0
  %2087 = vmatpush1.bf16.msra.mxu0 %v1375
  %2088 = vmatprep.subr.bf16.mxu0 0
  %2089 = vmatpush1.bf16.msra.mxu0 %v1374
  %2090 = vmatprep.subr.bf16.mxu0 0
  %2091 = vmatpush1.bf16.msra.mxu0 %v1373
  %2092 = vmatprep.subr.bf16.mxu0 0
  %2093 = vmatpush1.bf16.msra.mxu0 %v1372
  %2094 = vmatprep.subr.bf16.mxu0 0
  %2095 = vmatpush2.bf16.msra.mxu0 0
  %2096 = vmatprep.subr.bf16.mxu0 0
  %2097 = vmatpush2.bf16.msra.mxu0 0
  %2098 = vmatprep.subr.bf16.mxu0 0
  %2099 = vmatpush2.bf16.msra.mxu0 0
  %2100 = vmatprep.subr.bf16.mxu0 0
  %2101 = vmatpush2.bf16.msra.mxu0 0
  %2102 = vmatprep.subr.bf16.mxu0 0
  %2103 = vmatpush2.bf16.msra.mxu0 0
  %2104 = vmatprep.subr.bf16.mxu0 0
  %2105 = vmatpush2.bf16.msra.mxu0 0
  %2106 = vmatprep.subr.bf16.mxu0 0
  %2107 = vmatpush2.bf16.msra.mxu0 0
  %2108 = vmatprep.subr.bf16.mxu0 0
  %2109 = vmatpush2.bf16.msra.mxu0 0
  %2110 = vmatprep.mubr.bf16.mxu0 0
  %2111 = vmatmul.mubr.bf16.gmra.mxu0 %v2061
  %v2112 = vpop.f32.mrf.mxu0
  %v2113 = vadd.f32 0.0, %v2112
  %v2114 = vpop.f32.mrf.mxu0
  %v2115 = vpop.f32.mrf.mxu0
  %v2116 = vadd.f32 0.0, %v2115
  %v2117 = vpop.f32.mrf.mxu0
  %2118 = vmatprep.mubr.bf16.mxu0 0
  %2119 = vmatmul.mubr.bf16.gmra.mxu0 %v2064
  %v2120 = vpop.f32.mrf.mxu0
  %v2121 = vadd.f32 0.0, %v2120
  %v2122 = vpop.f32.mrf.mxu0
  %v2123 = vpop.f32.mrf.mxu0
  %v2124 = vadd.f32 0.0, %v2123
  %v2125 = vpop.f32.mrf.mxu0
  %2126 = vmatprep.mubr.bf16.mxu0 0
  %2127 = vmatmul.mubr.bf16.gmra.mxu0 %v2067
  %v2128 = vpop.f32.mrf.mxu0
  %v2129 = vadd.f32 0.0, %v2128
  %v2130 = vpop.f32.mrf.mxu0
  %v2131 = vpop.f32.mrf.mxu0
  %v2132 = vadd.f32 0.0, %v2131
  %v2133 = vpop.f32.mrf.mxu0
  %2134 = vmatprep.mubr.bf16.mxu0 0
  %2135 = vmatmul.mubr.bf16.gmra.mxu0 %v2070
  %v2136 = vpop.f32.mrf.mxu0
  %v2137 = vadd.f32 0.0, %v2136
  %v2138 = vpop.f32.mrf.mxu0
  %v2139 = vpop.f32.mrf.mxu0
  %v2140 = vadd.f32 0.0, %v2139
  %v2141 = vpop.f32.mrf.mxu0
  %2142 = vmatprep.mubr.bf16.mxu0 0
  %2143 = vmatmul.mubr.bf16.gmra.mxu0 %v2073
  %v2144 = vpop.f32.mrf.mxu0
  %v2145 = vadd.f32 0.0, %v2144
  %v2146 = vpop.f32.mrf.mxu0
  %v2147 = vpop.f32.mrf.mxu0
  %v2148 = vadd.f32 0.0, %v2147
  %v2149 = vpop.f32.mrf.mxu0
  %2150 = vmatprep.mubr.bf16.mxu0 0
  %2151 = vmatmul.mubr.bf16.gmra.mxu0 %v2076
  %v2152 = vpop.f32.mrf.mxu0
  %v2153 = vadd.f32 0.0, %v2152
  %v2154 = vpop.f32.mrf.mxu0
  %v2155 = vpop.f32.mrf.mxu0
  %v2156 = vadd.f32 0.0, %v2155
  %v2157 = vpop.f32.mrf.mxu0
  %2158 = vdwg.mxu0
  %v2159 = vsel %vm750, %v1263, 0
  %v2161 = vsel %vm750, %v1264, 0
  %v2163 = vsel %vm750, %v1265, 0
  %v2165 = vsel %vm750, %v1266, 0
  %v2167 = vsel %vm750, %v1267, 0
  %v2169 = vsel %vm750, %v1268, 0
  %2171 = vmatprep.subr.bf16.mxu0 0
  %2172 = vmatpush1.bf16.msra.mxu0 0
  %2173 = vmatprep.subr.bf16.mxu0 0
  %2174 = vmatpush1.bf16.msra.mxu0 0
  %2175 = vmatprep.subr.bf16.mxu0 0
  %2176 = vmatpush1.bf16.msra.mxu0 0
  %2177 = vmatprep.subr.bf16.mxu0 0
  %2178 = vmatpush1.bf16.msra.mxu0 0
  %2179 = vmatprep.subr.bf16.mxu0 0
  %2180 = vmatpush1.bf16.msra.mxu0 %v1498
  %2181 = vmatprep.subr.bf16.mxu0 0
  %2182 = vmatpush1.bf16.msra.mxu0 %v1497
  %2183 = vmatprep.subr.bf16.mxu0 0
  %2184 = vmatpush1.bf16.msra.mxu0 %v1496
  %2185 = vmatprep.subr.bf16.mxu0 0
  %2186 = vmatpush1.bf16.msra.mxu0 %v1495
  %2187 = vmatprep.subr.bf16.mxu0 0
  %2188 = vmatpush2.bf16.msra.mxu0 0
  %2189 = vmatprep.subr.bf16.mxu0 0
  %2190 = vmatpush2.bf16.msra.mxu0 0
  %2191 = vmatprep.subr.bf16.mxu0 0
  %2192 = vmatpush2.bf16.msra.mxu0 0
  %2193 = vmatprep.subr.bf16.mxu0 0
  %2194 = vmatpush2.bf16.msra.mxu0 0
  %2195 = vmatprep.subr.bf16.mxu0 0
  %2196 = vmatpush2.bf16.msra.mxu0 0
  %2197 = vmatprep.subr.bf16.mxu0 0
  %2198 = vmatpush2.bf16.msra.mxu0 0
  %2199 = vmatprep.subr.bf16.mxu0 0
  %2200 = vmatpush2.bf16.msra.mxu0 0
  %2201 = vmatprep.subr.bf16.mxu0 0
  %2202 = vmatpush2.bf16.msra.mxu0 0
  %2203 = vmatprep.mubr.bf16.mxu0 0
  %2204 = vmatmul.mubr.bf16.gmra.mxu0 %v2159
  %v2205 = vpop.f32.mrf.mxu0
  %v2206 = vadd.f32 %v2113, %v2205
  %v2207 = vpop.f32.mrf.mxu0
  %v2208 = vpop.f32.mrf.mxu0
  %v2209 = vadd.f32 %v2116, %v2208
  %v2210 = vpop.f32.mrf.mxu0
  %2211 = vmatprep.mubr.bf16.mxu0 0
  %2212 = vmatmul.mubr.bf16.gmra.mxu0 %v2161
  %v2213 = vpop.f32.mrf.mxu0
  %v2214 = vadd.f32 %v2121, %v2213
  %v2215 = vpop.f32.mrf.mxu0
  %v2216 = vpop.f32.mrf.mxu0
  %v2217 = vadd.f32 %v2124, %v2216
  %v2218 = vpop.f32.mrf.mxu0
  %2219 = vmatprep.mubr.bf16.mxu0 0
  %2220 = vmatmul.mubr.bf16.gmra.mxu0 %v2163
  %v2221 = vpop.f32.mrf.mxu0
  %v2222 = vadd.f32 %v2129, %v2221
  %v2223 = vpop.f32.mrf.mxu0
  %v2224 = vpop.f32.mrf.mxu0
  %v2225 = vadd.f32 %v2132, %v2224
  %v2226 = vpop.f32.mrf.mxu0
  %2227 = vmatprep.mubr.bf16.mxu0 0
  %2228 = vmatmul.mubr.bf16.gmra.mxu0 %v2165
  %v2229 = vpop.f32.mrf.mxu0
  %v2230 = vadd.f32 %v2137, %v2229
  %v2231 = vpop.f32.mrf.mxu0
  %v2232 = vpop.f32.mrf.mxu0
  %v2233 = vadd.f32 %v2140, %v2232
  %v2234 = vpop.f32.mrf.mxu0
  %2235 = vmatprep.mubr.bf16.mxu0 0
  %2236 = vmatmul.mubr.bf16.gmra.mxu0 %v2167
  %v2237 = vpop.f32.mrf.mxu0
  %v2238 = vadd.f32 %v2145, %v2237
  %v2239 = vpop.f32.mrf.mxu0
  %v2240 = vpop.f32.mrf.mxu0
  %v2241 = vadd.f32 %v2148, %v2240
  %v2242 = vpop.f32.mrf.mxu0
  %2243 = vmatprep.mubr.bf16.mxu0 0
  %2244 = vmatmul.mubr.bf16.gmra.mxu0 %v2169
  %v2245 = vpop.f32.mrf.mxu0
  %v2246 = vadd.f32 %v2153, %v2245
  %v2247 = vpop.f32.mrf.mxu0
  %v2248 = vpop.f32.mrf.mxu0
  %v2249 = vadd.f32 %v2156, %v2248
  %v2250 = vpop.f32.mrf.mxu0
  %2251 = vdwg.mxu0
  %v2259 = vrot.slane %v1263, 5
  %v2260 = vrot.slane %v1264, 5
  %v2261 = vsel %vm1603, %v2259, %v2260
  %v2262 = vrot.slane %v1265, 5
  %v2263 = vsel %vm1603, %v2260, %v2262
  %v2264 = vrot.slane %v1266, 5
  %v2265 = vsel %vm1603, %v2262, %v2264
  %v2266 = vrot.slane %v1267, 5
  %v2267 = vsel %vm1603, %v2264, %v2266
  %v2268 = vrot.slane %v1268, 5
  %v2269 = vsel %vm1603, %v2266, %v2268
  %v2270 = vrot.slane %v1269, 5
  %v2271 = vsel %vm1603, %v2268, %v2270
  %v2273 = vsel %vm750, %v2261, 0
  %v2276 = vsel %vm750, %v2263, 0
  %v2279 = vsel %vm750, %v2265, 0
  %v2282 = vsel %vm750, %v2267, 0
  %v2285 = vsel %vm750, %v2269, 0
  %v2288 = vsel %vm750, %v2271, 0
  %2290 = vmatprep.subr.bf16.mxu0 0
  %2291 = vmatpush1.bf16.msra.mxu0 0
  %2292 = vmatprep.subr.bf16.mxu0 0
  %2293 = vmatpush1.bf16.msra.mxu0 0
  %2294 = vmatprep.subr.bf16.mxu0 0
  %2295 = vmatpush1.bf16.msra.mxu0 0
  %2296 = vmatprep.subr.bf16.mxu0 0
  %2297 = vmatpush1.bf16.msra.mxu0 0
  %2298 = vmatprep.subr.bf16.mxu0 0
  %2299 = vmatpush1.bf16.msra.mxu0 %v1636
  %2300 = vmatprep.subr.bf16.mxu0 0
  %2301 = vmatpush1.bf16.msra.mxu0 %v1635
  %2302 = vmatprep.subr.bf16.mxu0 0
  %2303 = vmatpush1.bf16.msra.mxu0 %v1634
  %2304 = vmatprep.subr.bf16.mxu0 0
  %2305 = vmatpush1.bf16.msra.mxu0 %v1633
  %2306 = vmatprep.subr.bf16.mxu0 0
  %2307 = vmatpush2.bf16.msra.mxu0 0
  %2308 = vmatprep.subr.bf16.mxu0 0
  %2309 = vmatpush2.bf16.msra.mxu0 0
  %2310 = vmatprep.subr.bf16.mxu0 0
  %2311 = vmatpush2.bf16.msra.mxu0 0
  %2312 = vmatprep.subr.bf16.mxu0 0
  %2313 = vmatpush2.bf16.msra.mxu0 0
  %2314 = vmatprep.subr.bf16.mxu0 0
  %2315 = vmatpush2.bf16.msra.mxu0 0
  %2316 = vmatprep.subr.bf16.mxu0 0
  %2317 = vmatpush2.bf16.msra.mxu0 0
  %2318 = vmatprep.subr.bf16.mxu0 0
  %2319 = vmatpush2.bf16.msra.mxu0 0
  %2320 = vmatprep.subr.bf16.mxu0 0
  %2321 = vmatpush2.bf16.msra.mxu0 0
  %2322 = vmatprep.mubr.bf16.mxu0 0
  %2323 = vmatmul.mubr.bf16.gmra.mxu0 %v2273
  %v2324 = vpop.f32.mrf.mxu0
  %v2325 = vadd.f32 0.0, %v2324
  %v2326 = vpop.f32.mrf.mxu0
  %v2327 = vpop.f32.mrf.mxu0
  %v2328 = vadd.f32 0.0, %v2327
  %v2329 = vpop.f32.mrf.mxu0
  %2330 = vmatprep.mubr.bf16.mxu0 0
  %2331 = vmatmul.mubr.bf16.gmra.mxu0 %v2276
  %v2332 = vpop.f32.mrf.mxu0
  %v2333 = vadd.f32 0.0, %v2332
  %v2334 = vpop.f32.mrf.mxu0
  %v2335 = vpop.f32.mrf.mxu0
  %v2336 = vadd.f32 0.0, %v2335
  %v2337 = vpop.f32.mrf.mxu0
  %2338 = vmatprep.mubr.bf16.mxu0 0
  %2339 = vmatmul.mubr.bf16.gmra.mxu0 %v2279
  %v2340 = vpop.f32.mrf.mxu0
  %v2341 = vadd.f32 0.0, %v2340
  %v2342 = vpop.f32.mrf.mxu0
  %v2343 = vpop.f32.mrf.mxu0
  %v2344 = vadd.f32 0.0, %v2343
  %v2345 = vpop.f32.mrf.mxu0
  %2346 = vmatprep.mubr.bf16.mxu0 0
  %2347 = vmatmul.mubr.bf16.gmra.mxu0 %v2282
  %v2348 = vpop.f32.mrf.mxu0
  %v2349 = vadd.f32 0.0, %v2348
  %v2350 = vpop.f32.mrf.mxu0
  %v2351 = vpop.f32.mrf.mxu0
  %v2352 = vadd.f32 0.0, %v2351
  %v2353 = vpop.f32.mrf.mxu0
  %2354 = vmatprep.mubr.bf16.mxu0 0
  %2355 = vmatmul.mubr.bf16.gmra.mxu0 %v2285
  %v2356 = vpop.f32.mrf.mxu0
  %v2357 = vadd.f32 0.0, %v2356
  %v2358 = vpop.f32.mrf.mxu0
  %v2359 = vpop.f32.mrf.mxu0
  %v2360 = vadd.f32 0.0, %v2359
  %v2361 = vpop.f32.mrf.mxu0
  %2362 = vmatprep.mubr.bf16.mxu0 0
  %2363 = vmatmul.mubr.bf16.gmra.mxu0 %v2288
  %v2364 = vpop.f32.mrf.mxu0
  %v2365 = vadd.f32 0.0, %v2364
  %v2366 = vpop.f32.mrf.mxu0
  %v2367 = vpop.f32.mrf.mxu0
  %v2368 = vadd.f32 0.0, %v2367
  %v2369 = vpop.f32.mrf.mxu0
  %2370 = vdwg.mxu0
  %v2371 = vadd.f32 %v2206, %v2325
  %v2372 = vadd.f32 %v2209, %v2328
  %v2373 = vadd.f32 %v2214, %v2333
  %v2374 = vadd.f32 %v2217, %v2336
  %v2375 = vadd.f32 %v2222, %v2341
  %v2376 = vadd.f32 %v2225, %v2344
  %v2377 = vadd.f32 %v2230, %v2349
  %v2378 = vadd.f32 %v2233, %v2352
  %v2379 = vadd.f32 %v2238, %v2357
  %v2380 = vadd.f32 %v2241, %v2360
  %v2381 = vadd.f32 %v2246, %v2365
  %v2382 = vadd.f32 %v2249, %v2368
  %v2383 = vrot.slane %v2009, 5
  %v2384 = vrot.slane %v2011, 6
  %v2385 = vor.u32 %v2383, %v2384
  %v2386 = vrot.slane %v2020, 5
  %v2387 = vrot.slane %v2016, 6
  %v2388 = vor.u32 %v2386, %v2387
  %v2389 = vsel %vm1752, %v2385, %v2388
  %v2390 = vrot.slane %v2028, 5
  %v2391 = vrot.slane %v2024, 6
  %v2392 = vor.u32 %v2390, %v2391
  %v2393 = vsel %vm1752, %v2388, %v2392
  %v2394 = vrot.slane %v2036, 5
  %v2395 = vrot.slane %v2032, 6
  %v2396 = vor.u32 %v2394, %v2395
  %v2397 = vsel %vm1752, %v2392, %v2396
  %v2398 = vrot.slane %v2044, 5
  %v2399 = vrot.slane %v2040, 6
  %v2400 = vor.u32 %v2398, %v2399
  %v2401 = vsel %vm1752, %v2396, %v2400
  %v2402 = vrot.slane %v2052, 5
  %v2403 = vrot.slane %v2048, 6
  %v2404 = vor.u32 %v2402, %v2403
  %v2405 = vsel %vm1752, %v2400, %v2404
  %v2406 = vshrl.u32 %v1269, 16
  %v2408 = vrot.slane %v2406, 5
  %v2409 = vrot.slane %v2056, 6
  %v2410 = vor.u32 %v2408, %v2409
  %v2411 = vsel %vm1752, %v2404, %v2410
  %v2413 = vsel %vm750, %v2389, 0
  %v2416 = vsel %vm750, %v2393, 0
  %v2419 = vsel %vm750, %v2397, 0
  %v2422 = vsel %vm750, %v2401, 0
  %v2425 = vsel %vm750, %v2405, 0
  %v2428 = vsel %vm750, %v2411, 0
  %2430 = vmatprep.subr.bf16.mxu0 0
  %2431 = vmatpush1.bf16.msra.mxu0 0
  %2432 = vmatprep.subr.bf16.mxu0 0
  %2433 = vmatpush1.bf16.msra.mxu0 0
  %2434 = vmatprep.subr.bf16.mxu0 0
  %2435 = vmatpush1.bf16.msra.mxu0 0
  %2436 = vmatprep.subr.bf16.mxu0 0
  %2437 = vmatpush1.bf16.msra.mxu0 0
  %2438 = vmatprep.subr.bf16.mxu0 0
  %2439 = vmatpush1.bf16.msra.mxu0 %v1801
  %2440 = vmatprep.subr.bf16.mxu0 0
  %2441 = vmatpush1.bf16.msra.mxu0 %v1800
  %2442 = vmatprep.subr.bf16.mxu0 0
  %2443 = vmatpush1.bf16.msra.mxu0 %v1799
  %2444 = vmatprep.subr.bf16.mxu0 0
  %2445 = vmatpush1.bf16.msra.mxu0 %v1798
  %2446 = vmatprep.subr.bf16.mxu0 0
  %2447 = vmatpush2.bf16.msra.mxu0 0
  %2448 = vmatprep.subr.bf16.mxu0 0
  %2449 = vmatpush2.bf16.msra.mxu0 0
  %2450 = vmatprep.subr.bf16.mxu0 0
  %2451 = vmatpush2.bf16.msra.mxu0 0
  %2452 = vmatprep.subr.bf16.mxu0 0
  %2453 = vmatpush2.bf16.msra.mxu0 0
  %2454 = vmatprep.subr.bf16.mxu0 0
  %2455 = vmatpush2.bf16.msra.mxu0 0
  %2456 = vmatprep.subr.bf16.mxu0 0
  %2457 = vmatpush2.bf16.msra.mxu0 0
  %2458 = vmatprep.subr.bf16.mxu0 0
  %2459 = vmatpush2.bf16.msra.mxu0 0
  %2460 = vmatprep.subr.bf16.mxu0 0
  %2461 = vmatpush2.bf16.msra.mxu0 0
  %2462 = vmatprep.mubr.bf16.mxu0 0
  %2463 = vmatmul.mubr.bf16.gmra.mxu0 %v2413
  %v2464 = vpop.f32.mrf.mxu0
  %v2465 = vadd.f32 0.0, %v2464
  %v2466 = vpop.f32.mrf.mxu0
  %v2467 = vpop.f32.mrf.mxu0
  %v2468 = vadd.f32 0.0, %v2467
  %v2469 = vpop.f32.mrf.mxu0
  %2470 = vmatprep.mubr.bf16.mxu0 0
  %2471 = vmatmul.mubr.bf16.gmra.mxu0 %v2416
  %v2472 = vpop.f32.mrf.mxu0
  %v2473 = vadd.f32 0.0, %v2472
  %v2474 = vpop.f32.mrf.mxu0
  %v2475 = vpop.f32.mrf.mxu0
  %v2476 = vadd.f32 0.0, %v2475
  %v2477 = vpop.f32.mrf.mxu0
  %2478 = vmatprep.mubr.bf16.mxu0 0
  %2479 = vmatmul.mubr.bf16.gmra.mxu0 %v2419
  %v2480 = vpop.f32.mrf.mxu0
  %v2481 = vadd.f32 0.0, %v2480
  %v2482 = vpop.f32.mrf.mxu0
  %v2483 = vpop.f32.mrf.mxu0
  %v2484 = vadd.f32 0.0, %v2483
  %v2485 = vpop.f32.mrf.mxu0
  %2486 = vmatprep.mubr.bf16.mxu0 0
  %2487 = vmatmul.mubr.bf16.gmra.mxu0 %v2422
  %v2488 = vpop.f32.mrf.mxu0
  %v2489 = vadd.f32 0.0, %v2488
  %v2490 = vpop.f32.mrf.mxu0
  %v2491 = vpop.f32.mrf.mxu0
  %v2492 = vadd.f32 0.0, %v2491
  %v2493 = vpop.f32.mrf.mxu0
  %2494 = vmatprep.mubr.bf16.mxu0 0
  %2495 = vmatmul.mubr.bf16.gmra.mxu0 %v2425
  %v2496 = vpop.f32.mrf.mxu0
  %v2497 = vadd.f32 0.0, %v2496
  %v2498 = vpop.f32.mrf.mxu0
  %v2499 = vpop.f32.mrf.mxu0
  %v2500 = vadd.f32 0.0, %v2499
  %v2501 = vpop.f32.mrf.mxu0
  %2502 = vmatprep.mubr.bf16.mxu0 0
  %2503 = vmatmul.mubr.bf16.gmra.mxu0 %v2428
  %v2504 = vpop.f32.mrf.mxu0
  %v2505 = vadd.f32 0.0, %v2504
  %v2506 = vpop.f32.mrf.mxu0
  %v2507 = vpop.f32.mrf.mxu0
  %v2508 = vadd.f32 0.0, %v2507
  %v2509 = vpop.f32.mrf.mxu0
  %2510 = vdwg.mxu0
  %v2511 = vadd.f32 %v2371, %v2465
  %v2512 = vadd.f32 %v2372, %v2468
  %v2513 = vadd.f32 %v2373, %v2473
  %v2514 = vadd.f32 %v2374, %v2476
  %v2515 = vadd.f32 %v2375, %v2481
  %v2516 = vadd.f32 %v2376, %v2484
  %v2517 = vadd.f32 %v2377, %v2489
  %v2518 = vadd.f32 %v2378, %v2492
  %v2519 = vadd.f32 %v2379, %v2497
  %v2520 = vadd.f32 %v2380, %v2500
  %v2521 = vadd.f32 %v2381, %v2505
  %v2522 = vadd.f32 %v2382, %v2508
  %v2523 = vadd.f32 %v2511, %v1921
  %v2524 = vadd.f32 %v2512, %v1921
  %v2525 = vadd.f32 %v2513, %v1921
  %v2526 = vadd.f32 %v2514, %v1921
  %v2527 = vadd.f32 %v2515, %v1921
  %v2528 = vadd.f32 %v2516, %v1921
  %v2529 = vadd.f32 %v2517, %v1921
  %v2530 = vadd.f32 %v2518, %v1921
  %v2531 = vadd.f32 %v2519, %v1921
  %v2532 = vadd.f32 %v2520, %v1921
  %v2533 = vadd.f32 %v2521, %v1921
  %v2534 = vadd.f32 %v2522, %v1921
  %v2535 = vmax.f32 %v2523, 0.0
  %v2536 = vmax.f32 %v2524, 0.0
  %v2537 = vmax.f32 %v2525, 0.0
  %v2538 = vmax.f32 %v2526, 0.0
  %v2539 = vmax.f32 %v2527, 0.0
  %v2540 = vmax.f32 %v2528, 0.0
  %v2541 = vmax.f32 %v2529, 0.0
  %v2542 = vmax.f32 %v2530, 0.0
  %v2543 = vmax.f32 %v2531, 0.0
  %v2544 = vmax.f32 %v2532, 0.0
  %v2545 = vmax.f32 %v2533, 0.0
  %v2546 = vmax.f32 %v2534, 0.0
  %v2547 = vpack.c.bf16 %v2536, %v2535
  %v2548 = vpack.c.bf16 %v2538, %v2537
  %v2549 = vpack.c.bf16 %v2540, %v2539
  %v2550 = vpack.c.bf16 %v2542, %v2541
  %v2551 = vpack.c.bf16 %v2544, %v2543
  %v2552 = vpack.c.bf16 %v2546, %v2545
  %v2559 = vunpack.c.l.b16 %v2547
  %v2560 = vunpack.c.h.b16 %v2547
  %v2561 = vunpack.c.l.b16 %v2548
  %v2562 = vunpack.c.h.b16 %v2548
  %v2563 = vunpack.c.l.b16 %v2549
  %v2564 = vunpack.c.h.b16 %v2549
  %v2565 = vunpack.c.l.b16 %v2550
  %v2566 = vunpack.c.h.b16 %v2550
  %v2567 = vunpack.c.l.b16 %v2551
  %v2568 = vunpack.c.h.b16 %v2551
  %v2569 = vunpack.c.l.b16 %v2552
  %v2570 = vunpack.c.h.b16 %v2552
  %v2571 = vpack.c.b16 %v2559, %v2559
  %v2572 = vpack.c.b16 %v2560, %v2560
  %v2573 = vpack.c.b16 %v2561, %v2561
  %v2574 = vpack.c.b16 %v2562, %v2562
  %v2575 = vpack.c.b16 %v2563, %v2563
  %v2576 = vpack.c.b16 %v2564, %v2564
  %v2577 = vpack.c.b16 %v2565, %v2565
  %v2578 = vpack.c.b16 %v2566, %v2566
  %v2579 = vpack.c.b16 %v2567, %v2567
  %v2580 = vpack.c.b16 %v2568, %v2568
  %v2581 = vpack.c.b16 %v2569, %v2569
  %v2582 = vpack.c.b16 %v2570, %v2570
  %2595 = vst.msk [vmem:[%s5 + $0x30] sm:$0xf] %vm1995, %v2571
  %2596 = vst.msk [vmem:[%s5 + $0x34] sm:$0xf] %vm1995, %v2572
  %2597 = vst.msk [vmem:[%s5 + $0x38] sm:$0xf] %vm1995, %v2573
  %2598 = vst.msk [vmem:[%s5 + $0x3c] sm:$0xf] %vm1995, %v2574
  %2599 = vst.msk [vmem:[%s5 + $0x40] sm:$0xf] %vm1995, %v2575
  %2600 = vst.msk [vmem:[%s5 + $0x44] sm:$0xf] %vm1995, %v2576
  %2601 = vst.msk [vmem:[%s5 + $0x48] sm:$0xf] %vm1995, %v2577
  %2602 = vst.msk [vmem:[%s5 + $0x4c] sm:$0xf] %vm1995, %v2578
  %2603 = vst.msk [vmem:[%s5 + $0x50] sm:$0xf] %vm1995, %v2579
  %2604 = vst.msk [vmem:[%s5 + $0x54] sm:$0xf] %vm1995, %v2580
  %2605 = vst.msk [vmem:[%s5 + $0x58] sm:$0xf] %vm1995, %v2581
  %2606 = vst.msk [vmem:[%s5 + $0x5c] sm:$0xf] %vm1995, %v2582
  // Predicated region
  $region22: #{cnn_policy_forward.2} parent=0 // pred_check
    _
  $region23: #{cnn_policy_forward.2} parent=0 // pred_check_branch
    %2608 = sbr.rel (0) target = $region25
  $region24: #{cnn_policy_forward.2} parent=0 // pred_region
    _
  $region25: #{cnn_policy_forward.2} parent=0 // pred_fallthru
    _
  // Predicated region
  $region26: #{cnn_policy_forward.2} parent=0 // pred_check
    _
  $region27: #{cnn_policy_forward.2} parent=0 // pred_check_branch
    %2610 = sbr.rel (0) target = $region29
  $region28: #{cnn_policy_forward.2} parent=0 // pred_region
    _
  $region29: #{cnn_policy_forward.2} parent=0 // pred_fallthru
    _

// kernel: cnn_policy_forward.3
$region0: #{cnn_policy_forward.3}
  #allocation0 [shape = 'u32[]', space=smem, size = 0x4, offset = 0x4, fixed_abs, tag = 'smem constant byte address 0x4 - core index']
  #allocation1 [shape = 'u32[144,128]{1,0:T(1,128)}', space=vmem, size = 0x12000, scoped, tag = 'internal scratch']
  %s0 = inlined_call_operand.vmem [shape: bf16[2,3072], index: 0, kind: input, shape index: {}]
  %s1 = inlined_call_operand.vmem [shape: bf16[3072,256], index: 1, kind: input, shape index: {}]
  %s2 = inlined_call_operand.vmem [shape: f32[1,256], index: 2, kind: input, shape index: {}]
  %s3 = inlined_call_operand.vmem [shape: bf16[256,128], index: 3, kind: input, shape index: {}]
  %s4 = inlined_call_operand.vmem [shape: f32[1,128], index: 4, kind: input, shape index: {}]
  %s5 = inlined_call_operand.hbm [shape: f32[2,128], index: 5, kind: output, shape index: {}]
  %s6 = sld [smem:[#allocation0]]
  $region30: #{cnn_policy_forward.3} parent=0
    _
  %s8 = ssub.s32 1, %s6
  %s9 = scalar_select 0, %s8, %s6
  $region1: #{cnn_policy_forward.3} parent=0
    #allocation2 [shape = 'u8[1024]{0}', space=vmem, size = 0x400, scoped, tag = 'output window, operand 0, single buffered']
    #allocation3 [shape = 's32[1]{0}', space=sflag, size = 0x4, scoped, tag = 'scoped memory for cnn_policy_forward.3']
    %10 = vsyncpa [#allocation3], 0
    // Predicated region
    $region2: #{cnn_policy_forward.3} parent=1 // pred_check
      _
    $region3: #{cnn_policy_forward.3} parent=1 // pred_check_branch
      %12 = sbr.rel (0) target = $region5
    $region4: #{cnn_policy_forward.3} parent=1 // pred_region
      _
    $region5: #{cnn_policy_forward.3} parent=1 // pred_fallthru
      _
    // Predicated region
    $region6: #{cnn_policy_forward.3} parent=1 // pred_check
      _
    $region7: #{cnn_policy_forward.3} parent=1 // pred_check_branch
      %14 = sbr.rel (0) target = $region9
    $region8: #{cnn_policy_forward.3} parent=1 // pred_region
      _
    $region9: #{cnn_policy_forward.3} parent=1 // pred_fallthru
      _
    // Predicated region
    $region10: #{cnn_policy_forward.3} parent=1 // pred_check
      _
    $region11: #{cnn_policy_forward.3} parent=1 // pred_check_branch
      %16 = sbr.rel (0) target = $region13
    $region12: #{cnn_policy_forward.3} parent=1 // pred_region
      _
    $region13: #{cnn_policy_forward.3} parent=1 // pred_fallthru
      _
    // Predicated region
    $region14: #{cnn_policy_forward.3} parent=1 // pred_check
      _
    $region15: #{cnn_policy_forward.3} parent=1 // pred_check_branch
      %18 = sbr.rel (0) target = $region17
    $region16: #{cnn_policy_forward.3} parent=1 // pred_region
      _
    $region17: #{cnn_policy_forward.3} parent=1 // pred_fallthru
      _
    // Predicated region
    $region18: #{cnn_policy_forward.3} parent=1 // pred_check
      _
    $region19: #{cnn_policy_forward.3} parent=1 // pred_check_branch
      %20 = sbr.rel (0) target = $region21
    $region20: #{cnn_policy_forward.3} parent=1 // pred_region
      _
    $region21: #{cnn_policy_forward.3} parent=1 // pred_fallthru
      _
    %v22 = vld [vmem:[%s0] sm:$0xff]
    %v23 = vld [vmem:[%s0 + $0x8] sm:$0xff]
    %v24 = vld [vmem:[%s0 + $0x10] sm:$0xff]
    %v25 = vld [vmem:[%s1] sm:$0xff]
    %v26 = vld [vmem:[%s1 + $0x8] sm:$0xff]
    %v27 = vld [vmem:[%s1 + $0x10] sm:$0xff]
    %v28 = vld [vmem:[%s1 + $0x18] sm:$0xff]
    %v29 = vld [vmem:[%s1 + $0x20] sm:$0xff]
    %v30 = vld [vmem:[%s1 + $0x28] sm:$0xff]
    %v31 = vld [vmem:[%s1 + $0x30] sm:$0xff]
    %v32 = vld [vmem:[%s1 + $0x38] sm:$0xff]
    %v33 = vld [vmem:[%s1 + $0x40] sm:$0xff]
    %v34 = vld [vmem:[%s1 + $0x48] sm:$0xff]
    %v35 = vld [vmem:[%s1 + $0x50] sm:$0xff]
    %v36 = vld [vmem:[%s1 + $0x58] sm:$0xff]
    %v37 = vld [vmem:[%s1 + $0x60] sm:$0xff]
    %v38 = vld [vmem:[%s1 + $0x68] sm:$0xff]
    %v39 = vld [vmem:[%s1 + $0x70] sm:$0xff]
    %v40 = vld [vmem:[%s1 + $0x78] sm:$0xff]
    %v41 = vld [vmem:[%s1 + $0x80] sm:$0xff]
    %v42 = vld [vmem:[%s1 + $0x88] sm:$0xff]
    %v43 = vld [vmem:[%s1 + $0x90] sm:$0xff]
    %v44 = vld [vmem:[%s1 + $0x98] sm:$0xff]
    %v45 = vld [vmem:[%s1 + $0xa0] sm:$0xff]
    %v46 = vld [vmem:[%s1 + $0xa8] sm:$0xff]
    %v47 = vld [vmem:[%s1 + $0xb0] sm:$0xff]
    %v48 = vld [vmem:[%s1 + $0xb8] sm:$0xff]
    %v49 = vld [vmem:[%s1 + $0xc0] sm:$0xff]
    %v50 = vld [vmem:[%s1 + $0xc8] sm:$0xff]
    %v51 = vld [vmem:[%s1 + $0xd0] sm:$0xff]
    %v52 = vld [vmem:[%s1 + $0xd8] sm:$0xff]
    %v53 = vld [vmem:[%s1 + $0xe0] sm:$0xff]
    %v54 = vld [vmem:[%s1 + $0xe8] sm:$0xff]
    %v55 = vld [vmem:[%s1 + $0xf0] sm:$0xff]
    %v56 = vld [vmem:[%s1 + $0xf8] sm:$0xff]
    %v57 = vld [vmem:[%s1 + $0x100] sm:$0xff]
    %v58 = vld [vmem:[%s1 + $0x108] sm:$0xff]
    %v59 = vld [vmem:[%s1 + $0x110] sm:$0xff]
    %v60 = vld [vmem:[%s1 + $0x118] sm:$0xff]
    %v61 = vld [vmem:[%s1 + $0x120] sm:$0xff]
    %v62 = vld [vmem:[%s1 + $0x128] sm:$0xff]
    %v63 = vld [vmem:[%s1 + $0x130] sm:$0xff]
    %v64 = vld [vmem:[%s1 + $0x138] sm:$0xff]
    %v65 = vld [vmem:[%s1 + $0x140] sm:$0xff]
    %v66 = vld [vmem:[%s1 + $0x148] sm:$0xff]
    %v67 = vld [vmem:[%s1 + $0x150] sm:$0xff]
    %v68 = vld [vmem:[%s1 + $0x158] sm:$0xff]
    %v69 = vld [vmem:[%s1 + $0x160] sm:$0xff]
    %v70 = vld [vmem:[%s1 + $0x168] sm:$0xff]
    %v71 = vld [vmem:[%s1 + $0x170] sm:$0xff]
    %v72 = vld [vmem:[%s1 + $0x178] sm:$0xff]
    %v73 = vld [vmem:[%s1 + $0x180] sm:$0xff]
    %v74 = vld [vmem:[%s1 + $0x188] sm:$0xff]
    %v75 = vld [vmem:[%s1 + $0x190] sm:$0xff]
    %v76 = vld [vmem:[%s1 + $0x198] sm:$0xff]
    %v77 = vld [vmem:[%s1 + $0x1a0] sm:$0xff]
    %v78 = vld [vmem:[%s1 + $0x1a8] sm:$0xff]
    %v79 = vld [vmem:[%s1 + $0x1b0] sm:$0xff]
    %v80 = vld [vmem:[%s1 + $0x1b8] sm:$0xff]
    %v81 = vld [vmem:[%s1 + $0x1c0] sm:$0xff]
    %v82 = vld [vmem:[%s1 + $0x1c8] sm:$0xff]
    %v83 = vld [vmem:[%s1 + $0x1d0] sm:$0xff]
    %v84 = vld [vmem:[%s1 + $0x1d8] sm:$0xff]
    %v85 = vld [vmem:[%s1 + $0x1e0] sm:$0xff]
    %v86 = vld [vmem:[%s1 + $0x1e8] sm:$0xff]
    %v87 = vld [vmem:[%s1 + $0x1f0] sm:$0xff]
    %v88 = vld [vmem:[%s1 + $0x1f8] sm:$0xff]
    %v89 = vld [vmem:[%s1 + $0x200] sm:$0xff]
    %v90 = vld [vmem:[%s1 + $0x208] sm:$0xff]
    %v91 = vld [vmem:[%s1 + $0x210] sm:$0xff]
    %v92 = vld [vmem:[%s1 + $0x218] sm:$0xff]
    %v93 = vld [vmem:[%s1 + $0x220] sm:$0xff]
    %v94 = vld [vmem:[%s1 + $0x228] sm:$0xff]
    %v95 = vld [vmem:[%s1 + $0x230] sm:$0xff]
    %v96 = vld [vmem:[%s1 + $0x238] sm:$0xff]
    %v97 = vld [vmem:[%s1 + $0x240] sm:$0xff]
    %v98 = vld [vmem:[%s1 + $0x248] sm:$0xff]
    %v99 = vld [vmem:[%s1 + $0x250] sm:$0xff]
    %v100 = vld [vmem:[%s1 + $0x258] sm:$0xff]
    %v101 = vld [vmem:[%s1 + $0x260] sm:$0xff]
    %v102 = vld [vmem:[%s1 + $0x268] sm:$0xff]
    %v103 = vld [vmem:[%s1 + $0x270] sm:$0xff]
    %v104 = vld [vmem:[%s1 + $0x278] sm:$0xff]
    %v105 = vld [vmem:[%s1 + $0x280] sm:$0xff]
    %v106 = vld [vmem:[%s1 + $0x288] sm:$0xff]
    %v107 = vld [vmem:[%s1 + $0x290] sm:$0xff]
    %v108 = vld [vmem:[%s1 + $0x298] sm:$0xff]
    %v109 = vld [vmem:[%s1 + $0x2a0] sm:$0xff]
    %v110 = vld [vmem:[%s1 + $0x2a8] sm:$0xff]
    %v111 = vld [vmem:[%s1 + $0x2b0] sm:$0xff]
    %v112 = vld [vmem:[%s1 + $0x2b8] sm:$0xff]
    %v113 = vld [vmem:[%s1 + $0x2c0] sm:$0xff]
    %v114 = vld [vmem:[%s1 + $0x2c8] sm:$0xff]
    %v115 = vld [vmem:[%s1 + $0x2d0] sm:$0xff]
    %v116 = vld [vmem:[%s1 + $0x2d8] sm:$0xff]
    %v117 = vld [vmem:[%s1 + $0x2e0] sm:$0xff]
    %v118 = vld [vmem:[%s1 + $0x2e8] sm:$0xff]
    %v119 = vld [vmem:[%s1 + $0x2f0] sm:$0xff]
    %v120 = vld [vmem:[%s1 + $0x2f8] sm:$0xff]
    %v121 = vld [vmem:[%s1 + $0x300] sm:$0xff]
    %v122 = vld [vmem:[%s1 + $0x308] sm:$0xff]
    %v123 = vld [vmem:[%s1 + $0x310] sm:$0xff]
    %v124 = vld [vmem:[%s1 + $0x318] sm:$0xff]
    %v125 = vld [vmem:[%s1 + $0x320] sm:$0xff]
    %v126 = vld [vmem:[%s1 + $0x328] sm:$0xff]
    %v127 = vld [vmem:[%s1 + $0x330] sm:$0xff]
    %v128 = vld [vmem:[%s1 + $0x338] sm:$0xff]
    %v129 = vld [vmem:[%s1 + $0x340] sm:$0xff]
    %v130 = vld [vmem:[%s1 + $0x348] sm:$0xff]
    %v131 = vld [vmem:[%s1 + $0x350] sm:$0xff]
    %v132 = vld [vmem:[%s1 + $0x358] sm:$0xff]
    %v133 = vld [vmem:[%s1 + $0x360] sm:$0xff]
    %v134 = vld [vmem:[%s1 + $0x368] sm:$0xff]
    %v135 = vld [vmem:[%s1 + $0x370] sm:$0xff]
    %v136 = vld [vmem:[%s1 + $0x378] sm:$0xff]
    %v137 = vld [vmem:[%s1 + $0x380] sm:$0xff]
    %v138 = vld [vmem:[%s1 + $0x388] sm:$0xff]
    %v139 = vld [vmem:[%s1 + $0x390] sm:$0xff]
    %v140 = vld [vmem:[%s1 + $0x398] sm:$0xff]
    %v141 = vld [vmem:[%s1 + $0x3a0] sm:$0xff]
    %v142 = vld [vmem:[%s1 + $0x3a8] sm:$0xff]
    %v143 = vld [vmem:[%s1 + $0x3b0] sm:$0xff]
    %v144 = vld [vmem:[%s1 + $0x3b8] sm:$0xff]
    %v145 = vld [vmem:[%s1 + $0x3c0] sm:$0xff]
    %v146 = vld [vmem:[%s1 + $0x3c8] sm:$0xff]
    %v147 = vld [vmem:[%s1 + $0x3d0] sm:$0xff]
    %v148 = vld [vmem:[%s1 + $0x3d8] sm:$0xff]
    %v149 = vld [vmem:[%s1 + $0x3e0] sm:$0xff]
    %v150 = vld [vmem:[%s1 + $0x3e8] sm:$0xff]
    %v151 = vld [vmem:[%s1 + $0x3f0] sm:$0xff]
    %v152 = vld [vmem:[%s1 + $0x3f8] sm:$0xff]
    %v153 = vld [vmem:[%s1 + $0x400] sm:$0xff]
    %v154 = vld [vmem:[%s1 + $0x408] sm:$0xff]
    %v155 = vld [vmem:[%s1 + $0x410] sm:$0xff]
    %v156 = vld [vmem:[%s1 + $0x418] sm:$0xff]
    %v157 = vld [vmem:[%s1 + $0x420] sm:$0xff]
    %v158 = vld [vmem:[%s1 + $0x428] sm:$0xff]
    %v159 = vld [vmem:[%s1 + $0x430] sm:$0xff]
    %v160 = vld [vmem:[%s1 + $0x438] sm:$0xff]
    %v161 = vld [vmem:[%s1 + $0x440] sm:$0xff]
    %v162 = vld [vmem:[%s1 + $0x448] sm:$0xff]
    %v163 = vld [vmem:[%s1 + $0x450] sm:$0xff]
    %v164 = vld [vmem:[%s1 + $0x458] sm:$0xff]
    %v165 = vld [vmem:[%s1 + $0x460] sm:$0xff]
    %v166 = vld [vmem:[%s1 + $0x468] sm:$0xff]
    %v167 = vld [vmem:[%s1 + $0x470] sm:$0xff]
    %v168 = vld [vmem:[%s1 + $0x478] sm:$0xff]
    %v169 = vld [vmem:[%s1 + $0x480] sm:$0xff]
    %v170 = vld [vmem:[%s1 + $0x488] sm:$0xff]
    %v171 = vld [vmem:[%s1 + $0x490] sm:$0xff]
    %v172 = vld [vmem:[%s1 + $0x498] sm:$0xff]
    %v173 = vld [vmem:[%s1 + $0x4a0] sm:$0xff]
    %v174 = vld [vmem:[%s1 + $0x4a8] sm:$0xff]
    %v175 = vld [vmem:[%s1 + $0x4b0] sm:$0xff]
    %v176 = vld [vmem:[%s1 + $0x4b8] sm:$0xff]
    %v177 = vld [vmem:[%s1 + $0x4c0] sm:$0xff]
    %v178 = vld [vmem:[%s1 + $0x4c8] sm:$0xff]
    %v179 = vld [vmem:[%s1 + $0x4d0] sm:$0xff]
    %v180 = vld [vmem:[%s1 + $0x4d8] sm:$0xff]
    %v181 = vld [vmem:[%s1 + $0x4e0] sm:$0xff]
    %v182 = vld [vmem:[%s1 + $0x4e8] sm:$0xff]
    %v183 = vld [vmem:[%s1 + $0x4f0] sm:$0xff]
    %v184 = vld [vmem:[%s1 + $0x4f8] sm:$0xff]
    %v185 = vld [vmem:[%s1 + $0x500] sm:$0xff]
    %v186 = vld [vmem:[%s1 + $0x508] sm:$0xff]
    %v187 = vld [vmem:[%s1 + $0x510] sm:$0xff]
    %v188 = vld [vmem:[%s1 + $0x518] sm:$0xff]
    %v189 = vld [vmem:[%s1 + $0x520] sm:$0xff]
    %v190 = vld [vmem:[%s1 + $0x528] sm:$0xff]
    %v191 = vld [vmem:[%s1 + $0x530] sm:$0xff]
    %v192 = vld [vmem:[%s1 + $0x538] sm:$0xff]
    %v193 = vld [vmem:[%s1 + $0x540] sm:$0xff]
    %v194 = vld [vmem:[%s1 + $0x548] sm:$0xff]
    %v195 = vld [vmem:[%s1 + $0x550] sm:$0xff]
    %v196 = vld [vmem:[%s1 + $0x558] sm:$0xff]
    %v197 = vld [vmem:[%s1 + $0x560] sm:$0xff]
    %v198 = vld [vmem:[%s1 + $0x568] sm:$0xff]
    %v199 = vld [vmem:[%s1 + $0x570] sm:$0xff]
    %v200 = vld [vmem:[%s1 + $0x578] sm:$0xff]
    %v201 = vld [vmem:[%s1 + $0x580] sm:$0xff]
    %v202 = vld [vmem:[%s1 + $0x588] sm:$0xff]
    %v203 = vld [vmem:[%s1 + $0x590] sm:$0xff]
    %v204 = vld [vmem:[%s1 + $0x598] sm:$0xff]
    %v205 = vld [vmem:[%s1 + $0x5a0] sm:$0xff]
    %v206 = vld [vmem:[%s1 + $0x5a8] sm:$0xff]
    %v207 = vld [vmem:[%s1 + $0x5b0] sm:$0xff]
    %v208 = vld [vmem:[%s1 + $0x5b8] sm:$0xff]
    %v209 = vld [vmem:[%s1 + $0x5c0] sm:$0xff]
    %v210 = vld [vmem:[%s1 + $0x5c8] sm:$0xff]
    %v211 = vld [vmem:[%s1 + $0x5d0] sm:$0xff]
    %v212 = vld [vmem:[%s1 + $0x5d8] sm:$0xff]
    %v213 = vld [vmem:[%s1 + $0x5e0] sm:$0xff]
    %v214 = vld [vmem:[%s1 + $0x5e8] sm:$0xff]
    %v215 = vld [vmem:[%s1 + $0x5f0] sm:$0xff]
    %v216 = vld [vmem:[%s1 + $0x5f8] sm:$0xff]
    %v217 = vld [vmem:[%s1 + $0x600] sm:$0xff]
    %v218 = vld [vmem:[%s1 + $0x608] sm:$0xff]
    %v219 = vld [vmem:[%s1 + $0x610] sm:$0xff]
    %v220 = vld [vmem:[%s1 + $0x618] sm:$0xff]
    %v221 = vld [vmem:[%s1 + $0x620] sm:$0xff]
    %v222 = vld [vmem:[%s1 + $0x628] sm:$0xff]
    %v223 = vld [vmem:[%s1 + $0x630] sm:$0xff]
    %v224 = vld [vmem:[%s1 + $0x638] sm:$0xff]
    %v225 = vld [vmem:[%s1 + $0x640] sm:$0xff]
    %v226 = vld [vmem:[%s1 + $0x648] sm:$0xff]
    %v227 = vld [vmem:[%s1 + $0x650] sm:$0xff]
    %v228 = vld [vmem:[%s1 + $0x658] sm:$0xff]
    %v229 = vld [vmem:[%s1 + $0x660] sm:$0xff]
    %v230 = vld [vmem:[%s1 + $0x668] sm:$0xff]
    %v231 = vld [vmem:[%s1 + $0x670] sm:$0xff]
    %v232 = vld [vmem:[%s1 + $0x678] sm:$0xff]
    %v233 = vld [vmem:[%s1 + $0x680] sm:$0xff]
    %v234 = vld [vmem:[%s1 + $0x688] sm:$0xff]
    %v235 = vld [vmem:[%s1 + $0x690] sm:$0xff]
    %v236 = vld [vmem:[%s1 + $0x698] sm:$0xff]
    %v237 = vld [vmem:[%s1 + $0x6a0] sm:$0xff]
    %v238 = vld [vmem:[%s1 + $0x6a8] sm:$0xff]
    %v239 = vld [vmem:[%s1 + $0x6b0] sm:$0xff]
    %v240 = vld [vmem:[%s1 + $0x6b8] sm:$0xff]
    %v241 = vld [vmem:[%s1 + $0x6c0] sm:$0xff]
    %v242 = vld [vmem:[%s1 + $0x6c8] sm:$0xff]
    %v243 = vld [vmem:[%s1 + $0x6d0] sm:$0xff]
    %v244 = vld [vmem:[%s1 + $0x6d8] sm:$0xff]
    %v245 = vld [vmem:[%s1 + $0x6e0] sm:$0xff]
    %v246 = vld [vmem:[%s1 + $0x6e8] sm:$0xff]
    %v247 = vld [vmem:[%s1 + $0x6f0] sm:$0xff]
    %v248 = vld [vmem:[%s1 + $0x6f8] sm:$0xff]
    %v249 = vld [vmem:[%s1 + $0x700] sm:$0xff]
    %v250 = vld [vmem:[%s1 + $0x708] sm:$0xff]
    %v251 = vld [vmem:[%s1 + $0x710] sm:$0xff]
    %v252 = vld [vmem:[%s1 + $0x718] sm:$0xff]
    %v253 = vld [vmem:[%s1 + $0x720] sm:$0xff]
    %v254 = vld [vmem:[%s1 + $0x728] sm:$0xff]
    %v255 = vld [vmem:[%s1 + $0x730] sm:$0xff]
    %v256 = vld [vmem:[%s1 + $0x738] sm:$0xff]
    %v257 = vld [vmem:[%s1 + $0x740] sm:$0xff]
    %v258 = vld [vmem:[%s1 + $0x748] sm:$0xff]
    %v259 = vld [vmem:[%s1 + $0x750] sm:$0xff]
    %v260 = vld [vmem:[%s1 + $0x758] sm:$0xff]
    %v261 = vld [vmem:[%s1 + $0x760] sm:$0xff]
    %v262 = vld [vmem:[%s1 + $0x768] sm:$0xff]
    %v263 = vld [vmem:[%s1 + $0x770] sm:$0xff]
    %v264 = vld [vmem:[%s1 + $0x778] sm:$0xff]
    %v265 = vld [vmem:[%s1 + $0x780] sm:$0xff]
    %v266 = vld [vmem:[%s1 + $0x788] sm:$0xff]
    %v267 = vld [vmem:[%s1 + $0x790] sm:$0xff]
    %v268 = vld [vmem:[%s1 + $0x798] sm:$0xff]
    %v269 = vld [vmem:[%s1 + $0x7a0] sm:$0xff]
    %v270 = vld [vmem:[%s1 + $0x7a8] sm:$0xff]
    %v271 = vld [vmem:[%s1 + $0x7b0] sm:$0xff]
    %v272 = vld [vmem:[%s1 + $0x7b8] sm:$0xff]
    %v273 = vld [vmem:[%s1 + $0x7c0] sm:$0xff]
    %v274 = vld [vmem:[%s1 + $0x7c8] sm:$0xff]
    %v275 = vld [vmem:[%s1 + $0x7d0] sm:$0xff]
    %v276 = vld [vmem:[%s1 + $0x7d8] sm:$0xff]
    %v277 = vld [vmem:[%s1 + $0x7e0] sm:$0xff]
    %v278 = vld [vmem:[%s1 + $0x7e8] sm:$0xff]
    %v279 = vld [vmem:[%s1 + $0x7f0] sm:$0xff]
    %v280 = vld [vmem:[%s1 + $0x7f8] sm:$0xff]
    %v281 = vld [vmem:[%s1 + $0x800] sm:$0xff]
    %v282 = vld [vmem:[%s1 + $0x808] sm:$0xff]
    %v283 = vld [vmem:[%s1 + $0x810] sm:$0xff]
    %v284 = vld [vmem:[%s1 + $0x818] sm:$0xff]
    %v285 = vld [vmem:[%s1 + $0x820] sm:$0xff]
    %v286 = vld [vmem:[%s1 + $0x828] sm:$0xff]
    %v287 = vld [vmem:[%s1 + $0x830] sm:$0xff]
    %v288 = vld [vmem:[%s1 + $0x838] sm:$0xff]
    %v289 = vld [vmem:[%s1 + $0x840] sm:$0xff]
    %v290 = vld [vmem:[%s1 + $0x848] sm:$0xff]
    %v291 = vld [vmem:[%s1 + $0x850] sm:$0xff]
    %v292 = vld [vmem:[%s1 + $0x858] sm:$0xff]
    %v293 = vld [vmem:[%s1 + $0x860] sm:$0xff]
    %v294 = vld [vmem:[%s1 + $0x868] sm:$0xff]
    %v295 = vld [vmem:[%s1 + $0x870] sm:$0xff]
    %v296 = vld [vmem:[%s1 + $0x878] sm:$0xff]
    %v297 = vld [vmem:[%s1 + $0x880] sm:$0xff]
    %v298 = vld [vmem:[%s1 + $0x888] sm:$0xff]
    %v299 = vld [vmem:[%s1 + $0x890] sm:$0xff]
    %v300 = vld [vmem:[%s1 + $0x898] sm:$0xff]
    %v301 = vld [vmem:[%s1 + $0x8a0] sm:$0xff]
    %v302 = vld [vmem:[%s1 + $0x8a8] sm:$0xff]
    %v303 = vld [vmem:[%s1 + $0x8b0] sm:$0xff]
    %v304 = vld [vmem:[%s1 + $0x8b8] sm:$0xff]
    %v305 = vld [vmem:[%s1 + $0x8c0] sm:$0xff]
    %v306 = vld [vmem:[%s1 + $0x8c8] sm:$0xff]
    %v307 = vld [vmem:[%s1 + $0x8d0] sm:$0xff]
    %v308 = vld [vmem:[%s1 + $0x8d8] sm:$0xff]
    %v309 = vld [vmem:[%s1 + $0x8e0] sm:$0xff]
    %v310 = vld [vmem:[%s1 + $0x8e8] sm:$0xff]
    %v311 = vld [vmem:[%s1 + $0x8f0] sm:$0xff]
    %v312 = vld [vmem:[%s1 + $0x8f8] sm:$0xff]
    %v313 = vld [vmem:[%s1 + $0x900] sm:$0xff]
    %v314 = vld [vmem:[%s1 + $0x908] sm:$0xff]
    %v315 = vld [vmem:[%s1 + $0x910] sm:$0xff]
    %v316 = vld [vmem:[%s1 + $0x918] sm:$0xff]
    %v317 = vld [vmem:[%s1 + $0x920] sm:$0xff]
    %v318 = vld [vmem:[%s1 + $0x928] sm:$0xff]
    %v319 = vld [vmem:[%s1 + $0x930] sm:$0xff]
    %v320 = vld [vmem:[%s1 + $0x938] sm:$0xff]
    %v321 = vld [vmem:[%s1 + $0x940] sm:$0xff]
    %v322 = vld [vmem:[%s1 + $0x948] sm:$0xff]
    %v323 = vld [vmem:[%s1 + $0x950] sm:$0xff]
    %v324 = vld [vmem:[%s1 + $0x958] sm:$0xff]
    %v325 = vld [vmem:[%s1 + $0x960] sm:$0xff]
    %v326 = vld [vmem:[%s1 + $0x968] sm:$0xff]
    %v327 = vld [vmem:[%s1 + $0x970] sm:$0xff]
    %v328 = vld [vmem:[%s1 + $0x978] sm:$0xff]
    %v329 = vld [vmem:[%s1 + $0x980] sm:$0xff]
    %v330 = vld [vmem:[%s1 + $0x988] sm:$0xff]
    %v331 = vld [vmem:[%s1 + $0x990] sm:$0xff]
    %v332 = vld [vmem:[%s1 + $0x998] sm:$0xff]
    %v333 = vld [vmem:[%s1 + $0x9a0] sm:$0xff]
    %v334 = vld [vmem:[%s1 + $0x9a8] sm:$0xff]
    %v335 = vld [vmem:[%s1 + $0x9b0] sm:$0xff]
    %v336 = vld [vmem:[%s1 + $0x9b8] sm:$0xff]
    %v337 = vld [vmem:[%s1 + $0x9c0] sm:$0xff]
    %v338 = vld [vmem:[%s1 + $0x9c8] sm:$0xff]
    %v339 = vld [vmem:[%s1 + $0x9d0] sm:$0xff]
    %v340 = vld [vmem:[%s1 + $0x9d8] sm:$0xff]
    %v341 = vld [vmem:[%s1 + $0x9e0] sm:$0xff]
    %v342 = vld [vmem:[%s1 + $0x9e8] sm:$0xff]
    %v343 = vld [vmem:[%s1 + $0x9f0] sm:$0xff]
    %v344 = vld [vmem:[%s1 + $0x9f8] sm:$0xff]
    %v345 = vld [vmem:[%s1 + $0xa00] sm:$0xff]
    %v346 = vld [vmem:[%s1 + $0xa08] sm:$0xff]
    %v347 = vld [vmem:[%s1 + $0xa10] sm:$0xff]
    %v348 = vld [vmem:[%s1 + $0xa18] sm:$0xff]
    %v349 = vld [vmem:[%s1 + $0xa20] sm:$0xff]
    %v350 = vld [vmem:[%s1 + $0xa28] sm:$0xff]
    %v351 = vld [vmem:[%s1 + $0xa30] sm:$0xff]
    %v352 = vld [vmem:[%s1 + $0xa38] sm:$0xff]
    %v353 = vld [vmem:[%s1 + $0xa40] sm:$0xff]
    %v354 = vld [vmem:[%s1 + $0xa48] sm:$0xff]
    %v355 = vld [vmem:[%s1 + $0xa50] sm:$0xff]
    %v356 = vld [vmem:[%s1 + $0xa58] sm:$0xff]
    %v357 = vld [vmem:[%s1 + $0xa60] sm:$0xff]
    %v358 = vld [vmem:[%s1 + $0xa68] sm:$0xff]
    %v359 = vld [vmem:[%s1 + $0xa70] sm:$0xff]
    %v360 = vld [vmem:[%s1 + $0xa78] sm:$0xff]
    %v361 = vld [vmem:[%s1 + $0xa80] sm:$0xff]
    %v362 = vld [vmem:[%s1 + $0xa88] sm:$0xff]
    %v363 = vld [vmem:[%s1 + $0xa90] sm:$0xff]
    %v364 = vld [vmem:[%s1 + $0xa98] sm:$0xff]
    %v365 = vld [vmem:[%s1 + $0xaa0] sm:$0xff]
    %v366 = vld [vmem:[%s1 + $0xaa8] sm:$0xff]
    %v367 = vld [vmem:[%s1 + $0xab0] sm:$0xff]
    %v368 = vld [vmem:[%s1 + $0xab8] sm:$0xff]
    %v369 = vld [vmem:[%s1 + $0xac0] sm:$0xff]
    %v370 = vld [vmem:[%s1 + $0xac8] sm:$0xff]
    %v371 = vld [vmem:[%s1 + $0xad0] sm:$0xff]
    %v372 = vld [vmem:[%s1 + $0xad8] sm:$0xff]
    %v373 = vld [vmem:[%s1 + $0xae0] sm:$0xff]
    %v374 = vld [vmem:[%s1 + $0xae8] sm:$0xff]
    %v375 = vld [vmem:[%s1 + $0xaf0] sm:$0xff]
    %v376 = vld [vmem:[%s1 + $0xaf8] sm:$0xff]
    %v377 = vld [vmem:[%s1 + $0xb00] sm:$0xff]
    %v378 = vld [vmem:[%s1 + $0xb08] sm:$0xff]
    %v379 = vld [vmem:[%s1 + $0xb10] sm:$0xff]
    %v380 = vld [vmem:[%s1 + $0xb18] sm:$0xff]
    %v381 = vld [vmem:[%s1 + $0xb20] sm:$0xff]
    %v382 = vld [vmem:[%s1 + $0xb28] sm:$0xff]
    %v383 = vld [vmem:[%s1 + $0xb30] sm:$0xff]
    %v384 = vld [vmem:[%s1 + $0xb38] sm:$0xff]
    %v385 = vld [vmem:[%s1 + $0xb40] sm:$0xff]
    %v386 = vld [vmem:[%s1 + $0xb48] sm:$0xff]
    %v387 = vld [vmem:[%s1 + $0xb50] sm:$0xff]
    %v388 = vld [vmem:[%s1 + $0xb58] sm:$0xff]
    %v389 = vld [vmem:[%s1 + $0xb60] sm:$0xff]
    %v390 = vld [vmem:[%s1 + $0xb68] sm:$0xff]
    %v391 = vld [vmem:[%s1 + $0xb70] sm:$0xff]
    %v392 = vld [vmem:[%s1 + $0xb78] sm:$0xff]
    %v393 = vld [vmem:[%s1 + $0xb80] sm:$0xff]
    %v394 = vld [vmem:[%s1 + $0xb88] sm:$0xff]
    %v395 = vld [vmem:[%s1 + $0xb90] sm:$0xff]
    %v396 = vld [vmem:[%s1 + $0xb98] sm:$0xff]
    %v397 = vld [vmem:[%s1 + $0xba0] sm:$0xff]
    %v398 = vld [vmem:[%s1 + $0xba8] sm:$0xff]
    %v399 = vld [vmem:[%s1 + $0xbb0] sm:$0xff]
    %v400 = vld [vmem:[%s1 + $0xbb8] sm:$0xff]
    %v401 = vld [vmem:[%s1 + $0xbc0] sm:$0xff]
    %v402 = vld [vmem:[%s1 + $0xbc8] sm:$0xff]
    %v403 = vld [vmem:[%s1 + $0xbd0] sm:$0xff]
    %v404 = vld [vmem:[%s1 + $0xbd8] sm:$0xff]
    %v405 = vld [vmem:[%s1 + $0xbe0] sm:$0xff]
    %v406 = vld [vmem:[%s1 + $0xbe8] sm:$0xff]
    %v407 = vld [vmem:[%s1 + $0xbf0] sm:$0xff]
    %v408 = vld [vmem:[%s1 + $0xbf8] sm:$0xff]
    %v409 = vld [vmem:[%s2] sm:$0x3]
    %v411 = vlaneseq
    %v412 = vshrl.u32 %v411, 7
    %v413 = vsub.s32 0, %v412
    %v414 = vrot.slane %v409, %v413
    %v415 = vlaneseq
    %v416 = vshrl.u32 %v415, 7
    %v417 = vsub.s32 1, %v416
    %v418 = vrot.slane %v409, %v417
    %v424 = vcombine.high %v22, %v22
    %v426 = vunpack.c.l.s4 1966171168
    %v427 = vunpack.c.0.s8 %v426
    %v428 = vlaneseq
    %v429 = vshrl.u32 %v428, 7
    %v430 = vsub.s32 %v427, %v429
    %v431 = vrot.slane %v22, %v430
    %v433 = vunpack.c.l.s4 1966171168
    %v434 = vunpack.c.0.s8 %v433
    %v435 = vlaneseq
    %v436 = vshrl.u32 %v435, 7
    %v437 = vsub.s32 %v434, %v436
    %v438 = vrot.slane %v424, %v437
    %v439 = vcombine.high %v431, %v431
    %v440 = vcombine.high %v438, %v438
    %v442 = vunpack.c.l.s4 1966171168
    %v443 = vunpack.c.0.s8 %v442
    %v444 = vlaneseq
    %v445 = vshrl.u32 %v444, 7
    %v446 = vsub.s32 %v443, %v445
    %v447 = vrot.slane %v431, %v446
    %v449 = vunpack.c.l.s4 1966171168
    %v450 = vunpack.c.0.s8 %v449
    %v451 = vlaneseq
    %v452 = vshrl.u32 %v451, 7
    %v453 = vsub.s32 %v450, %v452
    %v454 = vrot.slane %v438, %v453
    %v456 = vunpack.c.l.s4 1966171168
    %v457 = vunpack.c.0.s8 %v456
    %v458 = vlaneseq
    %v459 = vshrl.u32 %v458, 7
    %v460 = vsub.s32 %v457, %v459
    %v461 = vrot.slane %v439, %v460
    %v463 = vunpack.c.l.s4 1966171168
    %v464 = vunpack.c.0.s8 %v463
    %v465 = vlaneseq
    %v466 = vshrl.u32 %v465, 7
    %v467 = vsub.s32 %v464, %v466
    %v468 = vrot.slane %v440, %v467
    %v469 = vcombine.high %v447, %v447
    %v470 = vcombine.high %v454, %v454
    %v471 = vcombine.high %v461, %v461
    %v472 = vcombine.high %v468, %v468
    %v473 = vcombine.high %v23, %v23
    %v475 = vunpack.c.l.s4 1966171168
    %v476 = vunpack.c.0.s8 %v475
    %v477 = vlaneseq
    %v478 = vshrl.u32 %v477, 7
    %v479 = vsub.s32 %v476, %v478
    %v480 = vrot.slane %v23, %v479
    %v482 = vunpack.c.l.s4 1966171168
    %v483 = vunpack.c.0.s8 %v482
    %v484 = vlaneseq
    %v485 = vshrl.u32 %v484, 7
    %v486 = vsub.s32 %v483, %v485
    %v487 = vrot.slane %v473, %v486
    %v488 = vcombine.high %v480, %v480
    %v489 = vcombine.high %v487, %v487
    %v491 = vunpack.c.l.s4 1966171168
    %v492 = vunpack.c.0.s8 %v491
    %v493 = vlaneseq
    %v494 = vshrl.u32 %v493, 7
    %v495 = vsub.s32 %v492, %v494
    %v496 = vrot.slane %v480, %v495
    %v498 = vunpack.c.l.s4 1966171168
    %v499 = vunpack.c.0.s8 %v498
    %v500 = vlaneseq
    %v501 = vshrl.u32 %v500, 7
    %v502 = vsub.s32 %v499, %v501
    %v503 = vrot.slane %v487, %v502
    %v505 = vunpack.c.l.s4 1966171168
    %v506 = vunpack.c.0.s8 %v505
    %v507 = vlaneseq
    %v508 = vshrl.u32 %v507, 7
    %v509 = vsub.s32 %v506, %v508
    %v510 = vrot.slane %v488, %v509
    %v512 = vunpack.c.l.s4 1966171168
    %v513 = vunpack.c.0.s8 %v512
    %v514 = vlaneseq
    %v515 = vshrl.u32 %v514, 7
    %v516 = vsub.s32 %v513, %v515
    %v517 = vrot.slane %v489, %v516
    %v518 = vcombine.high %v496, %v496
    %v519 = vcombine.high %v503, %v503
    %v520 = vcombine.high %v510, %v510
    %v521 = vcombine.high %v517, %v517
    %v522 = vcombine.high %v24, %v24
    %v524 = vunpack.c.l.s4 1966171168
    %v525 = vunpack.c.0.s8 %v524
    %v526 = vlaneseq
    %v527 = vshrl.u32 %v526, 7
    %v528 = vsub.s32 %v525, %v527
    %v529 = vrot.slane %v24, %v528
    %v531 = vunpack.c.l.s4 1966171168
    %v532 = vunpack.c.0.s8 %v531
    %v533 = vlaneseq
    %v534 = vshrl.u32 %v533, 7
    %v535 = vsub.s32 %v532, %v534
    %v536 = vrot.slane %v522, %v535
    %v537 = vcombine.high %v529, %v529
    %v538 = vcombine.high %v536, %v536
    %v540 = vunpack.c.l.s4 1966171168
    %v541 = vunpack.c.0.s8 %v540
    %v542 = vlaneseq
    %v543 = vshrl.u32 %v542, 7
    %v544 = vsub.s32 %v541, %v543
    %v545 = vrot.slane %v529, %v544
    %v547 = vunpack.c.l.s4 1966171168
    %v548 = vunpack.c.0.s8 %v547
    %v549 = vlaneseq
    %v550 = vshrl.u32 %v549, 7
    %v551 = vsub.s32 %v548, %v550
    %v552 = vrot.slane %v536, %v551
    %v554 = vunpack.c.l.s4 1966171168
    %v555 = vunpack.c.0.s8 %v554
    %v556 = vlaneseq
    %v557 = vshrl.u32 %v556, 7
    %v558 = vsub.s32 %v555, %v557
    %v559 = vrot.slane %v537, %v558
    %v561 = vunpack.c.l.s4 1966171168
    %v562 = vunpack.c.0.s8 %v561
    %v563 = vlaneseq
    %v564 = vshrl.u32 %v563, 7
    %v565 = vsub.s32 %v562, %v564
    %v566 = vrot.slane %v538, %v565
    %v567 = vcombine.high %v545, %v545
    %v568 = vcombine.high %v552, %v552
    %v569 = vcombine.high %v559, %v559
    %v570 = vcombine.high %v566, %v566
    %v979 = vunpack.c.l.b16 %v25
    %v980 = vunpack.c.h.b16 %v25
    %v981 = vunpack.c.l.b16 %v26
    %v982 = vunpack.c.h.b16 %v26
    %v983 = vunpack.c.l.b16 %v27
    %v984 = vunpack.c.h.b16 %v27
    %v985 = vunpack.c.l.b16 %v28
    %v986 = vunpack.c.h.b16 %v28
    %v987 = vunpack.c.l.b16 %v29
    %v988 = vunpack.c.h.b16 %v29
    %v989 = vunpack.c.l.b16 %v30
    %v990 = vunpack.c.h.b16 %v30
    %v991 = vunpack.c.l.b16 %v31
    %v992 = vunpack.c.h.b16 %v31
    %v993 = vunpack.c.l.b16 %v32
    %v994 = vunpack.c.h.b16 %v32
    %v995 = vunpack.c.l.b16 %v33
    %v996 = vunpack.c.h.b16 %v33
    %v997 = vunpack.c.l.b16 %v34
    %v998 = vunpack.c.h.b16 %v34
    %v999 = vunpack.c.l.b16 %v35
    %v1000 = vunpack.c.h.b16 %v35
    %v1001 = vunpack.c.l.b16 %v36
    %v1002 = vunpack.c.h.b16 %v36
    %v1003 = vunpack.c.l.b16 %v37
    %v1004 = vunpack.c.h.b16 %v37
    %v1005 = vunpack.c.l.b16 %v38
    %v1006 = vunpack.c.h.b16 %v38
    %v1007 = vunpack.c.l.b16 %v39
    %v1008 = vunpack.c.h.b16 %v39
    %v1009 = vunpack.c.l.b16 %v40
    %v1010 = vunpack.c.h.b16 %v40
    %v1011 = vunpack.c.l.b16 %v41
    %v1012 = vunpack.c.h.b16 %v41
    %v1013 = vunpack.c.l.b16 %v42
    %v1014 = vunpack.c.h.b16 %v42
    %v1015 = vunpack.c.l.b16 %v43
    %v1016 = vunpack.c.h.b16 %v43
    %v1017 = vunpack.c.l.b16 %v44
    %v1018 = vunpack.c.h.b16 %v44
    %v1019 = vunpack.c.l.b16 %v45
    %v1020 = vunpack.c.h.b16 %v45
    %v1021 = vunpack.c.l.b16 %v46
    %v1022 = vunpack.c.h.b16 %v46
    %v1023 = vunpack.c.l.b16 %v47
    %v1024 = vunpack.c.h.b16 %v47
    %v1025 = vunpack.c.l.b16 %v48
    %v1026 = vunpack.c.h.b16 %v48
    %v1027 = vunpack.c.l.b16 %v49
    %v1028 = vunpack.c.h.b16 %v49
    %v1029 = vunpack.c.l.b16 %v50
    %v1030 = vunpack.c.h.b16 %v50
    %v1031 = vunpack.c.l.b16 %v51
    %v1032 = vunpack.c.h.b16 %v51
    %v1033 = vunpack.c.l.b16 %v52
    %v1034 = vunpack.c.h.b16 %v52
    %v1035 = vunpack.c.l.b16 %v53
    %v1036 = vunpack.c.h.b16 %v53
    %v1037 = vunpack.c.l.b16 %v54
    %v1038 = vunpack.c.h.b16 %v54
    %v1039 = vunpack.c.l.b16 %v55
    %v1040 = vunpack.c.h.b16 %v55
    %v1041 = vunpack.c.l.b16 %v56
    %v1042 = vunpack.c.h.b16 %v56
    %v1043 = vunpack.c.l.b16 %v57
    %v1044 = vunpack.c.h.b16 %v57
    %v1045 = vunpack.c.l.b16 %v58
    %v1046 = vunpack.c.h.b16 %v58
    %v1047 = vunpack.c.l.b16 %v59
    %v1048 = vunpack.c.h.b16 %v59
    %v1049 = vunpack.c.l.b16 %v60
    %v1050 = vunpack.c.h.b16 %v60
    %v1051 = vunpack.c.l.b16 %v61
    %v1052 = vunpack.c.h.b16 %v61
    %v1053 = vunpack.c.l.b16 %v62
    %v1054 = vunpack.c.h.b16 %v62
    %v1055 = vunpack.c.l.b16 %v63
    %v1056 = vunpack.c.h.b16 %v63
    %v1057 = vunpack.c.l.b16 %v64
    %v1058 = vunpack.c.h.b16 %v64
    %v1059 = vunpack.c.l.b16 %v65
    %v1060 = vunpack.c.h.b16 %v65
    %v1061 = vunpack.c.l.b16 %v66
    %v1062 = vunpack.c.h.b16 %v66
    %v1063 = vunpack.c.l.b16 %v67
    %v1064 = vunpack.c.h.b16 %v67
    %v1065 = vunpack.c.l.b16 %v68
    %v1066 = vunpack.c.h.b16 %v68
    %v1067 = vunpack.c.l.b16 %v69
    %v1068 = vunpack.c.h.b16 %v69
    %v1069 = vunpack.c.l.b16 %v70
    %v1070 = vunpack.c.h.b16 %v70
    %v1071 = vunpack.c.l.b16 %v71
    %v1072 = vunpack.c.h.b16 %v71
    %v1073 = vunpack.c.l.b16 %v72
    %v1074 = vunpack.c.h.b16 %v72
    %v1075 = vunpack.c.l.b16 %v73
    %v1076 = vunpack.c.h.b16 %v73
    %v1077 = vunpack.c.l.b16 %v74
    %v1078 = vunpack.c.h.b16 %v74
    %v1079 = vunpack.c.l.b16 %v75
    %v1080 = vunpack.c.h.b16 %v75
    %v1081 = vunpack.c.l.b16 %v76
    %v1082 = vunpack.c.h.b16 %v76
    %v1083 = vunpack.c.l.b16 %v77
    %v1084 = vunpack.c.h.b16 %v77
    %v1085 = vunpack.c.l.b16 %v78
    %v1086 = vunpack.c.h.b16 %v78
    %v1087 = vunpack.c.l.b16 %v79
    %v1088 = vunpack.c.h.b16 %v79
    %v1089 = vunpack.c.l.b16 %v80
    %v1090 = vunpack.c.h.b16 %v80
    %v1091 = vunpack.c.l.b16 %v81
    %v1092 = vunpack.c.h.b16 %v81
    %v1093 = vunpack.c.l.b16 %v82
    %v1094 = vunpack.c.h.b16 %v82
    %v1095 = vunpack.c.l.b16 %v83
    %v1096 = vunpack.c.h.b16 %v83
    %v1097 = vunpack.c.l.b16 %v84
    %v1098 = vunpack.c.h.b16 %v84
    %v1099 = vunpack.c.l.b16 %v85
    %v1100 = vunpack.c.h.b16 %v85
    %v1101 = vunpack.c.l.b16 %v86
    %v1102 = vunpack.c.h.b16 %v86
    %v1103 = vunpack.c.l.b16 %v87
    %v1104 = vunpack.c.h.b16 %v87
    %v1105 = vunpack.c.l.b16 %v88
    %v1106 = vunpack.c.h.b16 %v88
    %v1107 = vunpack.c.l.b16 %v89
    %v1108 = vunpack.c.h.b16 %v89
    %v1109 = vunpack.c.l.b16 %v90
    %v1110 = vunpack.c.h.b16 %v90
    %v1111 = vunpack.c.l.b16 %v91
    %v1112 = vunpack.c.h.b16 %v91
    %v1113 = vunpack.c.l.b16 %v92
    %v1114 = vunpack.c.h.b16 %v92
    %v1115 = vunpack.c.l.b16 %v93
    %v1116 = vunpack.c.h.b16 %v93
    %v1117 = vunpack.c.l.b16 %v94
    %v1118 = vunpack.c.h.b16 %v94
    %v1119 = vunpack.c.l.b16 %v95
    %v1120 = vunpack.c.h.b16 %v95
    %v1121 = vunpack.c.l.b16 %v96
    %v1122 = vunpack.c.h.b16 %v96
    %v1123 = vunpack.c.l.b16 %v97
    %v1124 = vunpack.c.h.b16 %v97
    %v1125 = vunpack.c.l.b16 %v98
    %v1126 = vunpack.c.h.b16 %v98
    %v1127 = vunpack.c.l.b16 %v99
    %v1128 = vunpack.c.h.b16 %v99
    %v1129 = vunpack.c.l.b16 %v100
    %v1130 = vunpack.c.h.b16 %v100
    %v1131 = vunpack.c.l.b16 %v101
    %v1132 = vunpack.c.h.b16 %v101
    %v1133 = vunpack.c.l.b16 %v102
    %v1134 = vunpack.c.h.b16 %v102
    %v1135 = vunpack.c.l.b16 %v103
    %v1136 = vunpack.c.h.b16 %v103
    %v1137 = vunpack.c.l.b16 %v104
    %v1138 = vunpack.c.h.b16 %v104
    %v1139 = vunpack.c.l.b16 %v105
    %v1140 = vunpack.c.h.b16 %v105
    %v1141 = vunpack.c.l.b16 %v106
    %v1142 = vunpack.c.h.b16 %v106
    %v1143 = vunpack.c.l.b16 %v107
    %v1144 = vunpack.c.h.b16 %v107
    %v1145 = vunpack.c.l.b16 %v108
    %v1146 = vunpack.c.h.b16 %v108
    %v1147 = vunpack.c.l.b16 %v109
    %v1148 = vunpack.c.h.b16 %v109
    %v1149 = vunpack.c.l.b16 %v110
    %v1150 = vunpack.c.h.b16 %v110
    %v1151 = vunpack.c.l.b16 %v111
    %v1152 = vunpack.c.h.b16 %v111
    %v1153 = vunpack.c.l.b16 %v112
    %v1154 = vunpack.c.h.b16 %v112
    %v1155 = vunpack.c.l.b16 %v113
    %v1156 = vunpack.c.h.b16 %v113
    %v1157 = vunpack.c.l.b16 %v114
    %v1158 = vunpack.c.h.b16 %v114
    %v1159 = vunpack.c.l.b16 %v115
    %v1160 = vunpack.c.h.b16 %v115
    %v1161 = vunpack.c.l.b16 %v116
    %v1162 = vunpack.c.h.b16 %v116
    %v1163 = vunpack.c.l.b16 %v117
    %v1164 = vunpack.c.h.b16 %v117
    %v1165 = vunpack.c.l.b16 %v118
    %v1166 = vunpack.c.h.b16 %v118
    %v1167 = vunpack.c.l.b16 %v119
    %v1168 = vunpack.c.h.b16 %v119
    %v1169 = vunpack.c.l.b16 %v120
    %v1170 = vunpack.c.h.b16 %v120
    %v1171 = vunpack.c.l.b16 %v121
    %v1172 = vunpack.c.h.b16 %v121
    %v1173 = vunpack.c.l.b16 %v122
    %v1174 = vunpack.c.h.b16 %v122
    %v1175 = vunpack.c.l.b16 %v123
    %v1176 = vunpack.c.h.b16 %v123
    %v1177 = vunpack.c.l.b16 %v124
    %v1178 = vunpack.c.h.b16 %v124
    %v1179 = vunpack.c.l.b16 %v125
    %v1180 = vunpack.c.h.b16 %v125
    %v1181 = vunpack.c.l.b16 %v126
    %v1182 = vunpack.c.h.b16 %v126
    %v1183 = vunpack.c.l.b16 %v127
    %v1184 = vunpack.c.h.b16 %v127
    %v1185 = vunpack.c.l.b16 %v128
    %v1186 = vunpack.c.h.b16 %v128
    %v1187 = vunpack.c.l.b16 %v129
    %v1188 = vunpack.c.h.b16 %v129
    %v1189 = vunpack.c.l.b16 %v130
    %v1190 = vunpack.c.h.b16 %v130
    %v1191 = vunpack.c.l.b16 %v131
    %v1192 = vunpack.c.h.b16 %v131
    %v1193 = vunpack.c.l.b16 %v132
    %v1194 = vunpack.c.h.b16 %v132
    %v1195 = vunpack.c.l.b16 %v133
    %v1196 = vunpack.c.h.b16 %v133
    %v1197 = vunpack.c.l.b16 %v134
    %v1198 = vunpack.c.h.b16 %v134
    %v1199 = vunpack.c.l.b16 %v135
    %v1200 = vunpack.c.h.b16 %v135
    %v1201 = vunpack.c.l.b16 %v136
    %v1202 = vunpack.c.h.b16 %v136
    %v1203 = vunpack.c.l.b16 %v137
    %v1204 = vunpack.c.h.b16 %v137
    %v1205 = vunpack.c.l.b16 %v138
    %v1206 = vunpack.c.h.b16 %v138
    %v1207 = vunpack.c.l.b16 %v139
    %v1208 = vunpack.c.h.b16 %v139
    %v1209 = vunpack.c.l.b16 %v140
    %v1210 = vunpack.c.h.b16 %v140
    %v1211 = vunpack.c.l.b16 %v141
    %v1212 = vunpack.c.h.b16 %v141
    %v1213 = vunpack.c.l.b16 %v142
    %v1214 = vunpack.c.h.b16 %v142
    %v1215 = vunpack.c.l.b16 %v143
    %v1216 = vunpack.c.h.b16 %v143
    %v1217 = vunpack.c.l.b16 %v144
    %v1218 = vunpack.c.h.b16 %v144
    %v1219 = vunpack.c.l.b16 %v145
    %v1220 = vunpack.c.h.b16 %v145
    %v1221 = vunpack.c.l.b16 %v146
    %v1222 = vunpack.c.h.b16 %v146
    %v1223 = vunpack.c.l.b16 %v147
    %v1224 = vunpack.c.h.b16 %v147
    %v1225 = vunpack.c.l.b16 %v148
    %v1226 = vunpack.c.h.b16 %v148
    %v1227 = vunpack.c.l.b16 %v149
    %v1228 = vunpack.c.h.b16 %v149
    %v1229 = vunpack.c.l.b16 %v150
    %v1230 = vunpack.c.h.b16 %v150
    %v1231 = vunpack.c.l.b16 %v151
    %v1232 = vunpack.c.h.b16 %v151
    %v1233 = vunpack.c.l.b16 %v152
    %v1234 = vunpack.c.h.b16 %v152
    %v1235 = vunpack.c.l.b16 %v153
    %v1236 = vunpack.c.h.b16 %v153
    %v1237 = vunpack.c.l.b16 %v154
    %v1238 = vunpack.c.h.b16 %v154
    %v1239 = vunpack.c.l.b16 %v155
    %v1240 = vunpack.c.h.b16 %v155
    %v1241 = vunpack.c.l.b16 %v156
    %v1242 = vunpack.c.h.b16 %v156
    %v1243 = vunpack.c.l.b16 %v157
    %v1244 = vunpack.c.h.b16 %v157
    %v1245 = vunpack.c.l.b16 %v158
    %v1246 = vunpack.c.h.b16 %v158
    %v1247 = vunpack.c.l.b16 %v159
    %v1248 = vunpack.c.h.b16 %v159
    %v1249 = vunpack.c.l.b16 %v160
    %v1250 = vunpack.c.h.b16 %v160
    %v1251 = vunpack.c.l.b16 %v161
    %v1252 = vunpack.c.h.b16 %v161
    %v1253 = vunpack.c.l.b16 %v162
    %v1254 = vunpack.c.h.b16 %v162
    %v1255 = vunpack.c.l.b16 %v163
    %v1256 = vunpack.c.h.b16 %v163
    %v1257 = vunpack.c.l.b16 %v164
    %v1258 = vunpack.c.h.b16 %v164
    %v1259 = vunpack.c.l.b16 %v165
    %v1260 = vunpack.c.h.b16 %v165
    %v1261 = vunpack.c.l.b16 %v166
    %v1262 = vunpack.c.h.b16 %v166
    %v1263 = vunpack.c.l.b16 %v167
    %v1264 = vunpack.c.h.b16 %v167
    %v1265 = vunpack.c.l.b16 %v168
    %v1266 = vunpack.c.h.b16 %v168
    %v1267 = vunpack.c.l.b16 %v169
    %v1268 = vunpack.c.h.b16 %v169
    %v1269 = vunpack.c.l.b16 %v170
    %v1270 = vunpack.c.h.b16 %v170
    %v1271 = vunpack.c.l.b16 %v171
    %v1272 = vunpack.c.h.b16 %v171
    %v1273 = vunpack.c.l.b16 %v172
    %v1274 = vunpack.c.h.b16 %v172
    %v1275 = vunpack.c.l.b16 %v173
    %v1276 = vunpack.c.h.b16 %v173
    %v1277 = vunpack.c.l.b16 %v174
    %v1278 = vunpack.c.h.b16 %v174
    %v1279 = vunpack.c.l.b16 %v175
    %v1280 = vunpack.c.h.b16 %v175
    %v1281 = vunpack.c.l.b16 %v176
    %v1282 = vunpack.c.h.b16 %v176
    %v1283 = vunpack.c.l.b16 %v177
    %v1284 = vunpack.c.h.b16 %v177
    %v1285 = vunpack.c.l.b16 %v178
    %v1286 = vunpack.c.h.b16 %v178
    %v1287 = vunpack.c.l.b16 %v179
    %v1288 = vunpack.c.h.b16 %v179
    %v1289 = vunpack.c.l.b16 %v180
    %v1290 = vunpack.c.h.b16 %v180
    %v1291 = vunpack.c.l.b16 %v181
    %v1292 = vunpack.c.h.b16 %v181
    %v1293 = vunpack.c.l.b16 %v182
    %v1294 = vunpack.c.h.b16 %v182
    %v1295 = vunpack.c.l.b16 %v183
    %v1296 = vunpack.c.h.b16 %v183
    %v1297 = vunpack.c.l.b16 %v184
    %v1298 = vunpack.c.h.b16 %v184
    %v1299 = vunpack.c.l.b16 %v185
    %v1300 = vunpack.c.h.b16 %v185
    %v1301 = vunpack.c.l.b16 %v186
    %v1302 = vunpack.c.h.b16 %v186
    %v1303 = vunpack.c.l.b16 %v187
    %v1304 = vunpack.c.h.b16 %v187
    %v1305 = vunpack.c.l.b16 %v188
    %v1306 = vunpack.c.h.b16 %v188
    %v1307 = vunpack.c.l.b16 %v189
    %v1308 = vunpack.c.h.b16 %v189
    %v1309 = vunpack.c.l.b16 %v190
    %v1310 = vunpack.c.h.b16 %v190
    %v1311 = vunpack.c.l.b16 %v191
    %v1312 = vunpack.c.h.b16 %v191
    %v1313 = vunpack.c.l.b16 %v192
    %v1314 = vunpack.c.h.b16 %v192
    %v1315 = vunpack.c.l.b16 %v193
    %v1316 = vunpack.c.h.b16 %v193
    %v1317 = vunpack.c.l.b16 %v194
    %v1318 = vunpack.c.h.b16 %v194
    %v1319 = vunpack.c.l.b16 %v195
    %v1320 = vunpack.c.h.b16 %v195
    %v1321 = vunpack.c.l.b16 %v196
    %v1322 = vunpack.c.h.b16 %v196
    %v1323 = vunpack.c.l.b16 %v197
    %v1324 = vunpack.c.h.b16 %v197
    %v1325 = vunpack.c.l.b16 %v198
    %v1326 = vunpack.c.h.b16 %v198
    %v1327 = vunpack.c.l.b16 %v199
    %v1328 = vunpack.c.h.b16 %v199
    %v1329 = vunpack.c.l.b16 %v200
    %v1330 = vunpack.c.h.b16 %v200
    %v1331 = vunpack.c.l.b16 %v201
    %v1332 = vunpack.c.h.b16 %v201
    %v1333 = vunpack.c.l.b16 %v202
    %v1334 = vunpack.c.h.b16 %v202
    %v1335 = vunpack.c.l.b16 %v203
    %v1336 = vunpack.c.h.b16 %v203
    %v1337 = vunpack.c.l.b16 %v204
    %v1338 = vunpack.c.h.b16 %v204
    %v1339 = vunpack.c.l.b16 %v205
    %v1340 = vunpack.c.h.b16 %v205
    %v1341 = vunpack.c.l.b16 %v206
    %v1342 = vunpack.c.h.b16 %v206
    %v1343 = vunpack.c.l.b16 %v207
    %v1344 = vunpack.c.h.b16 %v207
    %v1345 = vunpack.c.l.b16 %v208
    %v1346 = vunpack.c.h.b16 %v208
    %v1347 = vunpack.c.l.b16 %v209
    %v1348 = vunpack.c.h.b16 %v209
    %v1349 = vunpack.c.l.b16 %v210
    %v1350 = vunpack.c.h.b16 %v210
    %v1351 = vunpack.c.l.b16 %v211
    %v1352 = vunpack.c.h.b16 %v211
    %v1353 = vunpack.c.l.b16 %v212
    %v1354 = vunpack.c.h.b16 %v212
    %v1355 = vunpack.c.l.b16 %v213
    %v1356 = vunpack.c.h.b16 %v213
    %v1357 = vunpack.c.l.b16 %v214
    %v1358 = vunpack.c.h.b16 %v214
    %v1359 = vunpack.c.l.b16 %v215
    %v1360 = vunpack.c.h.b16 %v215
    %v1361 = vunpack.c.l.b16 %v216
    %v1362 = vunpack.c.h.b16 %v216
    %v1363 = vunpack.c.l.b16 %v217
    %v1364 = vunpack.c.h.b16 %v217
    %v1365 = vunpack.c.l.b16 %v218
    %v1366 = vunpack.c.h.b16 %v218
    %v1367 = vunpack.c.l.b16 %v219
    %v1368 = vunpack.c.h.b16 %v219
    %v1369 = vunpack.c.l.b16 %v220
    %v1370 = vunpack.c.h.b16 %v220
    %v1371 = vunpack.c.l.b16 %v221
    %v1372 = vunpack.c.h.b16 %v221
    %v1373 = vunpack.c.l.b16 %v222
    %v1374 = vunpack.c.h.b16 %v222
    %v1375 = vunpack.c.l.b16 %v223
    %v1376 = vunpack.c.h.b16 %v223
    %v1377 = vunpack.c.l.b16 %v224
    %v1378 = vunpack.c.h.b16 %v224
    %v1379 = vunpack.c.l.b16 %v225
    %v1380 = vunpack.c.h.b16 %v225
    %v1381 = vunpack.c.l.b16 %v226
    %v1382 = vunpack.c.h.b16 %v226
    %v1383 = vunpack.c.l.b16 %v227
    %v1384 = vunpack.c.h.b16 %v227
    %v1385 = vunpack.c.l.b16 %v228
    %v1386 = vunpack.c.h.b16 %v228
    %v1387 = vunpack.c.l.b16 %v229
    %v1388 = vunpack.c.h.b16 %v229
    %v1389 = vunpack.c.l.b16 %v230
    %v1390 = vunpack.c.h.b16 %v230
    %v1391 = vunpack.c.l.b16 %v231
    %v1392 = vunpack.c.h.b16 %v231
    %v1393 = vunpack.c.l.b16 %v232
    %v1394 = vunpack.c.h.b16 %v232
    %v1395 = vunpack.c.l.b16 %v233
    %v1396 = vunpack.c.h.b16 %v233
    %v1397 = vunpack.c.l.b16 %v234
    %v1398 = vunpack.c.h.b16 %v234
    %v1399 = vunpack.c.l.b16 %v235
    %v1400 = vunpack.c.h.b16 %v235
    %v1401 = vunpack.c.l.b16 %v236
    %v1402 = vunpack.c.h.b16 %v236
    %v1403 = vunpack.c.l.b16 %v237
    %v1404 = vunpack.c.h.b16 %v237
    %v1405 = vunpack.c.l.b16 %v238
    %v1406 = vunpack.c.h.b16 %v238
    %v1407 = vunpack.c.l.b16 %v239
    %v1408 = vunpack.c.h.b16 %v239
    %v1409 = vunpack.c.l.b16 %v240
    %v1410 = vunpack.c.h.b16 %v240
    %v1411 = vunpack.c.l.b16 %v241
    %v1412 = vunpack.c.h.b16 %v241
    %v1413 = vunpack.c.l.b16 %v242
    %v1414 = vunpack.c.h.b16 %v242
    %v1415 = vunpack.c.l.b16 %v243
    %v1416 = vunpack.c.h.b16 %v243
    %v1417 = vunpack.c.l.b16 %v244
    %v1418 = vunpack.c.h.b16 %v244
    %v1419 = vunpack.c.l.b16 %v245
    %v1420 = vunpack.c.h.b16 %v245
    %v1421 = vunpack.c.l.b16 %v246
    %v1422 = vunpack.c.h.b16 %v246
    %v1423 = vunpack.c.l.b16 %v247
    %v1424 = vunpack.c.h.b16 %v247
    %v1425 = vunpack.c.l.b16 %v248
    %v1426 = vunpack.c.h.b16 %v248
    %v1427 = vunpack.c.l.b16 %v249
    %v1428 = vunpack.c.h.b16 %v249
    %v1429 = vunpack.c.l.b16 %v250
    %v1430 = vunpack.c.h.b16 %v250
    %v1431 = vunpack.c.l.b16 %v251
    %v1432 = vunpack.c.h.b16 %v251
    %v1433 = vunpack.c.l.b16 %v252
    %v1434 = vunpack.c.h.b16 %v252
    %v1435 = vunpack.c.l.b16 %v253
    %v1436 = vunpack.c.h.b16 %v253
    %v1437 = vunpack.c.l.b16 %v254
    %v1438 = vunpack.c.h.b16 %v254
    %v1439 = vunpack.c.l.b16 %v255
    %v1440 = vunpack.c.h.b16 %v255
    %v1441 = vunpack.c.l.b16 %v256
    %v1442 = vunpack.c.h.b16 %v256
    %v1443 = vunpack.c.l.b16 %v257
    %v1444 = vunpack.c.h.b16 %v257
    %v1445 = vunpack.c.l.b16 %v258
    %v1446 = vunpack.c.h.b16 %v258
    %v1447 = vunpack.c.l.b16 %v259
    %v1448 = vunpack.c.h.b16 %v259
    %v1449 = vunpack.c.l.b16 %v260
    %v1450 = vunpack.c.h.b16 %v260
    %v1451 = vunpack.c.l.b16 %v261
    %v1452 = vunpack.c.h.b16 %v261
    %v1453 = vunpack.c.l.b16 %v262
    %v1454 = vunpack.c.h.b16 %v262
    %v1455 = vunpack.c.l.b16 %v263
    %v1456 = vunpack.c.h.b16 %v263
    %v1457 = vunpack.c.l.b16 %v264
    %v1458 = vunpack.c.h.b16 %v264
    %v1459 = vunpack.c.l.b16 %v265
    %v1460 = vunpack.c.h.b16 %v265
    %v1461 = vunpack.c.l.b16 %v266
    %v1462 = vunpack.c.h.b16 %v266
    %v1463 = vunpack.c.l.b16 %v267
    %v1464 = vunpack.c.h.b16 %v267
    %v1465 = vunpack.c.l.b16 %v268
    %v1466 = vunpack.c.h.b16 %v268
    %v1467 = vunpack.c.l.b16 %v269
    %v1468 = vunpack.c.h.b16 %v269
    %v1469 = vunpack.c.l.b16 %v270
    %v1470 = vunpack.c.h.b16 %v270
    %v1471 = vunpack.c.l.b16 %v271
    %v1472 = vunpack.c.h.b16 %v271
    %v1473 = vunpack.c.l.b16 %v272
    %v1474 = vunpack.c.h.b16 %v272
    %v1475 = vunpack.c.l.b16 %v273
    %v1476 = vunpack.c.h.b16 %v273
    %v1477 = vunpack.c.l.b16 %v274
    %v1478 = vunpack.c.h.b16 %v274
    %v1479 = vunpack.c.l.b16 %v275
    %v1480 = vunpack.c.h.b16 %v275
    %v1481 = vunpack.c.l.b16 %v276
    %v1482 = vunpack.c.h.b16 %v276
    %v1483 = vunpack.c.l.b16 %v277
    %v1484 = vunpack.c.h.b16 %v277
    %v1485 = vunpack.c.l.b16 %v278
    %v1486 = vunpack.c.h.b16 %v278
    %v1487 = vunpack.c.l.b16 %v279
    %v1488 = vunpack.c.h.b16 %v279
    %v1489 = vunpack.c.l.b16 %v280
    %v1490 = vunpack.c.h.b16 %v280
    %v1491 = vunpack.c.l.b16 %v281
    %v1492 = vunpack.c.h.b16 %v281
    %v1493 = vunpack.c.l.b16 %v282
    %v1494 = vunpack.c.h.b16 %v282
    %v1495 = vunpack.c.l.b16 %v283
    %v1496 = vunpack.c.h.b16 %v283
    %v1497 = vunpack.c.l.b16 %v284
    %v1498 = vunpack.c.h.b16 %v284
    %v1499 = vunpack.c.l.b16 %v285
    %v1500 = vunpack.c.h.b16 %v285
    %v1501 = vunpack.c.l.b16 %v286
    %v1502 = vunpack.c.h.b16 %v286
    %v1503 = vunpack.c.l.b16 %v287
    %v1504 = vunpack.c.h.b16 %v287
    %v1505 = vunpack.c.l.b16 %v288
    %v1506 = vunpack.c.h.b16 %v288
    %v1507 = vunpack.c.l.b16 %v289
    %v1508 = vunpack.c.h.b16 %v289
    %v1509 = vunpack.c.l.b16 %v290
    %v1510 = vunpack.c.h.b16 %v290
    %v1511 = vunpack.c.l.b16 %v291
    %v1512 = vunpack.c.h.b16 %v291
    %v1513 = vunpack.c.l.b16 %v292
    %v1514 = vunpack.c.h.b16 %v292
    %v1515 = vunpack.c.l.b16 %v293
    %v1516 = vunpack.c.h.b16 %v293
    %v1517 = vunpack.c.l.b16 %v294
    %v1518 = vunpack.c.h.b16 %v294
    %v1519 = vunpack.c.l.b16 %v295
    %v1520 = vunpack.c.h.b16 %v295
    %v1521 = vunpack.c.l.b16 %v296
    %v1522 = vunpack.c.h.b16 %v296
    %v1523 = vunpack.c.l.b16 %v297
    %v1524 = vunpack.c.h.b16 %v297
    %v1525 = vunpack.c.l.b16 %v298
    %v1526 = vunpack.c.h.b16 %v298
    %v1527 = vunpack.c.l.b16 %v299
    %v1528 = vunpack.c.h.b16 %v299
    %v1529 = vunpack.c.l.b16 %v300
    %v1530 = vunpack.c.h.b16 %v300
    %v1531 = vunpack.c.l.b16 %v301
    %v1532 = vunpack.c.h.b16 %v301
    %v1533 = vunpack.c.l.b16 %v302
    %v1534 = vunpack.c.h.b16 %v302
    %v1535 = vunpack.c.l.b16 %v303
    %v1536 = vunpack.c.h.b16 %v303
    %v1537 = vunpack.c.l.b16 %v304
    %v1538 = vunpack.c.h.b16 %v304
    %v1539 = vunpack.c.l.b16 %v305
    %v1540 = vunpack.c.h.b16 %v305
    %v1541 = vunpack.c.l.b16 %v306
    %v1542 = vunpack.c.h.b16 %v306
    %v1543 = vunpack.c.l.b16 %v307
    %v1544 = vunpack.c.h.b16 %v307
    %v1545 = vunpack.c.l.b16 %v308
    %v1546 = vunpack.c.h.b16 %v308
    %v1547 = vunpack.c.l.b16 %v309
    %v1548 = vunpack.c.h.b16 %v309
    %v1549 = vunpack.c.l.b16 %v310
    %v1550 = vunpack.c.h.b16 %v310
    %v1551 = vunpack.c.l.b16 %v311
    %v1552 = vunpack.c.h.b16 %v311
    %v1553 = vunpack.c.l.b16 %v312
    %v1554 = vunpack.c.h.b16 %v312
    %v1555 = vunpack.c.l.b16 %v313
    %v1556 = vunpack.c.h.b16 %v313
    %v1557 = vunpack.c.l.b16 %v314
    %v1558 = vunpack.c.h.b16 %v314
    %v1559 = vunpack.c.l.b16 %v315
    %v1560 = vunpack.c.h.b16 %v315
    %v1561 = vunpack.c.l.b16 %v316
    %v1562 = vunpack.c.h.b16 %v316
    %v1563 = vunpack.c.l.b16 %v317
    %v1564 = vunpack.c.h.b16 %v317
    %v1565 = vunpack.c.l.b16 %v318
    %v1566 = vunpack.c.h.b16 %v318
    %v1567 = vunpack.c.l.b16 %v319
    %v1568 = vunpack.c.h.b16 %v319
    %v1569 = vunpack.c.l.b16 %v320
    %v1570 = vunpack.c.h.b16 %v320
    %v1571 = vunpack.c.l.b16 %v321
    %v1572 = vunpack.c.h.b16 %v321
    %v1573 = vunpack.c.l.b16 %v322
    %v1574 = vunpack.c.h.b16 %v322
    %v1575 = vunpack.c.l.b16 %v323
    %v1576 = vunpack.c.h.b16 %v323
    %v1577 = vunpack.c.l.b16 %v324
    %v1578 = vunpack.c.h.b16 %v324
    %v1579 = vunpack.c.l.b16 %v325
    %v1580 = vunpack.c.h.b16 %v325
    %v1581 = vunpack.c.l.b16 %v326
    %v1582 = vunpack.c.h.b16 %v326
    %v1583 = vunpack.c.l.b16 %v327
    %v1584 = vunpack.c.h.b16 %v327
    %v1585 = vunpack.c.l.b16 %v328
    %v1586 = vunpack.c.h.b16 %v328
    %v1587 = vunpack.c.l.b16 %v329
    %v1588 = vunpack.c.h.b16 %v329
    %v1589 = vunpack.c.l.b16 %v330
    %v1590 = vunpack.c.h.b16 %v330
    %v1591 = vunpack.c.l.b16 %v331
    %v1592 = vunpack.c.h.b16 %v331
    %v1593 = vunpack.c.l.b16 %v332
    %v1594 = vunpack.c.h.b16 %v332
    %v1595 = vunpack.c.l.b16 %v333
    %v1596 = vunpack.c.h.b16 %v333
    %v1597 = vunpack.c.l.b16 %v334
    %v1598 = vunpack.c.h.b16 %v334
    %v1599 = vunpack.c.l.b16 %v335
    %v1600 = vunpack.c.h.b16 %v335
    %v1601 = vunpack.c.l.b16 %v336
    %v1602 = vunpack.c.h.b16 %v336
    %v1603 = vunpack.c.l.b16 %v337
    %v1604 = vunpack.c.h.b16 %v337
    %v1605 = vunpack.c.l.b16 %v338
    %v1606 = vunpack.c.h.b16 %v338
    %v1607 = vunpack.c.l.b16 %v339
    %v1608 = vunpack.c.h.b16 %v339
    %v1609 = vunpack.c.l.b16 %v340
    %v1610 = vunpack.c.h.b16 %v340
    %v1611 = vunpack.c.l.b16 %v341
    %v1612 = vunpack.c.h.b16 %v341
    %v1613 = vunpack.c.l.b16 %v342
    %v1614 = vunpack.c.h.b16 %v342
    %v1615 = vunpack.c.l.b16 %v343
    %v1616 = vunpack.c.h.b16 %v343
    %v1617 = vunpack.c.l.b16 %v344
    %v1618 = vunpack.c.h.b16 %v344
    %v1619 = vunpack.c.l.b16 %v345
    %v1620 = vunpack.c.h.b16 %v345
    %v1621 = vunpack.c.l.b16 %v346
    %v1622 = vunpack.c.h.b16 %v346
    %v1623 = vunpack.c.l.b16 %v347
    %v1624 = vunpack.c.h.b16 %v347
    %v1625 = vunpack.c.l.b16 %v348
    %v1626 = vunpack.c.h.b16 %v348
    %v1627 = vunpack.c.l.b16 %v349
    %v1628 = vunpack.c.h.b16 %v349
    %v1629 = vunpack.c.l.b16 %v350
    %v1630 = vunpack.c.h.b16 %v350
    %v1631 = vunpack.c.l.b16 %v351
    %v1632 = vunpack.c.h.b16 %v351
    %v1633 = vunpack.c.l.b16 %v352
    %v1634 = vunpack.c.h.b16 %v352
    %v1635 = vunpack.c.l.b16 %v353
    %v1636 = vunpack.c.h.b16 %v353
    %v1637 = vunpack.c.l.b16 %v354
    %v1638 = vunpack.c.h.b16 %v354
    %v1639 = vunpack.c.l.b16 %v355
    %v1640 = vunpack.c.h.b16 %v355
    %v1641 = vunpack.c.l.b16 %v356
    %v1642 = vunpack.c.h.b16 %v356
    %v1643 = vunpack.c.l.b16 %v357
    %v1644 = vunpack.c.h.b16 %v357
    %v1645 = vunpack.c.l.b16 %v358
    %v1646 = vunpack.c.h.b16 %v358
    %v1647 = vunpack.c.l.b16 %v359
    %v1648 = vunpack.c.h.b16 %v359
    %v1649 = vunpack.c.l.b16 %v360
    %v1650 = vunpack.c.h.b16 %v360
    %v1651 = vunpack.c.l.b16 %v361
    %v1652 = vunpack.c.h.b16 %v361
    %v1653 = vunpack.c.l.b16 %v362
    %v1654 = vunpack.c.h.b16 %v362
    %v1655 = vunpack.c.l.b16 %v363
    %v1656 = vunpack.c.h.b16 %v363
    %v1657 = vunpack.c.l.b16 %v364
    %v1658 = vunpack.c.h.b16 %v364
    %v1659 = vunpack.c.l.b16 %v365
    %v1660 = vunpack.c.h.b16 %v365
    %v1661 = vunpack.c.l.b16 %v366
    %v1662 = vunpack.c.h.b16 %v366
    %v1663 = vunpack.c.l.b16 %v367
    %v1664 = vunpack.c.h.b16 %v367
    %v1665 = vunpack.c.l.b16 %v368
    %v1666 = vunpack.c.h.b16 %v368
    %v1667 = vunpack.c.l.b16 %v369
    %v1668 = vunpack.c.h.b16 %v369
    %v1669 = vunpack.c.l.b16 %v370
    %v1670 = vunpack.c.h.b16 %v370
    %v1671 = vunpack.c.l.b16 %v371
    %v1672 = vunpack.c.h.b16 %v371
    %v1673 = vunpack.c.l.b16 %v372
    %v1674 = vunpack.c.h.b16 %v372
    %v1675 = vunpack.c.l.b16 %v373
    %v1676 = vunpack.c.h.b16 %v373
    %v1677 = vunpack.c.l.b16 %v374
    %v1678 = vunpack.c.h.b16 %v374
    %v1679 = vunpack.c.l.b16 %v375
    %v1680 = vunpack.c.h.b16 %v375
    %v1681 = vunpack.c.l.b16 %v376
    %v1682 = vunpack.c.h.b16 %v376
    %v1683 = vunpack.c.l.b16 %v377
    %v1684 = vunpack.c.h.b16 %v377
    %v1685 = vunpack.c.l.b16 %v378
    %v1686 = vunpack.c.h.b16 %v378
    %v1687 = vunpack.c.l.b16 %v379
    %v1688 = vunpack.c.h.b16 %v379
    %v1689 = vunpack.c.l.b16 %v380
    %v1690 = vunpack.c.h.b16 %v380
    %v1691 = vunpack.c.l.b16 %v381
    %v1692 = vunpack.c.h.b16 %v381
    %v1693 = vunpack.c.l.b16 %v382
    %v1694 = vunpack.c.h.b16 %v382
    %v1695 = vunpack.c.l.b16 %v383
    %v1696 = vunpack.c.h.b16 %v383
    %v1697 = vunpack.c.l.b16 %v384
    %v1698 = vunpack.c.h.b16 %v384
    %v1699 = vunpack.c.l.b16 %v385
    %v1700 = vunpack.c.h.b16 %v385
    %v1701 = vunpack.c.l.b16 %v386
    %v1702 = vunpack.c.h.b16 %v386
    %v1703 = vunpack.c.l.b16 %v387
    %v1704 = vunpack.c.h.b16 %v387
    %v1705 = vunpack.c.l.b16 %v388
    %v1706 = vunpack.c.h.b16 %v388
    %v1707 = vunpack.c.l.b16 %v389
    %v1708 = vunpack.c.h.b16 %v389
    %v1709 = vunpack.c.l.b16 %v390
    %v1710 = vunpack.c.h.b16 %v390
    %v1711 = vunpack.c.l.b16 %v391
    %v1712 = vunpack.c.h.b16 %v391
    %v1713 = vunpack.c.l.b16 %v392
    %v1714 = vunpack.c.h.b16 %v392
    %v1715 = vunpack.c.l.b16 %v393
    %v1716 = vunpack.c.h.b16 %v393
    %v1717 = vunpack.c.l.b16 %v394
    %v1718 = vunpack.c.h.b16 %v394
    %v1719 = vunpack.c.l.b16 %v395
    %v1720 = vunpack.c.h.b16 %v395
    %v1721 = vunpack.c.l.b16 %v396
    %v1722 = vunpack.c.h.b16 %v396
    %v1723 = vunpack.c.l.b16 %v397
    %v1724 = vunpack.c.h.b16 %v397
    %v1725 = vunpack.c.l.b16 %v398
    %v1726 = vunpack.c.h.b16 %v398
    %v1727 = vunpack.c.l.b16 %v399
    %v1728 = vunpack.c.h.b16 %v399
    %v1729 = vunpack.c.l.b16 %v400
    %v1730 = vunpack.c.h.b16 %v400
    %v1731 = vunpack.c.l.b16 %v401
    %v1732 = vunpack.c.h.b16 %v401
    %v1733 = vunpack.c.l.b16 %v402
    %v1734 = vunpack.c.h.b16 %v402
    %v1735 = vunpack.c.l.b16 %v403
    %v1736 = vunpack.c.h.b16 %v403
    %v1737 = vunpack.c.l.b16 %v404
    %v1738 = vunpack.c.h.b16 %v404
    %v1739 = vunpack.c.l.b16 %v405
    %v1740 = vunpack.c.h.b16 %v405
    %v1741 = vunpack.c.l.b16 %v406
    %v1742 = vunpack.c.h.b16 %v406
    %v1743 = vunpack.c.l.b16 %v407
    %v1744 = vunpack.c.h.b16 %v407
    %v1745 = vunpack.c.l.b16 %v408
    %v1746 = vunpack.c.h.b16 %v408
    %v1747 = vpack.c.b16 %v981, %v979
    %v1748 = vpack.c.b16 %v982, %v980
    %v1749 = vpack.c.b16 %v985, %v983
    %v1750 = vpack.c.b16 %v986, %v984
    %v1751 = vpack.c.b16 %v989, %v987
    %v1752 = vpack.c.b16 %v990, %v988
    %v1753 = vpack.c.b16 %v993, %v991
    %v1754 = vpack.c.b16 %v994, %v992
    %v1755 = vpack.c.b16 %v997, %v995
    %v1756 = vpack.c.b16 %v998, %v996
    %v1757 = vpack.c.b16 %v1001, %v999
    %v1758 = vpack.c.b16 %v1002, %v1000
    %v1759 = vpack.c.b16 %v1005, %v1003
    %v1760 = vpack.c.b16 %v1006, %v1004
    %v1761 = vpack.c.b16 %v1009, %v1007
    %v1762 = vpack.c.b16 %v1010, %v1008
    %v1763 = vpack.c.b16 %v1013, %v1011
    %v1764 = vpack.c.b16 %v1014, %v1012
    %v1765 = vpack.c.b16 %v1017, %v1015
    %v1766 = vpack.c.b16 %v1018, %v1016
    %v1767 = vpack.c.b16 %v1021, %v1019
    %v1768 = vpack.c.b16 %v1022, %v1020
    %v1769 = vpack.c.b16 %v1025, %v1023
    %v1770 = vpack.c.b16 %v1026, %v1024
    %v1771 = vpack.c.b16 %v1029, %v1027
    %v1772 = vpack.c.b16 %v1030, %v1028
    %v1773 = vpack.c.b16 %v1033, %v1031
    %v1774 = vpack.c.b16 %v1034, %v1032
    %v1775 = vpack.c.b16 %v1037, %v1035
    %v1776 = vpack.c.b16 %v1038, %v1036
    %v1777 = vpack.c.b16 %v1041, %v1039
    %v1778 = vpack.c.b16 %v1042, %v1040
    %v1779 = vpack.c.b16 %v1045, %v1043
    %v1780 = vpack.c.b16 %v1046, %v1044
    %v1781 = vpack.c.b16 %v1049, %v1047
    %v1782 = vpack.c.b16 %v1050, %v1048
    %v1783 = vpack.c.b16 %v1053, %v1051
    %v1784 = vpack.c.b16 %v1054, %v1052
    %v1785 = vpack.c.b16 %v1057, %v1055
    %v1786 = vpack.c.b16 %v1058, %v1056
    %v1787 = vpack.c.b16 %v1061, %v1059
    %v1788 = vpack.c.b16 %v1062, %v1060
    %v1789 = vpack.c.b16 %v1065, %v1063
    %v1790 = vpack.c.b16 %v1066, %v1064
    %v1791 = vpack.c.b16 %v1069, %v1067
    %v1792 = vpack.c.b16 %v1070, %v1068
    %v1793 = vpack.c.b16 %v1073, %v1071
    %v1794 = vpack.c.b16 %v1074, %v1072
    %v1795 = vpack.c.b16 %v1077, %v1075
    %v1796 = vpack.c.b16 %v1078, %v1076
    %v1797 = vpack.c.b16 %v1081, %v1079
    %v1798 = vpack.c.b16 %v1082, %v1080
    %v1799 = vpack.c.b16 %v1085, %v1083
    %v1800 = vpack.c.b16 %v1086, %v1084
    %v1801 = vpack.c.b16 %v1089, %v1087
    %v1802 = vpack.c.b16 %v1090, %v1088
    %v1803 = vpack.c.b16 %v1093, %v1091
    %v1804 = vpack.c.b16 %v1094, %v1092
    %v1805 = vpack.c.b16 %v1097, %v1095
    %v1806 = vpack.c.b16 %v1098, %v1096
    %v1807 = vpack.c.b16 %v1101, %v1099
    %v1808 = vpack.c.b16 %v1102, %v1100
    %v1809 = vpack.c.b16 %v1105, %v1103
    %v1810 = vpack.c.b16 %v1106, %v1104
    %v1811 = vpack.c.b16 %v1109, %v1107
    %v1812 = vpack.c.b16 %v1110, %v1108
    %v1813 = vpack.c.b16 %v1113, %v1111
    %v1814 = vpack.c.b16 %v1114, %v1112
    %v1815 = vpack.c.b16 %v1117, %v1115
    %v1816 = vpack.c.b16 %v1118, %v1116
    %v1817 = vpack.c.b16 %v1121, %v1119
    %v1818 = vpack.c.b16 %v1122, %v1120
    %v1819 = vpack.c.b16 %v1125, %v1123
    %v1820 = vpack.c.b16 %v1126, %v1124
    %v1821 = vpack.c.b16 %v1129, %v1127
    %v1822 = vpack.c.b16 %v1130, %v1128
    %v1823 = vpack.c.b16 %v1133, %v1131
    %v1824 = vpack.c.b16 %v1134, %v1132
    %v1825 = vpack.c.b16 %v1137, %v1135
    %v1826 = vpack.c.b16 %v1138, %v1136
    %v1827 = vpack.c.b16 %v1141, %v1139
    %v1828 = vpack.c.b16 %v1142, %v1140
    %v1829 = vpack.c.b16 %v1145, %v1143
    %v1830 = vpack.c.b16 %v1146, %v1144
    %v1831 = vpack.c.b16 %v1149, %v1147
    %v1832 = vpack.c.b16 %v1150, %v1148
    %v1833 = vpack.c.b16 %v1153, %v1151
    %v1834 = vpack.c.b16 %v1154, %v1152
    %v1835 = vpack.c.b16 %v1157, %v1155
    %v1836 = vpack.c.b16 %v1158, %v1156
    %v1837 = vpack.c.b16 %v1161, %v1159
    %v1838 = vpack.c.b16 %v1162, %v1160
    %v1839 = vpack.c.b16 %v1165, %v1163
    %v1840 = vpack.c.b16 %v1166, %v1164
    %v1841 = vpack.c.b16 %v1169, %v1167
    %v1842 = vpack.c.b16 %v1170, %v1168
    %v1843 = vpack.c.b16 %v1173, %v1171
    %v1844 = vpack.c.b16 %v1174, %v1172
    %v1845 = vpack.c.b16 %v1177, %v1175
    %v1846 = vpack.c.b16 %v1178, %v1176
    %v1847 = vpack.c.b16 %v1181, %v1179
    %v1848 = vpack.c.b16 %v1182, %v1180
    %v1849 = vpack.c.b16 %v1185, %v1183
    %v1850 = vpack.c.b16 %v1186, %v1184
    %v1851 = vpack.c.b16 %v1189, %v1187
    %v1852 = vpack.c.b16 %v1190, %v1188
    %v1853 = vpack.c.b16 %v1193, %v1191
    %v1854 = vpack.c.b16 %v1194, %v1192
    %v1855 = vpack.c.b16 %v1197, %v1195
    %v1856 = vpack.c.b16 %v1198, %v1196
    %v1857 = vpack.c.b16 %v1201, %v1199
    %v1858 = vpack.c.b16 %v1202, %v1200
    %v1859 = vpack.c.b16 %v1205, %v1203
    %v1860 = vpack.c.b16 %v1206, %v1204
    %v1861 = vpack.c.b16 %v1209, %v1207
    %v1862 = vpack.c.b16 %v1210, %v1208
    %v1863 = vpack.c.b16 %v1213, %v1211
    %v1864 = vpack.c.b16 %v1214, %v1212
    %v1865 = vpack.c.b16 %v1217, %v1215
    %v1866 = vpack.c.b16 %v1218, %v1216
    %v1867 = vpack.c.b16 %v1221, %v1219
    %v1868 = vpack.c.b16 %v1222, %v1220
    %v1869 = vpack.c.b16 %v1225, %v1223
    %v1870 = vpack.c.b16 %v1226, %v1224
    %v1871 = vpack.c.b16 %v1229, %v1227
    %v1872 = vpack.c.b16 %v1230, %v1228
    %v1873 = vpack.c.b16 %v1233, %v1231
    %v1874 = vpack.c.b16 %v1234, %v1232
    %v1875 = vpack.c.b16 %v1237, %v1235
    %v1876 = vpack.c.b16 %v1238, %v1236
    %v1877 = vpack.c.b16 %v1241, %v1239
    %v1878 = vpack.c.b16 %v1242, %v1240
    %v1879 = vpack.c.b16 %v1245, %v1243
    %v1880 = vpack.c.b16 %v1246, %v1244
    %v1881 = vpack.c.b16 %v1249, %v1247
    %v1882 = vpack.c.b16 %v1250, %v1248
    %v1883 = vpack.c.b16 %v1253, %v1251
    %v1884 = vpack.c.b16 %v1254, %v1252
    %v1885 = vpack.c.b16 %v1257, %v1255
    %v1886 = vpack.c.b16 %v1258, %v1256
    %v1887 = vpack.c.b16 %v1261, %v1259
    %v1888 = vpack.c.b16 %v1262, %v1260
    %v1889 = vpack.c.b16 %v1265, %v1263
    %v1890 = vpack.c.b16 %v1266, %v1264
    %v1891 = vpack.c.b16 %v1269, %v1267
    %v1892 = vpack.c.b16 %v1270, %v1268
    %v1893 = vpack.c.b16 %v1273, %v1271
    %v1894 = vpack.c.b16 %v1274, %v1272
    %v1895 = vpack.c.b16 %v1277, %v1275
    %v1896 = vpack.c.b16 %v1278, %v1276
    %v1897 = vpack.c.b16 %v1281, %v1279
    %v1898 = vpack.c.b16 %v1282, %v1280
    %v1899 = vpack.c.b16 %v1285, %v1283
    %v1900 = vpack.c.b16 %v1286, %v1284
    %v1901 = vpack.c.b16 %v1289, %v1287
    %v1902 = vpack.c.b16 %v1290, %v1288
    %v1903 = vpack.c.b16 %v1293, %v1291
    %v1904 = vpack.c.b16 %v1294, %v1292
    %v1905 = vpack.c.b16 %v1297, %v1295
    %v1906 = vpack.c.b16 %v1298, %v1296
    %v1907 = vpack.c.b16 %v1301, %v1299
    %v1908 = vpack.c.b16 %v1302, %v1300
    %v1909 = vpack.c.b16 %v1305, %v1303
    %v1910 = vpack.c.b16 %v1306, %v1304
    %v1911 = vpack.c.b16 %v1309, %v1307
    %v1912 = vpack.c.b16 %v1310, %v1308
    %v1913 = vpack.c.b16 %v1313, %v1311
    %v1914 = vpack.c.b16 %v1314, %v1312
    %v1915 = vpack.c.b16 %v1317, %v1315
    %v1916 = vpack.c.b16 %v1318, %v1316
    %v1917 = vpack.c.b16 %v1321, %v1319
    %v1918 = vpack.c.b16 %v1322, %v1320
    %v1919 = vpack.c.b16 %v1325, %v1323
    %v1920 = vpack.c.b16 %v1326, %v1324
    %v1921 = vpack.c.b16 %v1329, %v1327
    %v1922 = vpack.c.b16 %v1330, %v1328
    %v1923 = vpack.c.b16 %v1333, %v1331
    %v1924 = vpack.c.b16 %v1334, %v1332
    %v1925 = vpack.c.b16 %v1337, %v1335
    %v1926 = vpack.c.b16 %v1338, %v1336
    %v1927 = vpack.c.b16 %v1341, %v1339
    %v1928 = vpack.c.b16 %v1342, %v1340
    %v1929 = vpack.c.b16 %v1345, %v1343
    %v1930 = vpack.c.b16 %v1346, %v1344
    %v1931 = vpack.c.b16 %v1349, %v1347
    %v1932 = vpack.c.b16 %v1350, %v1348
    %v1933 = vpack.c.b16 %v1353, %v1351
    %v1934 = vpack.c.b16 %v1354, %v1352
    %v1935 = vpack.c.b16 %v1357, %v1355
    %v1936 = vpack.c.b16 %v1358, %v1356
    %v1937 = vpack.c.b16 %v1361, %v1359
    %v1938 = vpack.c.b16 %v1362, %v1360
    %v1939 = vpack.c.b16 %v1365, %v1363
    %v1940 = vpack.c.b16 %v1366, %v1364
    %v1941 = vpack.c.b16 %v1369, %v1367
    %v1942 = vpack.c.b16 %v1370, %v1368
    %v1943 = vpack.c.b16 %v1373, %v1371
    %v1944 = vpack.c.b16 %v1374, %v1372
    %v1945 = vpack.c.b16 %v1377, %v1375
    %v1946 = vpack.c.b16 %v1378, %v1376
    %v1947 = vpack.c.b16 %v1381, %v1379
    %v1948 = vpack.c.b16 %v1382, %v1380
    %v1949 = vpack.c.b16 %v1385, %v1383
    %v1950 = vpack.c.b16 %v1386, %v1384
    %v1951 = vpack.c.b16 %v1389, %v1387
    %v1952 = vpack.c.b16 %v1390, %v1388
    %v1953 = vpack.c.b16 %v1393, %v1391
    %v1954 = vpack.c.b16 %v1394, %v1392
    %v1955 = vpack.c.b16 %v1397, %v1395
    %v1956 = vpack.c.b16 %v1398, %v1396
    %v1957 = vpack.c.b16 %v1401, %v1399
    %v1958 = vpack.c.b16 %v1402, %v1400
    %v1959 = vpack.c.b16 %v1405, %v1403
    %v1960 = vpack.c.b16 %v1406, %v1404
    %v1961 = vpack.c.b16 %v1409, %v1407
    %v1962 = vpack.c.b16 %v1410, %v1408
    %v1963 = vpack.c.b16 %v1413, %v1411
    %v1964 = vpack.c.b16 %v1414, %v1412
    %v1965 = vpack.c.b16 %v1417, %v1415
    %v1966 = vpack.c.b16 %v1418, %v1416
    %v1967 = vpack.c.b16 %v1421, %v1419
    %v1968 = vpack.c.b16 %v1422, %v1420
    %v1969 = vpack.c.b16 %v1425, %v1423
    %v1970 = vpack.c.b16 %v1426, %v1424
    %v1971 = vpack.c.b16 %v1429, %v1427
    %v1972 = vpack.c.b16 %v1430, %v1428
    %v1973 = vpack.c.b16 %v1433, %v1431
    %v1974 = vpack.c.b16 %v1434, %v1432
    %v1975 = vpack.c.b16 %v1437, %v1435
    %v1976 = vpack.c.b16 %v1438, %v1436
    %v1977 = vpack.c.b16 %v1441, %v1439
    %v1978 = vpack.c.b16 %v1442, %v1440
    %v1979 = vpack.c.b16 %v1445, %v1443
    %v1980 = vpack.c.b16 %v1446, %v1444
    %v1981 = vpack.c.b16 %v1449, %v1447
    %v1982 = vpack.c.b16 %v1450, %v1448
    %v1983 = vpack.c.b16 %v1453, %v1451
    %v1984 = vpack.c.b16 %v1454, %v1452
    %v1985 = vpack.c.b16 %v1457, %v1455
    %v1986 = vpack.c.b16 %v1458, %v1456
    %v1987 = vpack.c.b16 %v1461, %v1459
    %v1988 = vpack.c.b16 %v1462, %v1460
    %v1989 = vpack.c.b16 %v1465, %v1463
    %v1990 = vpack.c.b16 %v1466, %v1464
    %v1991 = vpack.c.b16 %v1469, %v1467
    %v1992 = vpack.c.b16 %v1470, %v1468
    %v1993 = vpack.c.b16 %v1473, %v1471
    %v1994 = vpack.c.b16 %v1474, %v1472
    %v1995 = vpack.c.b16 %v1477, %v1475
    %v1996 = vpack.c.b16 %v1478, %v1476
    %v1997 = vpack.c.b16 %v1481, %v1479
    %v1998 = vpack.c.b16 %v1482, %v1480
    %v1999 = vpack.c.b16 %v1485, %v1483
    %v2000 = vpack.c.b16 %v1486, %v1484
    %v2001 = vpack.c.b16 %v1489, %v1487
    %v2002 = vpack.c.b16 %v1490, %v1488
    %v2003 = vpack.c.b16 %v1493, %v1491
    %v2004 = vpack.c.b16 %v1494, %v1492
    %v2005 = vpack.c.b16 %v1497, %v1495
    %v2006 = vpack.c.b16 %v1498, %v1496
    %v2007 = vpack.c.b16 %v1501, %v1499
    %v2008 = vpack.c.b16 %v1502, %v1500
    %v2009 = vpack.c.b16 %v1505, %v1503
    %v2010 = vpack.c.b16 %v1506, %v1504
    %v2011 = vpack.c.b16 %v1509, %v1507
    %v2012 = vpack.c.b16 %v1510, %v1508
    %v2013 = vpack.c.b16 %v1513, %v1511
    %v2014 = vpack.c.b16 %v1514, %v1512
    %v2015 = vpack.c.b16 %v1517, %v1515
    %v2016 = vpack.c.b16 %v1518, %v1516
    %v2017 = vpack.c.b16 %v1521, %v1519
    %v2018 = vpack.c.b16 %v1522, %v1520
    %v2019 = vpack.c.b16 %v1525, %v1523
    %v2020 = vpack.c.b16 %v1526, %v1524
    %v2021 = vpack.c.b16 %v1529, %v1527
    %v2022 = vpack.c.b16 %v1530, %v1528
    %v2023 = vpack.c.b16 %v1533, %v1531
    %v2024 = vpack.c.b16 %v1534, %v1532
    %v2025 = vpack.c.b16 %v1537, %v1535
    %v2026 = vpack.c.b16 %v1538, %v1536
    %v2027 = vpack.c.b16 %v1541, %v1539
    %v2028 = vpack.c.b16 %v1542, %v1540
    %v2029 = vpack.c.b16 %v1545, %v1543
    %v2030 = vpack.c.b16 %v1546, %v1544
    %v2031 = vpack.c.b16 %v1549, %v1547
    %v2032 = vpack.c.b16 %v1550, %v1548
    %v2033 = vpack.c.b16 %v1553, %v1551
    %v2034 = vpack.c.b16 %v1554, %v1552
    %v2035 = vpack.c.b16 %v1557, %v1555
    %v2036 = vpack.c.b16 %v1558, %v1556
    %v2037 = vpack.c.b16 %v1561, %v1559
    %v2038 = vpack.c.b16 %v1562, %v1560
    %v2039 = vpack.c.b16 %v1565, %v1563
    %v2040 = vpack.c.b16 %v1566, %v1564
    %v2041 = vpack.c.b16 %v1569, %v1567
    %v2042 = vpack.c.b16 %v1570, %v1568
    %v2043 = vpack.c.b16 %v1573, %v1571
    %v2044 = vpack.c.b16 %v1574, %v1572
    %v2045 = vpack.c.b16 %v1577, %v1575
    %v2046 = vpack.c.b16 %v1578, %v1576
    %v2047 = vpack.c.b16 %v1581, %v1579
    %v2048 = vpack.c.b16 %v1582, %v1580
    %v2049 = vpack.c.b16 %v1585, %v1583
    %v2050 = vpack.c.b16 %v1586, %v1584
    %v2051 = vpack.c.b16 %v1589, %v1587
    %v2052 = vpack.c.b16 %v1590, %v1588
    %v2053 = vpack.c.b16 %v1593, %v1591
    %v2054 = vpack.c.b16 %v1594, %v1592
    %v2055 = vpack.c.b16 %v1597, %v1595
    %v2056 = vpack.c.b16 %v1598, %v1596
    %v2057 = vpack.c.b16 %v1601, %v1599
    %v2058 = vpack.c.b16 %v1602, %v1600
    %v2059 = vpack.c.b16 %v1605, %v1603
    %v2060 = vpack.c.b16 %v1606, %v1604
    %v2061 = vpack.c.b16 %v1609, %v1607
    %v2062 = vpack.c.b16 %v1610, %v1608
    %v2063 = vpack.c.b16 %v1613, %v1611
    %v2064 = vpack.c.b16 %v1614, %v1612
    %v2065 = vpack.c.b16 %v1617, %v1615
    %v2066 = vpack.c.b16 %v1618, %v1616
    %v2067 = vpack.c.b16 %v1621, %v1619
    %v2068 = vpack.c.b16 %v1622, %v1620
    %v2069 = vpack.c.b16 %v1625, %v1623
    %v2070 = vpack.c.b16 %v1626, %v1624
    %v2071 = vpack.c.b16 %v1629, %v1627
    %v2072 = vpack.c.b16 %v1630, %v1628
    %v2073 = vpack.c.b16 %v1633, %v1631
    %v2074 = vpack.c.b16 %v1634, %v1632
    %v2075 = vpack.c.b16 %v1637, %v1635
    %v2076 = vpack.c.b16 %v1638, %v1636
    %v2077 = vpack.c.b16 %v1641, %v1639
    %v2078 = vpack.c.b16 %v1642, %v1640
    %v2079 = vpack.c.b16 %v1645, %v1643
    %v2080 = vpack.c.b16 %v1646, %v1644
    %v2081 = vpack.c.b16 %v1649, %v1647
    %v2082 = vpack.c.b16 %v1650, %v1648
    %v2083 = vpack.c.b16 %v1653, %v1651
    %v2084 = vpack.c.b16 %v1654, %v1652
    %v2085 = vpack.c.b16 %v1657, %v1655
    %v2086 = vpack.c.b16 %v1658, %v1656
    %v2087 = vpack.c.b16 %v1661, %v1659
    %v2088 = vpack.c.b16 %v1662, %v1660
    %v2089 = vpack.c.b16 %v1665, %v1663
    %v2090 = vpack.c.b16 %v1666, %v1664
    %v2091 = vpack.c.b16 %v1669, %v1667
    %v2092 = vpack.c.b16 %v1670, %v1668
    %v2093 = vpack.c.b16 %v1673, %v1671
    %v2094 = vpack.c.b16 %v1674, %v1672
    %v2095 = vpack.c.b16 %v1677, %v1675
    %v2096 = vpack.c.b16 %v1678, %v1676
    %v2097 = vpack.c.b16 %v1681, %v1679
    %v2098 = vpack.c.b16 %v1682, %v1680
    %v2099 = vpack.c.b16 %v1685, %v1683
    %v2100 = vpack.c.b16 %v1686, %v1684
    %v2101 = vpack.c.b16 %v1689, %v1687
    %v2102 = vpack.c.b16 %v1690, %v1688
    %v2103 = vpack.c.b16 %v1693, %v1691
    %v2104 = vpack.c.b16 %v1694, %v1692
    %v2105 = vpack.c.b16 %v1697, %v1695
    %v2106 = vpack.c.b16 %v1698, %v1696
    %v2107 = vpack.c.b16 %v1701, %v1699
    %v2108 = vpack.c.b16 %v1702, %v1700
    %v2109 = vpack.c.b16 %v1705, %v1703
    %v2110 = vpack.c.b16 %v1706, %v1704
    %v2111 = vpack.c.b16 %v1709, %v1707
    %v2112 = vpack.c.b16 %v1710, %v1708
    %v2113 = vpack.c.b16 %v1713, %v1711
    %v2114 = vpack.c.b16 %v1714, %v1712
    %v2115 = vpack.c.b16 %v1717, %v1715
    %v2116 = vpack.c.b16 %v1718, %v1716
    %v2117 = vpack.c.b16 %v1721, %v1719
    %v2118 = vpack.c.b16 %v1722, %v1720
    %v2119 = vpack.c.b16 %v1725, %v1723
    %v2120 = vpack.c.b16 %v1726, %v1724
    %v2121 = vpack.c.b16 %v1729, %v1727
    %v2122 = vpack.c.b16 %v1730, %v1728
    %v2123 = vpack.c.b16 %v1733, %v1731
    %v2124 = vpack.c.b16 %v1734, %v1732
    %v2125 = vpack.c.b16 %v1737, %v1735
    %v2126 = vpack.c.b16 %v1738, %v1736
    %v2127 = vpack.c.b16 %v1741, %v1739
    %v2128 = vpack.c.b16 %v1742, %v1740
    %v2129 = vpack.c.b16 %v1745, %v1743
    %v2130 = vpack.c.b16 %v1746, %v1744
    %2515 = vmatprep.subr.bf16.mxu0 %v1762
    %2516 = vmatpush1.bf16.msra.mxu0 %v1761
    %2517 = vmatprep.subr.bf16.mxu0 %v1760
    %2518 = vmatpush1.bf16.msra.mxu0 %v1759
    %2519 = vmatprep.subr.bf16.mxu0 %v1758
    %2520 = vmatpush1.bf16.msra.mxu0 %v1757
    %2521 = vmatprep.subr.bf16.mxu0 %v1756
    %2522 = vmatpush1.bf16.msra.mxu0 %v1755
    %2523 = vmatprep.subr.bf16.mxu0 %v1754
    %2524 = vmatpush1.bf16.msra.mxu0 %v1753
    %2525 = vmatprep.subr.bf16.mxu0 %v1752
    %2526 = vmatpush1.bf16.msra.mxu0 %v1751
    %2527 = vmatprep.subr.bf16.mxu0 %v1750
    %2528 = vmatpush1.bf16.msra.mxu0 %v1749
    %2529 = vmatprep.subr.bf16.mxu0 %v1748
    %2530 = vmatpush1.bf16.msra.mxu0 %v1747
    %2531 = vmatprep.subr.bf16.mxu0 %v1778
    %2532 = vmatpush2.bf16.msra.mxu0 %v1777
    %2533 = vmatprep.subr.bf16.mxu0 %v1776
    %2534 = vmatpush2.bf16.msra.mxu0 %v1775
    %2535 = vmatprep.subr.bf16.mxu0 %v1774
    %2536 = vmatpush2.bf16.msra.mxu0 %v1773
    %2537 = vmatprep.subr.bf16.mxu0 %v1772
    %2538 = vmatpush2.bf16.msra.mxu0 %v1771
    %2539 = vmatprep.subr.bf16.mxu0 %v1770
    %2540 = vmatpush2.bf16.msra.mxu0 %v1769
    %2541 = vmatprep.subr.bf16.mxu0 %v1768
    %2542 = vmatpush2.bf16.msra.mxu0 %v1767
    %2543 = vmatprep.subr.bf16.mxu0 %v1766
    %2544 = vmatpush2.bf16.msra.mxu0 %v1765
    %2545 = vmatprep.subr.bf16.mxu0 %v1764
    %2546 = vmatpush2.bf16.msra.mxu0 %v1763
    %2547 = vmatprep.mubr.bf16.mxu0 %v461
    %2548 = vmatmul.mubr.bf16.gmra.mxu0 %v447
    %v2549 = vpop.f32.mrf.mxu0
    %v2550 = vadd.f32 %v414, %v2549
    %v2551 = vpop.f32.mrf.mxu0
    %v2552 = vadd.f32 %v418, %v2551
    %v2553 = vpop.f32.mrf.mxu0
    %v2554 = vpop.f32.mrf.mxu0
    %2555 = vdwg.mxu0
    %2556 = vmatprep.subr.bf16.mxu0 %v1794
    %2557 = vmatpush1.bf16.msra.mxu0 %v1793
    %2558 = vmatprep.subr.bf16.mxu0 %v1792
    %2559 = vmatpush1.bf16.msra.mxu0 %v1791
    %2560 = vmatprep.subr.bf16.mxu0 %v1790
    %2561 = vmatpush1.bf16.msra.mxu0 %v1789
    %2562 = vmatprep.subr.bf16.mxu0 %v1788
    %2563 = vmatpush1.bf16.msra.mxu0 %v1787
    %2564 = vmatprep.subr.bf16.mxu0 %v1786
    %2565 = vmatpush1.bf16.msra.mxu0 %v1785
    %2566 = vmatprep.subr.bf16.mxu0 %v1784
    %2567 = vmatpush1.bf16.msra.mxu0 %v1783
    %2568 = vmatprep.subr.bf16.mxu0 %v1782
    %2569 = vmatpush1.bf16.msra.mxu0 %v1781
    %2570 = vmatprep.subr.bf16.mxu0 %v1780
    %2571 = vmatpush1.bf16.msra.mxu0 %v1779
    %2572 = vmatprep.subr.bf16.mxu0 %v1810
    %2573 = vmatpush2.bf16.msra.mxu0 %v1809
    %2574 = vmatprep.subr.bf16.mxu0 %v1808
    %2575 = vmatpush2.bf16.msra.mxu0 %v1807
    %2576 = vmatprep.subr.bf16.mxu0 %v1806
    %2577 = vmatpush2.bf16.msra.mxu0 %v1805
    %2578 = vmatprep.subr.bf16.mxu0 %v1804
    %2579 = vmatpush2.bf16.msra.mxu0 %v1803
    %2580 = vmatprep.subr.bf16.mxu0 %v1802
    %2581 = vmatpush2.bf16.msra.mxu0 %v1801
    %2582 = vmatprep.subr.bf16.mxu0 %v1800
    %2583 = vmatpush2.bf16.msra.mxu0 %v1799
    %2584 = vmatprep.subr.bf16.mxu0 %v1798
    %2585 = vmatpush2.bf16.msra.mxu0 %v1797
    %2586 = vmatprep.subr.bf16.mxu0 %v1796
    %2587 = vmatpush2.bf16.msra.mxu0 %v1795
    %2588 = vmatprep.mubr.bf16.mxu0 %v471
    %2589 = vmatmul.mubr.bf16.gmra.mxu0 %v469
    %v2590 = vpop.f32.mrf.mxu0
    %v2591 = vadd.f32 %v2550, %v2590
    %v2592 = vpop.f32.mrf.mxu0
    %v2593 = vadd.f32 %v2552, %v2592
    %v2594 = vpop.f32.mrf.mxu0
    %v2595 = vpop.f32.mrf.mxu0
    %2596 = vdwg.mxu0
    %2597 = vmatprep.subr.bf16.mxu0 %v1826
    %2598 = vmatpush1.bf16.msra.mxu0 %v1825
    %2599 = vmatprep.subr.bf16.mxu0 %v1824
    %2600 = vmatpush1.bf16.msra.mxu0 %v1823
    %2601 = vmatprep.subr.bf16.mxu0 %v1822
    %2602 = vmatpush1.bf16.msra.mxu0 %v1821
    %2603 = vmatprep.subr.bf16.mxu0 %v1820
    %2604 = vmatpush1.bf16.msra.mxu0 %v1819
    %2605 = vmatprep.subr.bf16.mxu0 %v1818
    %2606 = vmatpush1.bf16.msra.mxu0 %v1817
    %2607 = vmatprep.subr.bf16.mxu0 %v1816
    %2608 = vmatpush1.bf16.msra.mxu0 %v1815
    %2609 = vmatprep.subr.bf16.mxu0 %v1814
    %2610 = vmatpush1.bf16.msra.mxu0 %v1813
    %2611 = vmatprep.subr.bf16.mxu0 %v1812
    %2612 = vmatpush1.bf16.msra.mxu0 %v1811
    %2613 = vmatprep.subr.bf16.mxu0 %v1842
    %2614 = vmatpush2.bf16.msra.mxu0 %v1841
    %2615 = vmatprep.subr.bf16.mxu0 %v1840
    %2616 = vmatpush2.bf16.msra.mxu0 %v1839
    %2617 = vmatprep.subr.bf16.mxu0 %v1838
    %2618 = vmatpush2.bf16.msra.mxu0 %v1837
    %2619 = vmatprep.subr.bf16.mxu0 %v1836
    %2620 = vmatpush2.bf16.msra.mxu0 %v1835
    %2621 = vmatprep.subr.bf16.mxu0 %v1834
    %2622 = vmatpush2.bf16.msra.mxu0 %v1833
    %2623 = vmatprep.subr.bf16.mxu0 %v1832
    %2624 = vmatpush2.bf16.msra.mxu0 %v1831
    %2625 = vmatprep.subr.bf16.mxu0 %v1830
    %2626 = vmatpush2.bf16.msra.mxu0 %v1829
    %2627 = vmatprep.subr.bf16.mxu0 %v1828
    %2628 = vmatpush2.bf16.msra.mxu0 %v1827
    %2629 = vmatprep.mubr.bf16.mxu0 %v468
    %2630 = vmatmul.mubr.bf16.gmra.mxu0 %v454
    %v2631 = vpop.f32.mrf.mxu0
    %v2632 = vadd.f32 %v2591, %v2631
    %v2633 = vpop.f32.mrf.mxu0
    %v2634 = vadd.f32 %v2593, %v2633
    %v2635 = vpop.f32.mrf.mxu0
    %v2636 = vpop.f32.mrf.mxu0
    %2637 = vdwg.mxu0
    %2638 = vmatprep.subr.bf16.mxu0 %v1858
    %2639 = vmatpush1.bf16.msra.mxu0 %v1857
    %2640 = vmatprep.subr.bf16.mxu0 %v1856
    %2641 = vmatpush1.bf16.msra.mxu0 %v1855
    %2642 = vmatprep.subr.bf16.mxu0 %v1854
    %2643 = vmatpush1.bf16.msra.mxu0 %v1853
    %2644 = vmatprep.subr.bf16.mxu0 %v1852
    %2645 = vmatpush1.bf16.msra.mxu0 %v1851
    %2646 = vmatprep.subr.bf16.mxu0 %v1850
    %2647 = vmatpush1.bf16.msra.mxu0 %v1849
    %2648 = vmatprep.subr.bf16.mxu0 %v1848
    %2649 = vmatpush1.bf16.msra.mxu0 %v1847
    %2650 = vmatprep.subr.bf16.mxu0 %v1846
    %2651 = vmatpush1.bf16.msra.mxu0 %v1845
    %2652 = vmatprep.subr.bf16.mxu0 %v1844
    %2653 = vmatpush1.bf16.msra.mxu0 %v1843
    %2654 = vmatprep.subr.bf16.mxu0 %v1874
    %2655 = vmatpush2.bf16.msra.mxu0 %v1873
    %2656 = vmatprep.subr.bf16.mxu0 %v1872
    %2657 = vmatpush2.bf16.msra.mxu0 %v1871
    %2658 = vmatprep.subr.bf16.mxu0 %v1870
    %2659 = vmatpush2.bf16.msra.mxu0 %v1869
    %2660 = vmatprep.subr.bf16.mxu0 %v1868
    %2661 = vmatpush2.bf16.msra.mxu0 %v1867
    %2662 = vmatprep.subr.bf16.mxu0 %v1866
    %2663 = vmatpush2.bf16.msra.mxu0 %v1865
    %2664 = vmatprep.subr.bf16.mxu0 %v1864
    %2665 = vmatpush2.bf16.msra.mxu0 %v1863
    %2666 = vmatprep.subr.bf16.mxu0 %v1862
    %2667 = vmatpush2.bf16.msra.mxu0 %v1861
    %2668 = vmatprep.subr.bf16.mxu0 %v1860
    %2669 = vmatpush2.bf16.msra.mxu0 %v1859
    %2670 = vmatprep.mubr.bf16.mxu0 %v472
    %2671 = vmatmul.mubr.bf16.gmra.mxu0 %v470
    %v2672 = vpop.f32.mrf.mxu0
    %v2673 = vadd.f32 %v2632, %v2672
    %v2674 = vpop.f32.mrf.mxu0
    %v2675 = vadd.f32 %v2634, %v2674
    %v2676 = vpop.f32.mrf.mxu0
    %v2677 = vpop.f32.mrf.mxu0
    %2678 = vdwg.mxu0
    %2679 = vmatprep.subr.bf16.mxu0 %v1890
    %2680 = vmatpush1.bf16.msra.mxu0 %v1889
    %2681 = vmatprep.subr.bf16.mxu0 %v1888
    %2682 = vmatpush1.bf16.msra.mxu0 %v1887
    %2683 = vmatprep.subr.bf16.mxu0 %v1886
    %2684 = vmatpush1.bf16.msra.mxu0 %v1885
    %2685 = vmatprep.subr.bf16.mxu0 %v1884
    %2686 = vmatpush1.bf16.msra.mxu0 %v1883
    %2687 = vmatprep.subr.bf16.mxu0 %v1882
    %2688 = vmatpush1.bf16.msra.mxu0 %v1881
    %2689 = vmatprep.subr.bf16.mxu0 %v1880
    %2690 = vmatpush1.bf16.msra.mxu0 %v1879
    %2691 = vmatprep.subr.bf16.mxu0 %v1878
    %2692 = vmatpush1.bf16.msra.mxu0 %v1877
    %2693 = vmatprep.subr.bf16.mxu0 %v1876
    %2694 = vmatpush1.bf16.msra.mxu0 %v1875
    %2695 = vmatprep.subr.bf16.mxu0 %v1906
    %2696 = vmatpush2.bf16.msra.mxu0 %v1905
    %2697 = vmatprep.subr.bf16.mxu0 %v1904
    %2698 = vmatpush2.bf16.msra.mxu0 %v1903
    %2699 = vmatprep.subr.bf16.mxu0 %v1902
    %2700 = vmatpush2.bf16.msra.mxu0 %v1901
    %2701 = vmatprep.subr.bf16.mxu0 %v1900
    %2702 = vmatpush2.bf16.msra.mxu0 %v1899
    %2703 = vmatprep.subr.bf16.mxu0 %v1898
    %2704 = vmatpush2.bf16.msra.mxu0 %v1897
    %2705 = vmatprep.subr.bf16.mxu0 %v1896
    %2706 = vmatpush2.bf16.msra.mxu0 %v1895
    %2707 = vmatprep.subr.bf16.mxu0 %v1894
    %2708 = vmatpush2.bf16.msra.mxu0 %v1893
    %2709 = vmatprep.subr.bf16.mxu0 %v1892
    %2710 = vmatpush2.bf16.msra.mxu0 %v1891
    %2711 = vmatprep.mubr.bf16.mxu0 %v510
    %2712 = vmatmul.mubr.bf16.gmra.mxu0 %v496
    %v2713 = vpop.f32.mrf.mxu0
    %v2714 = vadd.f32 %v2673, %v2713
    %v2715 = vpop.f32.mrf.mxu0
    %v2716 = vadd.f32 %v2675, %v2715
    %v2717 = vpop.f32.mrf.mxu0
    %v2718 = vpop.f32.mrf.mxu0
    %2719 = vdwg.mxu0
    %2720 = vmatprep.subr.bf16.mxu0 %v1922
    %2721 = vmatpush1.bf16.msra.mxu0 %v1921
    %2722 = vmatprep.subr.bf16.mxu0 %v1920
    %2723 = vmatpush1.bf16.msra.mxu0 %v1919
    %2724 = vmatprep.subr.bf16.mxu0 %v1918
    %2725 = vmatpush1.bf16.msra.mxu0 %v1917
    %2726 = vmatprep.subr.bf16.mxu0 %v1916
    %2727 = vmatpush1.bf16.msra.mxu0 %v1915
    %2728 = vmatprep.subr.bf16.mxu0 %v1914
    %2729 = vmatpush1.bf16.msra.mxu0 %v1913
    %2730 = vmatprep.subr.bf16.mxu0 %v1912
    %2731 = vmatpush1.bf16.msra.mxu0 %v1911
    %2732 = vmatprep.subr.bf16.mxu0 %v1910
    %2733 = vmatpush1.bf16.msra.mxu0 %v1909
    %2734 = vmatprep.subr.bf16.mxu0 %v1908
    %2735 = vmatpush1.bf16.msra.mxu0 %v1907
    %2736 = vmatprep.subr.bf16.mxu0 %v1938
    %2737 = vmatpush2.bf16.msra.mxu0 %v1937
    %2738 = vmatprep.subr.bf16.mxu0 %v1936
    %2739 = vmatpush2.bf16.msra.mxu0 %v1935
    %2740 = vmatprep.subr.bf16.mxu0 %v1934
    %2741 = vmatpush2.bf16.msra.mxu0 %v1933
    %2742 = vmatprep.subr.bf16.mxu0 %v1932
    %2743 = vmatpush2.bf16.msra.mxu0 %v1931
    %2744 = vmatprep.subr.bf16.mxu0 %v1930
    %2745 = vmatpush2.bf16.msra.mxu0 %v1929
    %2746 = vmatprep.subr.bf16.mxu0 %v1928
    %2747 = vmatpush2.bf16.msra.mxu0 %v1927
    %2748 = vmatprep.subr.bf16.mxu0 %v1926
    %2749 = vmatpush2.bf16.msra.mxu0 %v1925
    %2750 = vmatprep.subr.bf16.mxu0 %v1924
    %2751 = vmatpush2.bf16.msra.mxu0 %v1923
    %2752 = vmatprep.mubr.bf16.mxu0 %v520
    %2753 = vmatmul.mubr.bf16.gmra.mxu0 %v518
    %v2754 = vpop.f32.mrf.mxu0
    %v2755 = vadd.f32 %v2714, %v2754
    %v2756 = vpop.f32.mrf.mxu0
    %v2757 = vadd.f32 %v2716, %v2756
    %v2758 = vpop.f32.mrf.mxu0
    %v2759 = vpop.f32.mrf.mxu0
    %2760 = vdwg.mxu0
    %2761 = vmatprep.subr.bf16.mxu0 %v1954
    %2762 = vmatpush1.bf16.msra.mxu0 %v1953
    %2763 = vmatprep.subr.bf16.mxu0 %v1952
    %2764 = vmatpush1.bf16.msra.mxu0 %v1951
    %2765 = vmatprep.subr.bf16.mxu0 %v1950
    %2766 = vmatpush1.bf16.msra.mxu0 %v1949
    %2767 = vmatprep.subr.bf16.mxu0 %v1948
    %2768 = vmatpush1.bf16.msra.mxu0 %v1947
    %2769 = vmatprep.subr.bf16.mxu0 %v1946
    %2770 = vmatpush1.bf16.msra.mxu0 %v1945
    %2771 = vmatprep.subr.bf16.mxu0 %v1944
    %2772 = vmatpush1.bf16.msra.mxu0 %v1943
    %2773 = vmatprep.subr.bf16.mxu0 %v1942
    %2774 = vmatpush1.bf16.msra.mxu0 %v1941
    %2775 = vmatprep.subr.bf16.mxu0 %v1940
    %2776 = vmatpush1.bf16.msra.mxu0 %v1939
    %2777 = vmatprep.subr.bf16.mxu0 %v1970
    %2778 = vmatpush2.bf16.msra.mxu0 %v1969
    %2779 = vmatprep.subr.bf16.mxu0 %v1968
    %2780 = vmatpush2.bf16.msra.mxu0 %v1967
    %2781 = vmatprep.subr.bf16.mxu0 %v1966
    %2782 = vmatpush2.bf16.msra.mxu0 %v1965
    %2783 = vmatprep.subr.bf16.mxu0 %v1964
    %2784 = vmatpush2.bf16.msra.mxu0 %v1963
    %2785 = vmatprep.subr.bf16.mxu0 %v1962
    %2786 = vmatpush2.bf16.msra.mxu0 %v1961
    %2787 = vmatprep.subr.bf16.mxu0 %v1960
    %2788 = vmatpush2.bf16.msra.mxu0 %v1959
    %2789 = vmatprep.subr.bf16.mxu0 %v1958
    %2790 = vmatpush2.bf16.msra.mxu0 %v1957
    %2791 = vmatprep.subr.bf16.mxu0 %v1956
    %2792 = vmatpush2.bf16.msra.mxu0 %v1955
    %2793 = vmatprep.mubr.bf16.mxu0 %v517
    %2794 = vmatmul.mubr.bf16.gmra.mxu0 %v503
    %v2795 = vpop.f32.mrf.mxu0
    %v2796 = vadd.f32 %v2755, %v2795
    %v2797 = vpop.f32.mrf.mxu0
    %v2798 = vadd.f32 %v2757, %v2797
    %v2799 = vpop.f32.mrf.mxu0
    %v2800 = vpop.f32.mrf.mxu0
    %2801 = vdwg.mxu0
    %2802 = vmatprep.subr.bf16.mxu0 %v1986
    %2803 = vmatpush1.bf16.msra.mxu0 %v1985
    %2804 = vmatprep.subr.bf16.mxu0 %v1984
    %2805 = vmatpush1.bf16.msra.mxu0 %v1983
    %2806 = vmatprep.subr.bf16.mxu0 %v1982
    %2807 = vmatpush1.bf16.msra.mxu0 %v1981
    %2808 = vmatprep.subr.bf16.mxu0 %v1980
    %2809 = vmatpush1.bf16.msra.mxu0 %v1979
    %2810 = vmatprep.subr.bf16.mxu0 %v1978
    %2811 = vmatpush1.bf16.msra.mxu0 %v1977
    %2812 = vmatprep.subr.bf16.mxu0 %v1976
    %2813 = vmatpush1.bf16.msra.mxu0 %v1975
    %2814 = vmatprep.subr.bf16.mxu0 %v1974
    %2815 = vmatpush1.bf16.msra.mxu0 %v1973
    %2816 = vmatprep.subr.bf16.mxu0 %v1972
    %2817 = vmatpush1.bf16.msra.mxu0 %v1971
    %2818 = vmatprep.subr.bf16.mxu0 %v2002
    %2819 = vmatpush2.bf16.msra.mxu0 %v2001
    %2820 = vmatprep.subr.bf16.mxu0 %v2000
    %2821 = vmatpush2.bf16.msra.mxu0 %v1999
    %2822 = vmatprep.subr.bf16.mxu0 %v1998
    %2823 = vmatpush2.bf16.msra.mxu0 %v1997
    %2824 = vmatprep.subr.bf16.mxu0 %v1996
    %2825 = vmatpush2.bf16.msra.mxu0 %v1995
    %2826 = vmatprep.subr.bf16.mxu0 %v1994
    %2827 = vmatpush2.bf16.msra.mxu0 %v1993
    %2828 = vmatprep.subr.bf16.mxu0 %v1992
    %2829 = vmatpush2.bf16.msra.mxu0 %v1991
    %2830 = vmatprep.subr.bf16.mxu0 %v1990
    %2831 = vmatpush2.bf16.msra.mxu0 %v1989
    %2832 = vmatprep.subr.bf16.mxu0 %v1988
    %2833 = vmatpush2.bf16.msra.mxu0 %v1987
    %2834 = vmatprep.mubr.bf16.mxu0 %v521
    %2835 = vmatmul.mubr.bf16.gmra.mxu0 %v519
    %v2836 = vpop.f32.mrf.mxu0
    %v2837 = vadd.f32 %v2796, %v2836
    %v2838 = vpop.f32.mrf.mxu0
    %v2839 = vadd.f32 %v2798, %v2838
    %v2840 = vpop.f32.mrf.mxu0
    %v2841 = vpop.f32.mrf.mxu0
    %2842 = vdwg.mxu0
    %2843 = vmatprep.subr.bf16.mxu0 %v2018
    %2844 = vmatpush1.bf16.msra.mxu0 %v2017
    %2845 = vmatprep.subr.bf16.mxu0 %v2016
    %2846 = vmatpush1.bf16.msra.mxu0 %v2015
    %2847 = vmatprep.subr.bf16.mxu0 %v2014
    %2848 = vmatpush1.bf16.msra.mxu0 %v2013
    %2849 = vmatprep.subr.bf16.mxu0 %v2012
    %2850 = vmatpush1.bf16.msra.mxu0 %v2011
    %2851 = vmatprep.subr.bf16.mxu0 %v2010
    %2852 = vmatpush1.bf16.msra.mxu0 %v2009
    %2853 = vmatprep.subr.bf16.mxu0 %v2008
    %2854 = vmatpush1.bf16.msra.mxu0 %v2007
    %2855 = vmatprep.subr.bf16.mxu0 %v2006
    %2856 = vmatpush1.bf16.msra.mxu0 %v2005
    %2857 = vmatprep.subr.bf16.mxu0 %v2004
    %2858 = vmatpush1.bf16.msra.mxu0 %v2003
    %2859 = vmatprep.subr.bf16.mxu0 %v2034
    %2860 = vmatpush2.bf16.msra.mxu0 %v2033
    %2861 = vmatprep.subr.bf16.mxu0 %v2032
    %2862 = vmatpush2.bf16.msra.mxu0 %v2031
    %2863 = vmatprep.subr.bf16.mxu0 %v2030
    %2864 = vmatpush2.bf16.msra.mxu0 %v2029
    %2865 = vmatprep.subr.bf16.mxu0 %v2028
    %2866 = vmatpush2.bf16.msra.mxu0 %v2027
    %2867 = vmatprep.subr.bf16.mxu0 %v2026
    %2868 = vmatpush2.bf16.msra.mxu0 %v2025
    %2869 = vmatprep.subr.bf16.mxu0 %v2024
    %2870 = vmatpush2.bf16.msra.mxu0 %v2023
    %2871 = vmatprep.subr.bf16.mxu0 %v2022
    %2872 = vmatpush2.bf16.msra.mxu0 %v2021
    %2873 = vmatprep.subr.bf16.mxu0 %v2020
    %2874 = vmatpush2.bf16.msra.mxu0 %v2019
    %2875 = vmatprep.mubr.bf16.mxu0 %v559
    %2876 = vmatmul.mubr.bf16.gmra.mxu0 %v545
    %v2877 = vpop.f32.mrf.mxu0
    %v2878 = vadd.f32 %v2837, %v2877
    %v2879 = vpop.f32.mrf.mxu0
    %v2880 = vadd.f32 %v2839, %v2879
    %v2881 = vpop.f32.mrf.mxu0
    %v2882 = vpop.f32.mrf.mxu0
    %2883 = vdwg.mxu0
    %2884 = vmatprep.subr.bf16.mxu0 %v2050
    %2885 = vmatpush1.bf16.msra.mxu0 %v2049
    %2886 = vmatprep.subr.bf16.mxu0 %v2048
    %2887 = vmatpush1.bf16.msra.mxu0 %v2047
    %2888 = vmatprep.subr.bf16.mxu0 %v2046
    %2889 = vmatpush1.bf16.msra.mxu0 %v2045
    %2890 = vmatprep.subr.bf16.mxu0 %v2044
    %2891 = vmatpush1.bf16.msra.mxu0 %v2043
    %2892 = vmatprep.subr.bf16.mxu0 %v2042
    %2893 = vmatpush1.bf16.msra.mxu0 %v2041
    %2894 = vmatprep.subr.bf16.mxu0 %v2040
    %2895 = vmatpush1.bf16.msra.mxu0 %v2039
    %2896 = vmatprep.subr.bf16.mxu0 %v2038
    %2897 = vmatpush1.bf16.msra.mxu0 %v2037
    %2898 = vmatprep.subr.bf16.mxu0 %v2036
    %2899 = vmatpush1.bf16.msra.mxu0 %v2035
    %2900 = vmatprep.subr.bf16.mxu0 %v2066
    %2901 = vmatpush2.bf16.msra.mxu0 %v2065
    %2902 = vmatprep.subr.bf16.mxu0 %v2064
    %2903 = vmatpush2.bf16.msra.mxu0 %v2063
    %2904 = vmatprep.subr.bf16.mxu0 %v2062
    %2905 = vmatpush2.bf16.msra.mxu0 %v2061
    %2906 = vmatprep.subr.bf16.mxu0 %v2060
    %2907 = vmatpush2.bf16.msra.mxu0 %v2059
    %2908 = vmatprep.subr.bf16.mxu0 %v2058
    %2909 = vmatpush2.bf16.msra.mxu0 %v2057
    %2910 = vmatprep.subr.bf16.mxu0 %v2056
    %2911 = vmatpush2.bf16.msra.mxu0 %v2055
    %2912 = vmatprep.subr.bf16.mxu0 %v2054
    %2913 = vmatpush2.bf16.msra.mxu0 %v2053
    %2914 = vmatprep.subr.bf16.mxu0 %v2052
    %2915 = vmatpush2.bf16.msra.mxu0 %v2051
    %2916 = vmatprep.mubr.bf16.mxu0 %v569
    %2917 = vmatmul.mubr.bf16.gmra.mxu0 %v567
    %v2918 = vpop.f32.mrf.mxu0
    %v2919 = vadd.f32 %v2878, %v2918
    %v2920 = vpop.f32.mrf.mxu0
    %v2921 = vadd.f32 %v2880, %v2920
    %v2922 = vpop.f32.mrf.mxu0
    %v2923 = vpop.f32.mrf.mxu0
    %2924 = vdwg.mxu0
    %2925 = vmatprep.subr.bf16.mxu0 %v2082
    %2926 = vmatpush1.bf16.msra.mxu0 %v2081
    %2927 = vmatprep.subr.bf16.mxu0 %v2080
    %2928 = vmatpush1.bf16.msra.mxu0 %v2079
    %2929 = vmatprep.subr.bf16.mxu0 %v2078
    %2930 = vmatpush1.bf16.msra.mxu0 %v2077
    %2931 = vmatprep.subr.bf16.mxu0 %v2076
    %2932 = vmatpush1.bf16.msra.mxu0 %v2075
    %2933 = vmatprep.subr.bf16.mxu0 %v2074
    %2934 = vmatpush1.bf16.msra.mxu0 %v2073
    %2935 = vmatprep.subr.bf16.mxu0 %v2072
    %2936 = vmatpush1.bf16.msra.mxu0 %v2071
    %2937 = vmatprep.subr.bf16.mxu0 %v2070
    %2938 = vmatpush1.bf16.msra.mxu0 %v2069
    %2939 = vmatprep.subr.bf16.mxu0 %v2068
    %2940 = vmatpush1.bf16.msra.mxu0 %v2067
    %2941 = vmatprep.subr.bf16.mxu0 %v2098
    %2942 = vmatpush2.bf16.msra.mxu0 %v2097
    %2943 = vmatprep.subr.bf16.mxu0 %v2096
    %2944 = vmatpush2.bf16.msra.mxu0 %v2095
    %2945 = vmatprep.subr.bf16.mxu0 %v2094
    %2946 = vmatpush2.bf16.msra.mxu0 %v2093
    %2947 = vmatprep.subr.bf16.mxu0 %v2092
    %2948 = vmatpush2.bf16.msra.mxu0 %v2091
    %2949 = vmatprep.subr.bf16.mxu0 %v2090
    %2950 = vmatpush2.bf16.msra.mxu0 %v2089
    %2951 = vmatprep.subr.bf16.mxu0 %v2088
    %2952 = vmatpush2.bf16.msra.mxu0 %v2087
    %2953 = vmatprep.subr.bf16.mxu0 %v2086
    %2954 = vmatpush2.bf16.msra.mxu0 %v2085
    %2955 = vmatprep.subr.bf16.mxu0 %v2084
    %2956 = vmatpush2.bf16.msra.mxu0 %v2083
    %2957 = vmatprep.mubr.bf16.mxu0 %v566
    %2958 = vmatmul.mubr.bf16.gmra.mxu0 %v552
    %v2959 = vpop.f32.mrf.mxu0
    %v2960 = vadd.f32 %v2919, %v2959
    %v2961 = vpop.f32.mrf.mxu0
    %v2962 = vadd.f32 %v2921, %v2961
    %v2963 = vpop.f32.mrf.mxu0
    %v2964 = vpop.f32.mrf.mxu0
    %2965 = vdwg.mxu0
    %2966 = vmatprep.subr.bf16.mxu0 %v2114
    %2967 = vmatpush1.bf16.msra.mxu0 %v2113
    %2968 = vmatprep.subr.bf16.mxu0 %v2112
    %2969 = vmatpush1.bf16.msra.mxu0 %v2111
    %2970 = vmatprep.subr.bf16.mxu0 %v2110
    %2971 = vmatpush1.bf16.msra.mxu0 %v2109
    %2972 = vmatprep.subr.bf16.mxu0 %v2108
    %2973 = vmatpush1.bf16.msra.mxu0 %v2107
    %2974 = vmatprep.subr.bf16.mxu0 %v2106
    %2975 = vmatpush1.bf16.msra.mxu0 %v2105
    %2976 = vmatprep.subr.bf16.mxu0 %v2104
    %2977 = vmatpush1.bf16.msra.mxu0 %v2103
    %2978 = vmatprep.subr.bf16.mxu0 %v2102
    %2979 = vmatpush1.bf16.msra.mxu0 %v2101
    %2980 = vmatprep.subr.bf16.mxu0 %v2100
    %2981 = vmatpush1.bf16.msra.mxu0 %v2099
    %2982 = vmatprep.subr.bf16.mxu0 %v2130
    %2983 = vmatpush2.bf16.msra.mxu0 %v2129
    %2984 = vmatprep.subr.bf16.mxu0 %v2128
    %2985 = vmatpush2.bf16.msra.mxu0 %v2127
    %2986 = vmatprep.subr.bf16.mxu0 %v2126
    %2987 = vmatpush2.bf16.msra.mxu0 %v2125
    %2988 = vmatprep.subr.bf16.mxu0 %v2124
    %2989 = vmatpush2.bf16.msra.mxu0 %v2123
    %2990 = vmatprep.subr.bf16.mxu0 %v2122
    %2991 = vmatpush2.bf16.msra.mxu0 %v2121
    %2992 = vmatprep.subr.bf16.mxu0 %v2120
    %2993 = vmatpush2.bf16.msra.mxu0 %v2119
    %2994 = vmatprep.subr.bf16.mxu0 %v2118
    %2995 = vmatpush2.bf16.msra.mxu0 %v2117
    %2996 = vmatprep.subr.bf16.mxu0 %v2116
    %2997 = vmatpush2.bf16.msra.mxu0 %v2115
    %2998 = vmatprep.mubr.bf16.mxu0 %v570
    %2999 = vmatmul.mubr.bf16.gmra.mxu0 %v568
    %v3000 = vpop.f32.mrf.mxu0
    %v3001 = vadd.f32 %v2960, %v3000
    %v3002 = vpop.f32.mrf.mxu0
    %v3003 = vadd.f32 %v2962, %v3002
    %v3004 = vpop.f32.mrf.mxu0
    %v3005 = vpop.f32.mrf.mxu0
    %3006 = vdwg.mxu0
    %v3007 = vmax.f32 %v3001, 0.0
    %v3008 = vmax.f32 %v3003, 0.0
    %v3009 = vpack.c.bf16 %v3007, %v3007
    %v3010 = vpack.c.bf16 %v3008, %v3008
    %v3011 = vld [vmem:[%s3] sm:$0xf]
    %v3012 = vld [vmem:[%s3 + $0x4] sm:$0xf]
    %v3013 = vld [vmem:[%s3 + $0x8] sm:$0xf]
    %v3014 = vld [vmem:[%s3 + $0xc] sm:$0xf]
    %v3015 = vld [vmem:[%s3 + $0x10] sm:$0xf]
    %v3016 = vld [vmem:[%s3 + $0x14] sm:$0xf]
    %v3017 = vld [vmem:[%s3 + $0x18] sm:$0xf]
    %v3018 = vld [vmem:[%s3 + $0x1c] sm:$0xf]
    %v3019 = vld [vmem:[%s3 + $0x20] sm:$0xf]
    %v3020 = vld [vmem:[%s3 + $0x24] sm:$0xf]
    %v3021 = vld [vmem:[%s3 + $0x28] sm:$0xf]
    %v3022 = vld [vmem:[%s3 + $0x2c] sm:$0xf]
    %v3023 = vld [vmem:[%s3 + $0x30] sm:$0xf]
    %v3024 = vld [vmem:[%s3 + $0x34] sm:$0xf]
    %v3025 = vld [vmem:[%s3 + $0x38] sm:$0xf]
    %v3026 = vld [vmem:[%s3 + $0x3c] sm:$0xf]
    %v3027 = vld [vmem:[%s3 + $0x40] sm:$0xf]
    %v3028 = vld [vmem:[%s3 + $0x44] sm:$0xf]
    %v3029 = vld [vmem:[%s3 + $0x48] sm:$0xf]
    %v3030 = vld [vmem:[%s3 + $0x4c] sm:$0xf]
    %v3031 = vld [vmem:[%s3 + $0x50] sm:$0xf]
    %v3032 = vld [vmem:[%s3 + $0x54] sm:$0xf]
    %v3033 = vld [vmem:[%s3 + $0x58] sm:$0xf]
    %v3034 = vld [vmem:[%s3 + $0x5c] sm:$0xf]
    %v3035 = vld [vmem:[%s3 + $0x60] sm:$0xf]
    %v3036 = vld [vmem:[%s3 + $0x64] sm:$0xf]
    %v3037 = vld [vmem:[%s3 + $0x68] sm:$0xf]
    %v3038 = vld [vmem:[%s3 + $0x6c] sm:$0xf]
    %v3039 = vld [vmem:[%s3 + $0x70] sm:$0xf]
    %v3040 = vld [vmem:[%s3 + $0x74] sm:$0xf]
    %v3041 = vld [vmem:[%s3 + $0x78] sm:$0xf]
    %v3042 = vld [vmem:[%s3 + $0x7c] sm:$0xf]
    %v3043 = vld [vmem:[%s4] sm:$0x1]
    %v3045 = vlaneseq
    %v3046 = vshrl.u32 %v3045, 7
    %v3047 = vsub.s32 0, %v3046
    %v3048 = vrot.slane %v3043, %v3047
    %v3082 = vunpack.c.l.b16 %v3011
    %v3083 = vunpack.c.l.b16 %v3012
    %v3084 = vunpack.c.l.b16 %v3013
    %v3085 = vunpack.c.l.b16 %v3014
    %v3086 = vunpack.c.l.b16 %v3015
    %v3087 = vunpack.c.l.b16 %v3016
    %v3088 = vunpack.c.l.b16 %v3017
    %v3089 = vunpack.c.l.b16 %v3018
    %v3090 = vunpack.c.l.b16 %v3019
    %v3091 = vunpack.c.l.b16 %v3020
    %v3092 = vunpack.c.l.b16 %v3021
    %v3093 = vunpack.c.l.b16 %v3022
    %v3094 = vunpack.c.l.b16 %v3023
    %v3095 = vunpack.c.l.b16 %v3024
    %v3096 = vunpack.c.l.b16 %v3025
    %v3097 = vunpack.c.l.b16 %v3026
    %v3098 = vunpack.c.l.b16 %v3027
    %v3099 = vunpack.c.l.b16 %v3028
    %v3100 = vunpack.c.l.b16 %v3029
    %v3101 = vunpack.c.l.b16 %v3030
    %v3102 = vunpack.c.l.b16 %v3031
    %v3103 = vunpack.c.l.b16 %v3032
    %v3104 = vunpack.c.l.b16 %v3033
    %v3105 = vunpack.c.l.b16 %v3034
    %v3106 = vunpack.c.l.b16 %v3035
    %v3107 = vunpack.c.l.b16 %v3036
    %v3108 = vunpack.c.l.b16 %v3037
    %v3109 = vunpack.c.l.b16 %v3038
    %v3110 = vunpack.c.l.b16 %v3039
    %v3111 = vunpack.c.l.b16 %v3040
    %v3112 = vunpack.c.l.b16 %v3041
    %v3113 = vunpack.c.l.b16 %v3042
    %v3114 = vpack.c.b16 %v3083, %v3082
    %v3115 = vpack.c.b16 %v3085, %v3084
    %v3116 = vpack.c.b16 %v3087, %v3086
    %v3117 = vpack.c.b16 %v3089, %v3088
    %v3118 = vpack.c.b16 %v3091, %v3090
    %v3119 = vpack.c.b16 %v3093, %v3092
    %v3120 = vpack.c.b16 %v3095, %v3094
    %v3121 = vpack.c.b16 %v3097, %v3096
    %v3122 = vpack.c.b16 %v3099, %v3098
    %v3123 = vpack.c.b16 %v3101, %v3100
    %v3124 = vpack.c.b16 %v3103, %v3102
    %v3125 = vpack.c.b16 %v3105, %v3104
    %v3126 = vpack.c.b16 %v3107, %v3106
    %v3127 = vpack.c.b16 %v3109, %v3108
    %v3128 = vpack.c.b16 %v3111, %v3110
    %v3129 = vpack.c.b16 %v3113, %v3112
    %3146 = vmatprep.subr.bf16.mxu0 0
    %3147 = vmatpush1.bf16.msra.mxu0 %v3121
    %3148 = vmatprep.subr.bf16.mxu0 0
    %3149 = vmatpush1.bf16.msra.mxu0 %v3120
    %3150 = vmatprep.subr.bf16.mxu0 0
    %3151 = vmatpush1.bf16.msra.mxu0 %v3119
    %3152 = vmatprep.subr.bf16.mxu0 0
    %3153 = vmatpush1.bf16.msra.mxu0 %v3118
    %3154 = vmatprep.subr.bf16.mxu0 0
    %3155 = vmatpush1.bf16.msra.mxu0 %v3117
    %3156 = vmatprep.subr.bf16.mxu0 0
    %3157 = vmatpush1.bf16.msra.mxu0 %v3116
    %3158 = vmatprep.subr.bf16.mxu0 0
    %3159 = vmatpush1.bf16.msra.mxu0 %v3115
    %3160 = vmatprep.subr.bf16.mxu0 0
    %3161 = vmatpush1.bf16.msra.mxu0 %v3114
    %3162 = vmatprep.subr.bf16.mxu0 0
    %3163 = vmatpush2.bf16.msra.mxu0 %v3129
    %3164 = vmatprep.subr.bf16.mxu0 0
    %3165 = vmatpush2.bf16.msra.mxu0 %v3128
    %3166 = vmatprep.subr.bf16.mxu0 0
    %3167 = vmatpush2.bf16.msra.mxu0 %v3127
    %3168 = vmatprep.subr.bf16.mxu0 0
    %3169 = vmatpush2.bf16.msra.mxu0 %v3126
    %3170 = vmatprep.subr.bf16.mxu0 0
    %3171 = vmatpush2.bf16.msra.mxu0 %v3125
    %3172 = vmatprep.subr.bf16.mxu0 0
    %3173 = vmatpush2.bf16.msra.mxu0 %v3124
    %3174 = vmatprep.subr.bf16.mxu0 0
    %3175 = vmatpush2.bf16.msra.mxu0 %v3123
    %3176 = vmatprep.subr.bf16.mxu0 0
    %3177 = vmatpush2.bf16.msra.mxu0 %v3122
    %3178 = vmatprep.mubr.bf16.mxu0 %v3010
    %3179 = vmatmul.mubr.bf16.gmra.mxu0 %v3009
    %v3180 = vpop.f32.mrf.mxu0
    %v3181 = vadd.f32 %v3048, %v3180
    %v3182 = vpop.f32.mrf.mxu0
    %v3183 = vpop.f32.mrf.mxu0
    %v3184 = vpop.f32.mrf.mxu0
    %3185 = vdwg.mxu0
    %3186 = vst [vmem:[#allocation2] sm:$0x3] %v3181
    // Predicated region
    $region22: #{cnn_policy_forward.3} parent=1 // pred_check
      _
    $region23: #{cnn_policy_forward.3} parent=1 // pred_check_branch
      %3188 = sbr.rel (0) target = $region25
    $region24: #{cnn_policy_forward.3} parent=1 // pred_region
      %s3190 = ssub.s32 32, 32
      %3191 = vsyncadd [#allocation3], %s3190
      %s3193 = sshll.u32 [#allocation2], 4
      %s3194 = int_to_ptr.vmem [resolvable:$true] %s3193
      %3196 = dma.vmem_to_hbm [thread:$0]  %s3194, 32, %s5, [#allocation3]
    $region25: #{cnn_policy_forward.3} parent=1 // pred_fallthru
      _
    // Predicated region
    $region26: #{cnn_policy_forward.3} parent=1 // pred_check
      _
    $region27: #{cnn_policy_forward.3} parent=1 // pred_check_branch
      %3198 = sbr.rel (0) target = $region29
    $region28: #{cnn_policy_forward.3} parent=1 // pred_region
      %3199 = dma.done [#allocation3], 32
    $region29: #{cnn_policy_forward.3} parent=1 // pred_fallthru
      _
    %3200 = vsyncpa [#allocation3], 1

</llo_original>
